<compile_context>
chip_gen: v5e
topology: v5e:2x2
jax: 0.10.0
libtpu: 0.0.40
codegen_flags: <defaults>
</compile_context>

<pallas_src>
import functools

import jax
import jax.numpy as jnp
from jax.experimental import pallas as pl
from jax.experimental.pallas import tpu as pltpu

DIMENSION = 3                   # forward returns (decoder_angle1(mem), decoder_angle2(mem))
NEG_INF = jnp.float32(-1e30)    # large-negative stand-in for -inf (avoids all-NaN rows)
OUT_LANES = 128                 # decoder heads padded to a lane-dense output width


# --------------------------------------------------------------------------- #
# Fused forward kernel
# --------------------------------------------------------------------------- #
def _layer_norm(y, w, b, eps=1e-5):
    mu = jnp.mean(y, axis=-1, keepdims=True)
    var = jnp.mean((y - mu) * (y - mu), axis=-1, keepdims=True)
    return (y - mu) * jax.lax.rsqrt(var + eps) * w + b


def _softmax_lastdim(s):
    m = jnp.max(s, axis=-1, keepdims=True)
    e = jnp.exp(s - m)
    return e * pl.reciprocal(jnp.sum(e, axis=-1, keepdims=True), approx=True)


def _fused_forward_kernel(num_layers, n_head, head_batched,
                          src_ref, mask_bias_ref, pad_bias_ref,
                          proj_w_ref, proj_b_ref,
                          in_w_ref, in_b_ref, out_w_ref, out_b_ref,
                          ln1_w_ref, ln1_b_ref,
                          ff1_w_ref, ff1_b_ref, ff2_w_ref, ff2_b_ref,
                          ln2_w_ref, ln2_b_ref,
                          dec_w_ref, dec_b_ref,
                          o_ref):
    Bt, S, _ = src_ref.shape
    D = proj_w_ref.shape[1]
    H = n_head
    hd = D // H
    mdt = in_w_ref.dtype            # matmul-operand dtype (f32 at toy sizes, bf16 when large)

    # ---- input projection: (Bt*S, in_pad) @ (in_pad, D) + b ---------------- #
    x = src_ref[...].reshape(Bt * S, -1)
    x = jnp.dot(x.astype(proj_w_ref.dtype), proj_w_ref[...],
                preferred_element_type=jnp.float32) + proj_b_ref[...]

    # additive attention bias built in-kernel (never shipped as (B,S,S) from HBM)
    bias = mask_bias_ref[...][None, :, :] + pad_bias_ref[...][:, None, :]    # (Bt, S, S)

    # static unroll over encoder layers (fine at L<=4; see TODO for streaming)
    for l in range(num_layers):
        # ---- multi-head self attention (1/sqrt(hd) folded into in_w at init) #
        qkv = jnp.dot(x.astype(mdt), in_w_ref[l],
                      preferred_element_type=jnp.float32) + in_b_ref[l]

        if head_batched:
            # Head-batched attention (review item): one score einsum and one
            # context einsum batched over (batch, head); no per-head lane slices.
            q = qkv[:, :D].astype(mdt).reshape(Bt, S, H, hd)
            k = qkv[:, D:2 * D].astype(mdt).reshape(Bt, S, H, hd)
            v = qkv[:, 2 * D:].astype(mdt).reshape(Bt, S, H, hd)
            s = jnp.einsum('bqhd,bkhd->bhqk', q, k,
                           preferred_element_type=jnp.float32) + bias[:, None, :, :]
            p = _softmax_lastdim(s)
            ctx = jnp.einsum('bhqk,bkhd->bqhd', p.astype(mdt), v,
                             preferred_element_type=jnp.float32)
            ctx = ctx.reshape(Bt * S, D)
        else:
            # Fallback: per-head loop (validated path) in case this Mosaic build
            # cannot lower the multi-batch-dim dot_general above.
            q = qkv[:, :D].reshape(Bt, S, D)
            k = qkv[:, D:2 * D].reshape(Bt, S, D)
            v = qkv[:, 2 * D:].reshape(Bt, S, D)
            ctx_heads = []
            for h in range(H):
                sl = slice(h * hd, (h + 1) * hd)
                s = jnp.einsum('bqd,bkd->bqk',
                               q[..., sl].astype(mdt), k[..., sl].astype(mdt),
                               preferred_element_type=jnp.float32) + bias
                p = _softmax_lastdim(s)
                ctx_heads.append(jnp.einsum('bqk,bkd->bqd',
                                            p.astype(mdt), v[..., sl].astype(mdt),
                                            preferred_element_type=jnp.float32))
            ctx = jnp.concatenate(ctx_heads, axis=-1).reshape(Bt * S, D)

        # single full-width output projection
        attn = jnp.dot(ctx.astype(mdt), out_w_ref[l],
                       preferred_element_type=jnp.float32) + out_b_ref[l]
        x1 = _layer_norm(x + attn, ln1_w_ref[l], ln1_b_ref[l])

        # ---- feed-forward (ReLU) ------------------------------------------ #
        h1 = jnp.maximum(
            jnp.dot(x1.astype(mdt), ff1_w_ref[l],
                    preferred_element_type=jnp.float32) + ff1_b_ref[l], 0.0)
        h2 = jnp.dot(h1.astype(mdt), ff2_w_ref[l],
                     preferred_element_type=jnp.float32) + ff2_b_ref[l]
        x = _layer_norm(x1 + h2, ln2_w_ref[l], ln2_b_ref[l])

    # ---- mean over sequence + fused (lane-dense) decoder heads ------------- #
    pooled = jnp.mean(x.reshape(Bt, S, D), axis=1)                  # (Bt, D)
    o_ref[...] = (jnp.dot(pooled.astype(dec_w_ref.dtype), dec_w_ref[...],
                          preferred_element_type=jnp.float32) + dec_b_ref[...])


# --------------------------------------------------------------------------- #
# Batch-block choice (review: fill MXU rows, keep >=2 grid steps when useful)
# --------------------------------------------------------------------------- #
def _pick_batch_block(B, S, target_rows=256, min_rows=128):
    """Bt*S ~ target_rows to fill the MXU M dim; Bt divides B and is a multiple
    of 8 (sublane tile) or the whole batch (keeps every BlockSpec trivially
    legal); keep >=2 grid steps (v7x megacore) when each half still fills
    >= min_rows rows."""
    divs = [d for d in range(1, B + 1) if B % d == 0 and (d % 8 == 0 or d == B)]
    fitting = [d for d in divs if d * S <= 2 * target_rows]
    bt = max(fitting) if fitting else min(divs)
    if bt == B:
        halves = [d for d in divs if d <= B // 2 and d * S >= min_rows]
        if halves:
            bt = max(halves)
    return bt


# --------------------------------------------------------------------------- #
# Wrapper
# --------------------------------------------------------------------------- #
def fitting_transformer_forward(params, src, mask, src_padding_mask):
    """src: (S, B, input_size); mask: (S, S) bool (True = NOT attended, PyTorch
    semantics); src_padding_mask: (B, S) bool (True = padded key)."""
    S, B, in_size = src.shape
    D = params["proj_w"].shape[1]
    L = params["in_w"].shape[0]
    F = params["ff1_w"].shape[2]
    n_head = params["n_head"]
    out_size = params["output_size"]

    # batch-major activations; masks -> additive biases (tiny, built once in XLA)
    x_bsd = jnp.transpose(src, (1, 0, 2)).astype(jnp.float32)             # (B, S, in)
    mask_bias = jnp.where(mask, NEG_INF, jnp.float32(0.0))                # (S, S)
    pad_bias = jnp.where(src_padding_mask, NEG_INF, jnp.float32(0.0))     # (B, S)

    # pad the feature dim to a sublane multiple (review: no 4-lane DMA sliver)
    in_pad = max(8, ((in_size + 7) // 8) * 8)
    proj_w = params["proj_w"]
    if in_pad != in_size:
        x_bsd = jnp.pad(x_bsd, ((0, 0), (0, 0), (0, in_pad - in_size)))
        proj_w = jnp.pad(proj_w, ((0, in_pad - in_size), (0, 0)))

    Bt = _pick_batch_block(B, S)
    grid = (B // Bt,)

    # bf16 MXU operands once the model is non-toy (v6e/v7x throughput + VMEM);
    # layernorm / softmax / bias math stays f32 inside the kernel.
    mm_dtype = jnp.bfloat16 if D >= 256 else jnp.float32
    wc = lambda a: a.astype(mm_dtype)

    w_arrays = [
        wc(proj_w), params["proj_b"],
        wc(params["in_w"]), params["in_b"],
        wc(params["out_w"]), params["out_b"],
        params["ln1_w"], params["ln1_b"],
        wc(params["ff1_w"]), params["ff1_b"],
        wc(params["ff2_w"]), params["ff2_b"],
        params["ln2_w"], params["ln2_b"],
        wc(params["dec_w"]), params["dec_b"],
    ]
    wbytes = sum(int(a.size) * a.dtype.itemsize for a in w_arrays)
    abytes = 4 * 2 * (Bt * S * in_pad + S * S + Bt * S + Bt * OUT_LANES)

    def _call(head_batched, single_buffer):
        def rep(shape):   # replicated full-block weight; single-buffered (review item)
            nd = len(shape)
            kwargs = {"pipeline_mode": pl.Buffered(1)} if single_buffer else {}
            return pl.BlockSpec(shape, lambda b, _n=nd: (0,) * _n, **kwargs)

        wbufs = 1 if single_buffer else 2
        vmem_limit = int(min(max(wbytes * wbufs + abytes + (24 << 20), 32 << 20), 128 << 20))
        kernel = functools.partial(_fused_forward_kernel, L, n_head, head_batched)

        return pl.pallas_call(
            kernel,
            out_shape=jax.ShapeDtypeStruct((B, OUT_LANES), jnp.float32),
            grid=grid,
            in_specs=[
                pl.BlockSpec((Bt, S, in_pad), lambda b: (b, 0, 0)),   # src
                rep((S, S)),                                          # attn-mask bias
                pl.BlockSpec((Bt, S), lambda b: (b, 0)),              # key-padding bias
                rep((in_pad, D)), rep((1, D)),                        # proj_input
                rep((L, D, 3 * D)), rep((L, 1, 3 * D)),               # in_proj (stacked)
                rep((L, D, D)), rep((L, 1, D)),                       # out_proj
                rep((L, 1, D)), rep((L, 1, D)),                       # layernorm1
                rep((L, D, F)), rep((L, 1, F)),                       # ffn linear1
                rep((L, F, D)), rep((L, 1, D)),                       # ffn linear2
                rep((L, 1, D)), rep((L, 1, D)),                       # layernorm2
                rep((D, OUT_LANES)), rep((1, OUT_LANES)),             # fused decoders
            ],
            out_specs=pl.BlockSpec((Bt, OUT_LANES), lambda b: (b, 0)),
            compiler_params=pltpu.CompilerParams(
                dimension_semantics=("parallel",),
                vmem_limit_bytes=vmem_limit),
        )(x_bsd, mask_bias, pad_bias, *w_arrays)

    # Primary config: head-batched attention + single-buffered weights.
    # Fall back gracefully if this Mosaic build rejects either feature.
    out_pad, last_err = None, None
    for cfg in ((True, True), (False, True), (False, False)):
        try:
            out_pad = jax.block_until_ready(_call(*cfg))
            break
        except Exception as err:          # lowering gap on this build -> next config
            last_err = err
    if out_pad is None:
        raise last_err

    out1 = out_pad[:, :out_size]
    if DIMENSION == 2:
        return out1
    out2 = out_pad[:, out_size:2 * out_size]
    return out1, out2


# --------------------------------------------------------------------------- #
# Params (pre-transposed to x @ W layout, per-layer weights stacked over L,
# 1/sqrt(head_dim) folded into the Q slice of in_proj)
# --------------------------------------------------------------------------- #
def init_params(key, *, num_layers, d_model, n_head, input_size, output_size, dim_ff):
    keys = jax.random.split(key, 3 + num_layers)
    head_dim = d_model // n_head
    q_scale = float(head_dim) ** -0.5

    def u(k, shape, r=0.1):
        return jax.random.uniform(k, shape, jnp.float32, -r, r)

    # init_weights(): uniform(-0.1, 0.1) weights, zero bias for proj / decoders
    dec1_w = u(keys[1], (d_model, output_size))
    dec2_w = u(keys[2], (d_model, output_size))
    dec_w = jnp.zeros((d_model, OUT_LANES), jnp.float32)
    dec_w = dec_w.at[:, :output_size].set(dec1_w)
    dec_w = dec_w.at[:, output_size:2 * output_size].set(dec2_w)

    names = ("in_w", "in_b", "out_w", "out_b", "ln1_w", "ln1_b",
             "ff1_w", "ff1_b", "ff2_w", "ff2_b", "ln2_w", "ln2_b")
    stacks = {n: [] for n in names}
    for i in range(num_layers):
        lk = jax.random.split(keys[3 + i], 6)
        in_w_l = u(lk[0], (d_model, 3 * d_model))
        in_b_l = u(lk[1], (1, 3 * d_model), 0.02)
        # fold the attention 1/sqrt(head_dim) scale into the Q columns (review item)
        in_w_l = in_w_l.at[:, :d_model].multiply(q_scale)
        in_b_l = in_b_l.at[:, :d_model].multiply(q_scale)
        stacks["in_w"].append(in_w_l)
        stacks["in_b"].append(in_b_l)
        stacks["out_w"].append(u(lk[2], (d_model, d_model)))
        stacks["out_b"].append(jnp.zeros((1, d_model), jnp.float32))
        stacks["ln1_w"].append(jnp.ones((1, d_model), jnp.float32))
        stacks["ln1_b"].append(jnp.zeros((1, d_model), jnp.float32))
        stacks["ff1_w"].append(u(lk[3], (d_model, dim_ff)))
        stacks["ff1_b"].append(u(lk[4], (1, dim_ff), 0.02))
        stacks["ff2_w"].append(u(lk[5], (dim_ff, d_model)))
        stacks["ff2_b"].append(jnp.zeros((1, d_model), jnp.float32))
        stacks["ln2_w"].append(jnp.ones((1, d_model), jnp.float32))
        stacks["ln2_b"].append(jnp.zeros((1, d_model), jnp.float32))

    params = {
        "n_head": n_head,
        "output_size": output_size,
        "proj_w": u(keys[0], (input_size, d_model)),
        "proj_b": jnp.zeros((1, d_model), jnp.float32),
        "dec_w": dec_w,
        "dec_b": jnp.zeros((1, OUT_LANES), jnp.float32),
    }
    for n in names:
        params[n] = jnp.stack(stacks[n], axis=0)
    return params


# --------------------------------------------------------------------------- #
# Main
# --------------------------------------------------------------------------- #
if __name__ == "__main__":
    num_encoder_layers = 2
    d_model = 32
    n_head = 4
    input_size = 4
    output_size = 2
    dim_feedforward = 64
    seq_len = 8
    batch = 2

    key = jax.random.PRNGKey(0)
    pkey, skey = jax.random.split(key)
    params = init_params(pkey,
                         num_layers=num_encoder_layers, d_model=d_model, n_head=n_head,
                         input_size=input_size, output_size=output_size,
                         dim_ff=dim_feedforward)

    src = jax.random.normal(skey, (seq_len, batch, input_size), jnp.float32)
    mask = jnp.zeros((seq_len, seq_len), dtype=bool)                    # attend everywhere
    src_padding_mask = jnp.zeros((batch, seq_len), dtype=bool).at[1, -2:].set(True)

    out = fitting_transformer_forward(params, src, mask, src_padding_mask)
    if DIMENSION == 2:
        jax.block_until_ready(out)
    else:
        jax.block_until_ready(out[0])
        jax.block_until_ready(out[1])
    print("KERNEL_OK")
</pallas_src>

<mosaic_0001>
module attributes {stable_mosaic.version = 11 : i64} {
  func.func @_fused_forward_kernel(%arg0: i32, %arg1: memref<2x8x8xf32, #tpu.memory_space<vmem>>, %arg2: memref<8x8xf32, #tpu.memory_space<vmem>>, %arg3: memref<2x8xf32, #tpu.memory_space<vmem>>, %arg4: memref<8x32xf32, #tpu.memory_space<vmem>>, %arg5: memref<1x32xf32, #tpu.memory_space<vmem>>, %arg6: memref<2x32x96xf32, #tpu.memory_space<vmem>>, %arg7: memref<2x1x96xf32, #tpu.memory_space<vmem>>, %arg8: memref<2x32x32xf32, #tpu.memory_space<vmem>>, %arg9: memref<2x1x32xf32, #tpu.memory_space<vmem>>, %arg10: memref<2x1x32xf32, #tpu.memory_space<vmem>>, %arg11: memref<2x1x32xf32, #tpu.memory_space<vmem>>, %arg12: memref<2x32x64xf32, #tpu.memory_space<vmem>>, %arg13: memref<2x1x64xf32, #tpu.memory_space<vmem>>, %arg14: memref<2x64x32xf32, #tpu.memory_space<vmem>>, %arg15: memref<2x1x32xf32, #tpu.memory_space<vmem>>, %arg16: memref<2x1x32xf32, #tpu.memory_space<vmem>>, %arg17: memref<2x1x32xf32, #tpu.memory_space<vmem>>, %arg18: memref<32x128xf32, #tpu.memory_space<vmem>>, %arg19: memref<1x128xf32, #tpu.memory_space<vmem>>, %arg20: memref<2x128xf32, #tpu.memory_space<vmem>>) attributes {dimension_semantics = [#tpu.dimension_semantics<parallel>], iteration_bounds = array<i64: 1>, scalar_prefetch = 0 : i64, scratch_operands = 0 : i64, tpu.core_type = #tpu.core_type<tc>, window_params = [{transform_indices = @transform_0, window_bounds = array<i64: 2, 8, 8>}, {pipeline_mode = #tpu.pipeline_mode<synchronous>, transform_indices = @transform_1, window_bounds = array<i64: 8, 8>}, {transform_indices = @transform_2, window_bounds = array<i64: 2, 8>}, {pipeline_mode = #tpu.pipeline_mode<synchronous>, transform_indices = @transform_3, window_bounds = array<i64: 8, 32>}, {pipeline_mode = #tpu.pipeline_mode<synchronous>, transform_indices = @transform_4, window_bounds = array<i64: 1, 32>}, {pipeline_mode = #tpu.pipeline_mode<synchronous>, transform_indices = @transform_5, window_bounds = array<i64: 2, 32, 96>}, {pipeline_mode = #tpu.pipeline_mode<synchronous>, transform_indices = @transform_6, window_bounds = array<i64: 2, 1, 96>}, {pipeline_mode = #tpu.pipeline_mode<synchronous>, transform_indices = @transform_7, window_bounds = array<i64: 2, 32, 32>}, {pipeline_mode = #tpu.pipeline_mode<synchronous>, transform_indices = @transform_8, window_bounds = array<i64: 2, 1, 32>}, {pipeline_mode = #tpu.pipeline_mode<synchronous>, transform_indices = @transform_9, window_bounds = array<i64: 2, 1, 32>}, {pipeline_mode = #tpu.pipeline_mode<synchronous>, transform_indices = @transform_10, window_bounds = array<i64: 2, 1, 32>}, {pipeline_mode = #tpu.pipeline_mode<synchronous>, transform_indices = @transform_11, window_bounds = array<i64: 2, 32, 64>}, {pipeline_mode = #tpu.pipeline_mode<synchronous>, transform_indices = @transform_12, window_bounds = array<i64: 2, 1, 64>}, {pipeline_mode = #tpu.pipeline_mode<synchronous>, transform_indices = @transform_13, window_bounds = array<i64: 2, 64, 32>}, {pipeline_mode = #tpu.pipeline_mode<synchronous>, transform_indices = @transform_14, window_bounds = array<i64: 2, 1, 32>}, {pipeline_mode = #tpu.pipeline_mode<synchronous>, transform_indices = @transform_15, window_bounds = array<i64: 2, 1, 32>}, {pipeline_mode = #tpu.pipeline_mode<synchronous>, transform_indices = @transform_16, window_bounds = array<i64: 2, 1, 32>}, {pipeline_mode = #tpu.pipeline_mode<synchronous>, transform_indices = @transform_17, window_bounds = array<i64: 32, 128>}, {pipeline_mode = #tpu.pipeline_mode<synchronous>, transform_indices = @transform_18, window_bounds = array<i64: 1, 128>}, {transform_indices = @transform_19, window_bounds = array<i64: 2, 128>}]} {
    %c0 = arith.constant 0 : index
    %c0_0 = arith.constant 0 : index
    %c0_1 = arith.constant 0 : index
    %0 = vector.load %arg1[%c0, %c0_0, %c0_1] : memref<2x8x8xf32, #tpu.memory_space<vmem>>, vector<2x8x8xf32>
    %1 = vector.shape_cast %0 : vector<2x8x8xf32> to vector<16x8xf32>
    %c0_2 = arith.constant 0 : index
    %c0_3 = arith.constant 0 : index
    %2 = vector.load %arg4[%c0_2, %c0_3] : memref<8x32xf32, #tpu.memory_space<vmem>>, vector<8x32xf32>
    %cst = arith.constant dense<0.000000e+00> : vector<16x32xf32>
    %3 = tpu.matmul %1, %2, %cst {dimension_numbers = #tpu.dot_dimension_numbers<[1], [0], [0], [1], [0, 0, 1, 1], [], []>} : vector<16x8xf32>, vector<8x32xf32>, vector<16x32xf32> -> vector<16x32xf32>
    %c0_4 = arith.constant 0 : index
    %c0_5 = arith.constant 0 : index
    %4 = vector.load %arg5[%c0_4, %c0_5] : memref<1x32xf32, #tpu.memory_space<vmem>>, vector<1x32xf32>
    %5 = vector.broadcast %4 : vector<1x32xf32> to vector<16x32xf32>
    %6 = arith.addf %3, %5 : vector<16x32xf32>
    %c0_6 = arith.constant 0 : index
    %c0_7 = arith.constant 0 : index
    %7 = vector.load %arg2[%c0_6, %c0_7] : memref<8x8xf32, #tpu.memory_space<vmem>>, vector<8x8xf32>
    %8 = vector.shape_cast %7 : vector<8x8xf32> to vector<1x8x8xf32>
    %c0_8 = arith.constant 0 : index
    %c0_9 = arith.constant 0 : index
    %9 = vector.load %arg3[%c0_8, %c0_9] : memref<2x8xf32, #tpu.memory_space<vmem>>, vector<2x8xf32>
    %10 = vector.shape_cast %9 : vector<2x8xf32> to vector<2x1x8xf32>
    %11 = vector.broadcast %8 : vector<1x8x8xf32> to vector<2x8x8xf32>
    %12 = vector.broadcast %10 : vector<2x1x8xf32> to vector<2x8x8xf32>
    %13 = arith.addf %11, %12 : vector<2x8x8xf32>
    %c0_10 = arith.constant 0 : index
    %c0_11 = arith.constant 0 : index
    %c0_12 = arith.constant 0 : index
    %14 = vector.load %arg6[%c0_10, %c0_11, %c0_12] : memref<2x32x96xf32, #tpu.memory_space<vmem>>, vector<1x32x96xf32>
    %15 = vector.shape_cast %14 : vector<1x32x96xf32> to vector<32x96xf32>
    %cst_13 = arith.constant dense<0.000000e+00> : vector<16x96xf32>
    %16 = tpu.matmul %6, %15, %cst_13 {dimension_numbers = #tpu.dot_dimension_numbers<[1], [0], [0], [1], [0, 0, 1, 1], [], []>} : vector<16x32xf32>, vector<32x96xf32>, vector<16x96xf32> -> vector<16x96xf32>
    %c0_14 = arith.constant 0 : index
    %c0_15 = arith.constant 0 : index
    %c0_16 = arith.constant 0 : index
    %17 = vector.load %arg7[%c0_14, %c0_15, %c0_16] : memref<2x1x96xf32, #tpu.memory_space<vmem>>, vector<1x1x96xf32>
    %18 = vector.shape_cast %17 : vector<1x1x96xf32> to vector<1x96xf32>
    %19 = vector.broadcast %18 : vector<1x96xf32> to vector<16x96xf32>
    %20 = arith.addf %16, %19 : vector<16x96xf32>
    %21 = vector.extract_strided_slice %20 {offsets = [0, 0], sizes = [16, 32], strides = [1, 1]} : vector<16x96xf32> to vector<16x32xf32>
    %22 = vector.shape_cast %21 : vector<16x32xf32> to vector<2x8x32xf32>
    %23 = vector.extract_strided_slice %20 {offsets = [0, 32], sizes = [16, 32], strides = [1, 1]} : vector<16x96xf32> to vector<16x32xf32>
    %24 = vector.shape_cast %23 : vector<16x32xf32> to vector<2x8x32xf32>
    %25 = vector.extract_strided_slice %20 {offsets = [0, 64], sizes = [16, 32], strides = [1, 1]} : vector<16x96xf32> to vector<16x32xf32>
    %26 = vector.shape_cast %25 : vector<16x32xf32> to vector<2x8x32xf32>
    %27 = vector.extract_strided_slice %22 {offsets = [0, 0, 0], sizes = [2, 8, 8], strides = [1, 1, 1]} : vector<2x8x32xf32> to vector<2x8x8xf32>
    %28 = vector.extract_strided_slice %24 {offsets = [0, 0, 0], sizes = [2, 8, 8], strides = [1, 1, 1]} : vector<2x8x32xf32> to vector<2x8x8xf32>
    "tpu.trace_start"() <{level = 10 : i32, message = "bqd,bkd->bqk"}> : () -> ()
    %cst_17 = arith.constant dense<0.000000e+00> : vector<2x8x8xf32>
    %29 = tpu.matmul %27, %28, %cst_17 {dimension_numbers = #tpu.dot_dimension_numbers<[2], [2], [1], [1], [0, 0, 0, 1, 1, 1], [0], [0]>} : vector<2x8x8xf32>, vector<2x8x8xf32>, vector<2x8x8xf32> -> vector<2x8x8xf32>
    "tpu.trace_stop"() : () -> ()
    %30 = arith.addf %29, %13 : vector<2x8x8xf32>
    %cst_18 = arith.constant dense<0xFF800000> : vector<2x8xf32>
    %31 = vector.multi_reduction <maximumf>, %30, %cst_18 [2] : vector<2x8x8xf32> to vector<2x8xf32>
    %32 = vector.shape_cast %31 : vector<2x8xf32> to vector<2x8x1xf32>
    %33 = vector.broadcast %32 : vector<2x8x1xf32> to vector<2x8x8xf32>
    %34 = arith.subf %30, %33 : vector<2x8x8xf32>
    %35 = math.exp %34 : vector<2x8x8xf32>
    %cst_19 = arith.constant dense<0.000000e+00> : vector<2x8xf32>
    %36 = vector.multi_reduction <add>, %35, %cst_19 [2] : vector<2x8x8xf32> to vector<2x8xf32>
    %37 = vector.shape_cast %36 : vector<2x8xf32> to vector<2x8x1xf32>
    %38 = tpu.reciprocal %37 {approx = true} : vector<2x8x1xf32> -> vector<2x8x1xf32>
    %39 = vector.broadcast %38 : vector<2x8x1xf32> to vector<2x8x8xf32>
    %40 = arith.mulf %35, %39 : vector<2x8x8xf32>
    %41 = vector.extract_strided_slice %26 {offsets = [0, 0, 0], sizes = [2, 8, 8], strides = [1, 1, 1]} : vector<2x8x32xf32> to vector<2x8x8xf32>
    "tpu.trace_start"() <{level = 10 : i32, message = "bqk,bkd->bqd"}> : () -> ()
    %cst_20 = arith.constant dense<0.000000e+00> : vector<2x8x8xf32>
    %42 = tpu.matmul %40, %41, %cst_20 {dimension_numbers = #tpu.dot_dimension_numbers<[2], [1], [1], [2], [0, 0, 0, 1, 1, 2], [0], [0]>} : vector<2x8x8xf32>, vector<2x8x8xf32>, vector<2x8x8xf32> -> vector<2x8x8xf32>
    "tpu.trace_stop"() : () -> ()
    %43 = vector.extract_strided_slice %22 {offsets = [0, 0, 8], sizes = [2, 8, 8], strides = [1, 1, 1]} : vector<2x8x32xf32> to vector<2x8x8xf32>
    %44 = vector.extract_strided_slice %24 {offsets = [0, 0, 8], sizes = [2, 8, 8], strides = [1, 1, 1]} : vector<2x8x32xf32> to vector<2x8x8xf32>
    "tpu.trace_start"() <{level = 10 : i32, message = "bqd,bkd->bqk"}> : () -> ()
    %cst_21 = arith.constant dense<0.000000e+00> : vector<2x8x8xf32>
    %45 = tpu.matmul %43, %44, %cst_21 {dimension_numbers = #tpu.dot_dimension_numbers<[2], [2], [1], [1], [0, 0, 0, 1, 1, 1], [0], [0]>} : vector<2x8x8xf32>, vector<2x8x8xf32>, vector<2x8x8xf32> -> vector<2x8x8xf32>
    "tpu.trace_stop"() : () -> ()
    %46 = arith.addf %45, %13 : vector<2x8x8xf32>
    %cst_22 = arith.constant dense<0xFF800000> : vector<2x8xf32>
    %47 = vector.multi_reduction <maximumf>, %46, %cst_22 [2] : vector<2x8x8xf32> to vector<2x8xf32>
    %48 = vector.shape_cast %47 : vector<2x8xf32> to vector<2x8x1xf32>
    %49 = vector.broadcast %48 : vector<2x8x1xf32> to vector<2x8x8xf32>
    %50 = arith.subf %46, %49 : vector<2x8x8xf32>
    %51 = math.exp %50 : vector<2x8x8xf32>
    %cst_23 = arith.constant dense<0.000000e+00> : vector<2x8xf32>
    %52 = vector.multi_reduction <add>, %51, %cst_23 [2] : vector<2x8x8xf32> to vector<2x8xf32>
    %53 = vector.shape_cast %52 : vector<2x8xf32> to vector<2x8x1xf32>
    %54 = tpu.reciprocal %53 {approx = true} : vector<2x8x1xf32> -> vector<2x8x1xf32>
    %55 = vector.broadcast %54 : vector<2x8x1xf32> to vector<2x8x8xf32>
    %56 = arith.mulf %51, %55 : vector<2x8x8xf32>
    %57 = vector.extract_strided_slice %26 {offsets = [0, 0, 8], sizes = [2, 8, 8], strides = [1, 1, 1]} : vector<2x8x32xf32> to vector<2x8x8xf32>
    "tpu.trace_start"() <{level = 10 : i32, message = "bqk,bkd->bqd"}> : () -> ()
    %cst_24 = arith.constant dense<0.000000e+00> : vector<2x8x8xf32>
    %58 = tpu.matmul %56, %57, %cst_24 {dimension_numbers = #tpu.dot_dimension_numbers<[2], [1], [1], [2], [0, 0, 0, 1, 1, 2], [0], [0]>} : vector<2x8x8xf32>, vector<2x8x8xf32>, vector<2x8x8xf32> -> vector<2x8x8xf32>
    "tpu.trace_stop"() : () -> ()
    %59 = vector.extract_strided_slice %22 {offsets = [0, 0, 16], sizes = [2, 8, 8], strides = [1, 1, 1]} : vector<2x8x32xf32> to vector<2x8x8xf32>
    %60 = vector.extract_strided_slice %24 {offsets = [0, 0, 16], sizes = [2, 8, 8], strides = [1, 1, 1]} : vector<2x8x32xf32> to vector<2x8x8xf32>
    "tpu.trace_start"() <{level = 10 : i32, message = "bqd,bkd->bqk"}> : () -> ()
    %cst_25 = arith.constant dense<0.000000e+00> : vector<2x8x8xf32>
    %61 = tpu.matmul %59, %60, %cst_25 {dimension_numbers = #tpu.dot_dimension_numbers<[2], [2], [1], [1], [0, 0, 0, 1, 1, 1], [0], [0]>} : vector<2x8x8xf32>, vector<2x8x8xf32>, vector<2x8x8xf32> -> vector<2x8x8xf32>
    "tpu.trace_stop"() : () -> ()
    %62 = arith.addf %61, %13 : vector<2x8x8xf32>
    %cst_26 = arith.constant dense<0xFF800000> : vector<2x8xf32>
    %63 = vector.multi_reduction <maximumf>, %62, %cst_26 [2] : vector<2x8x8xf32> to vector<2x8xf32>
    %64 = vector.shape_cast %63 : vector<2x8xf32> to vector<2x8x1xf32>
    %65 = vector.broadcast %64 : vector<2x8x1xf32> to vector<2x8x8xf32>
    %66 = arith.subf %62, %65 : vector<2x8x8xf32>
    %67 = math.exp %66 : vector<2x8x8xf32>
    %cst_27 = arith.constant dense<0.000000e+00> : vector<2x8xf32>
    %68 = vector.multi_reduction <add>, %67, %cst_27 [2] : vector<2x8x8xf32> to vector<2x8xf32>
    %69 = vector.shape_cast %68 : vector<2x8xf32> to vector<2x8x1xf32>
    %70 = tpu.reciprocal %69 {approx = true} : vector<2x8x1xf32> -> vector<2x8x1xf32>
    %71 = vector.broadcast %70 : vector<2x8x1xf32> to vector<2x8x8xf32>
    %72 = arith.mulf %67, %71 : vector<2x8x8xf32>
    %73 = vector.extract_strided_slice %26 {offsets = [0, 0, 16], sizes = [2, 8, 8], strides = [1, 1, 1]} : vector<2x8x32xf32> to vector<2x8x8xf32>
    "tpu.trace_start"() <{level = 10 : i32, message = "bqk,bkd->bqd"}> : () -> ()
    %cst_28 = arith.constant dense<0.000000e+00> : vector<2x8x8xf32>
    %74 = tpu.matmul %72, %73, %cst_28 {dimension_numbers = #tpu.dot_dimension_numbers<[2], [1], [1], [2], [0, 0, 0, 1, 1, 2], [0], [0]>} : vector<2x8x8xf32>, vector<2x8x8xf32>, vector<2x8x8xf32> -> vector<2x8x8xf32>
    "tpu.trace_stop"() : () -> ()
    %75 = vector.extract_strided_slice %22 {offsets = [0, 0, 24], sizes = [2, 8, 8], strides = [1, 1, 1]} : vector<2x8x32xf32> to vector<2x8x8xf32>
    %76 = vector.extract_strided_slice %24 {offsets = [0, 0, 24], sizes = [2, 8, 8], strides = [1, 1, 1]} : vector<2x8x32xf32> to vector<2x8x8xf32>
    "tpu.trace_start"() <{level = 10 : i32, message = "bqd,bkd->bqk"}> : () -> ()
    %cst_29 = arith.constant dense<0.000000e+00> : vector<2x8x8xf32>
    %77 = tpu.matmul %75, %76, %cst_29 {dimension_numbers = #tpu.dot_dimension_numbers<[2], [2], [1], [1], [0, 0, 0, 1, 1, 1], [0], [0]>} : vector<2x8x8xf32>, vector<2x8x8xf32>, vector<2x8x8xf32> -> vector<2x8x8xf32>
    "tpu.trace_stop"() : () -> ()
    %78 = arith.addf %77, %13 : vector<2x8x8xf32>
    %cst_30 = arith.constant dense<0xFF800000> : vector<2x8xf32>
    %79 = vector.multi_reduction <maximumf>, %78, %cst_30 [2] : vector<2x8x8xf32> to vector<2x8xf32>
    %80 = vector.shape_cast %79 : vector<2x8xf32> to vector<2x8x1xf32>
    %81 = vector.broadcast %80 : vector<2x8x1xf32> to vector<2x8x8xf32>
    %82 = arith.subf %78, %81 : vector<2x8x8xf32>
    %83 = math.exp %82 : vector<2x8x8xf32>
    %cst_31 = arith.constant dense<0.000000e+00> : vector<2x8xf32>
    %84 = vector.multi_reduction <add>, %83, %cst_31 [2] : vector<2x8x8xf32> to vector<2x8xf32>
    %85 = vector.shape_cast %84 : vector<2x8xf32> to vector<2x8x1xf32>
    %86 = tpu.reciprocal %85 {approx = true} : vector<2x8x1xf32> -> vector<2x8x1xf32>
    %87 = vector.broadcast %86 : vector<2x8x1xf32> to vector<2x8x8xf32>
    %88 = arith.mulf %83, %87 : vector<2x8x8xf32>
    %89 = vector.extract_strided_slice %26 {offsets = [0, 0, 24], sizes = [2, 8, 8], strides = [1, 1, 1]} : vector<2x8x32xf32> to vector<2x8x8xf32>
    "tpu.trace_start"() <{level = 10 : i32, message = "bqk,bkd->bqd"}> : () -> ()
    %cst_32 = arith.constant dense<0.000000e+00> : vector<2x8x8xf32>
    %90 = tpu.matmul %88, %89, %cst_32 {dimension_numbers = #tpu.dot_dimension_numbers<[2], [1], [1], [2], [0, 0, 0, 1, 1, 2], [0], [0]>} : vector<2x8x8xf32>, vector<2x8x8xf32>, vector<2x8x8xf32> -> vector<2x8x8xf32>
    "tpu.trace_stop"() : () -> ()
    %91 = tpu.concatenate %42, %58, %74, %90 in 2 : vector<2x8x8xf32>, vector<2x8x8xf32>, vector<2x8x8xf32>, vector<2x8x8xf32> -> vector<2x8x32xf32>
    %92 = vector.shape_cast %91 : vector<2x8x32xf32> to vector<16x32xf32>
    %c0_33 = arith.constant 0 : index
    %c0_34 = arith.constant 0 : index
    %c0_35 = arith.constant 0 : index
    %93 = vector.load %arg8[%c0_33, %c0_34, %c0_35] : memref<2x32x32xf32, #tpu.memory_space<vmem>>, vector<1x32x32xf32>
    %94 = vector.shape_cast %93 : vector<1x32x32xf32> to vector<32x32xf32>
    %cst_36 = arith.constant dense<0.000000e+00> : vector<16x32xf32>
    %95 = tpu.matmul %92, %94, %cst_36 {dimension_numbers = #tpu.dot_dimension_numbers<[1], [0], [0], [1], [0, 0, 1, 1], [], []>} : vector<16x32xf32>, vector<32x32xf32>, vector<16x32xf32> -> vector<16x32xf32>
    %c0_37 = arith.constant 0 : index
    %c0_38 = arith.constant 0 : index
    %c0_39 = arith.constant 0 : index
    %96 = vector.load %arg9[%c0_37, %c0_38, %c0_39] : memref<2x1x32xf32, #tpu.memory_space<vmem>>, vector<1x1x32xf32>
    %97 = vector.shape_cast %96 : vector<1x1x32xf32> to vector<1x32xf32>
    %98 = vector.broadcast %97 : vector<1x32xf32> to vector<16x32xf32>
    %99 = arith.addf %95, %98 : vector<16x32xf32>
    %100 = arith.addf %6, %99 : vector<16x32xf32>
    %c0_40 = arith.constant 0 : index
    %c0_41 = arith.constant 0 : index
    %c0_42 = arith.constant 0 : index
    %101 = vector.load %arg10[%c0_40, %c0_41, %c0_42] : memref<2x1x32xf32, #tpu.memory_space<vmem>>, vector<1x1x32xf32>
    %102 = vector.shape_cast %101 : vector<1x1x32xf32> to vector<1x32xf32>
    %c0_43 = arith.constant 0 : index
    %c0_44 = arith.constant 0 : index
    %c0_45 = arith.constant 0 : index
    %103 = vector.load %arg11[%c0_43, %c0_44, %c0_45] : memref<2x1x32xf32, #tpu.memory_space<vmem>>, vector<1x1x32xf32>
    %104 = vector.shape_cast %103 : vector<1x1x32xf32> to vector<1x32xf32>
    %cst_46 = arith.constant dense<0.000000e+00> : vector<16xf32>
    %105 = vector.multi_reduction <add>, %100, %cst_46 [1] : vector<16x32xf32> to vector<16xf32>
    %106 = vector.shape_cast %105 : vector<16xf32> to vector<16x1xf32>
    %cst_47 = arith.constant 3.200000e+01 : f32
    %107 = vector.broadcast %cst_47 : f32 to vector<16x1xf32>
    %108 = arith.divf %106, %107 : vector<16x1xf32>
    %109 = vector.broadcast %108 : vector<16x1xf32> to vector<16x32xf32>
    %110 = arith.subf %100, %109 : vector<16x32xf32>
    %111 = vector.broadcast %108 : vector<16x1xf32> to vector<16x32xf32>
    %112 = arith.subf %100, %111 : vector<16x32xf32>
    %113 = arith.mulf %110, %112 : vector<16x32xf32>
    %cst_48 = arith.constant dense<0.000000e+00> : vector<16xf32>
    %114 = vector.multi_reduction <add>, %113, %cst_48 [1] : vector<16x32xf32> to vector<16xf32>
    %115 = vector.shape_cast %114 : vector<16xf32> to vector<16x1xf32>
    %cst_49 = arith.constant 3.200000e+01 : f32
    %116 = vector.broadcast %cst_49 : f32 to vector<16x1xf32>
    %117 = arith.divf %115, %116 : vector<16x1xf32>
    %118 = vector.broadcast %108 : vector<16x1xf32> to vector<16x32xf32>
    %119 = arith.subf %100, %118 : vector<16x32xf32>
    %cst_50 = arith.constant 9.99999974E-6 : f32
    %120 = vector.broadcast %cst_50 : f32 to vector<16x1xf32>
    %121 = arith.addf %117, %120 : vector<16x1xf32>
    %122 = math.rsqrt %121 : vector<16x1xf32>
    %123 = vector.broadcast %122 : vector<16x1xf32> to vector<16x32xf32>
    %124 = arith.mulf %119, %123 : vector<16x32xf32>
    %125 = vector.broadcast %102 : vector<1x32xf32> to vector<16x32xf32>
    %126 = arith.mulf %124, %125 : vector<16x32xf32>
    %127 = vector.broadcast %104 : vector<1x32xf32> to vector<16x32xf32>
    %128 = arith.addf %126, %127 : vector<16x32xf32>
    %c0_51 = arith.constant 0 : index
    %c0_52 = arith.constant 0 : index
    %c0_53 = arith.constant 0 : index
    %129 = vector.load %arg12[%c0_51, %c0_52, %c0_53] : memref<2x32x64xf32, #tpu.memory_space<vmem>>, vector<1x32x64xf32>
    %130 = vector.shape_cast %129 : vector<1x32x64xf32> to vector<32x64xf32>
    %cst_54 = arith.constant dense<0.000000e+00> : vector<16x64xf32>
    %131 = tpu.matmul %128, %130, %cst_54 {dimension_numbers = #tpu.dot_dimension_numbers<[1], [0], [0], [1], [0, 0, 1, 1], [], []>} : vector<16x32xf32>, vector<32x64xf32>, vector<16x64xf32> -> vector<16x64xf32>
    %c0_55 = arith.constant 0 : index
    %c0_56 = arith.constant 0 : index
    %c0_57 = arith.constant 0 : index
    %132 = vector.load %arg13[%c0_55, %c0_56, %c0_57] : memref<2x1x64xf32, #tpu.memory_space<vmem>>, vector<1x1x64xf32>
    %133 = vector.shape_cast %132 : vector<1x1x64xf32> to vector<1x64xf32>
    %134 = vector.broadcast %133 : vector<1x64xf32> to vector<16x64xf32>
    %135 = arith.addf %131, %134 : vector<16x64xf32>
    %cst_58 = arith.constant 0.000000e+00 : f32
    %136 = vector.broadcast %cst_58 : f32 to vector<16x64xf32>
    %137 = arith.maximumf %135, %136 : vector<16x64xf32>
    %c0_59 = arith.constant 0 : index
    %c0_60 = arith.constant 0 : index
    %c0_61 = arith.constant 0 : index
    %138 = vector.load %arg14[%c0_59, %c0_60, %c0_61] : memref<2x64x32xf32, #tpu.memory_space<vmem>>, vector<1x64x32xf32>
    %139 = vector.shape_cast %138 : vector<1x64x32xf32> to vector<64x32xf32>
    %cst_62 = arith.constant dense<0.000000e+00> : vector<16x32xf32>
    %140 = tpu.matmul %137, %139, %cst_62 {dimension_numbers = #tpu.dot_dimension_numbers<[1], [0], [0], [1], [0, 0, 1, 1], [], []>} : vector<16x64xf32>, vector<64x32xf32>, vector<16x32xf32> -> vector<16x32xf32>
    %c0_63 = arith.constant 0 : index
    %c0_64 = arith.constant 0 : index
    %c0_65 = arith.constant 0 : index
    %141 = vector.load %arg15[%c0_63, %c0_64, %c0_65] : memref<2x1x32xf32, #tpu.memory_space<vmem>>, vector<1x1x32xf32>
    %142 = vector.shape_cast %141 : vector<1x1x32xf32> to vector<1x32xf32>
    %143 = vector.broadcast %142 : vector<1x32xf32> to vector<16x32xf32>
    %144 = arith.addf %140, %143 : vector<16x32xf32>
    %145 = arith.addf %128, %144 : vector<16x32xf32>
    %c0_66 = arith.constant 0 : index
    %c0_67 = arith.constant 0 : index
    %c0_68 = arith.constant 0 : index
    %146 = vector.load %arg16[%c0_66, %c0_67, %c0_68] : memref<2x1x32xf32, #tpu.memory_space<vmem>>, vector<1x1x32xf32>
    %147 = vector.shape_cast %146 : vector<1x1x32xf32> to vector<1x32xf32>
    %c0_69 = arith.constant 0 : index
    %c0_70 = arith.constant 0 : index
    %c0_71 = arith.constant 0 : index
    %148 = vector.load %arg17[%c0_69, %c0_70, %c0_71] : memref<2x1x32xf32, #tpu.memory_space<vmem>>, vector<1x1x32xf32>
    %149 = vector.shape_cast %148 : vector<1x1x32xf32> to vector<1x32xf32>
    %cst_72 = arith.constant dense<0.000000e+00> : vector<16xf32>
    %150 = vector.multi_reduction <add>, %145, %cst_72 [1] : vector<16x32xf32> to vector<16xf32>
    %151 = vector.shape_cast %150 : vector<16xf32> to vector<16x1xf32>
    %cst_73 = arith.constant 3.200000e+01 : f32
    %152 = vector.broadcast %cst_73 : f32 to vector<16x1xf32>
    %153 = arith.divf %151, %152 : vector<16x1xf32>
    %154 = vector.broadcast %153 : vector<16x1xf32> to vector<16x32xf32>
    %155 = arith.subf %145, %154 : vector<16x32xf32>
    %156 = vector.broadcast %153 : vector<16x1xf32> to vector<16x32xf32>
    %157 = arith.subf %145, %156 : vector<16x32xf32>
    %158 = arith.mulf %155, %157 : vector<16x32xf32>
    %cst_74 = arith.constant dense<0.000000e+00> : vector<16xf32>
    %159 = vector.multi_reduction <add>, %158, %cst_74 [1] : vector<16x32xf32> to vector<16xf32>
    %160 = vector.shape_cast %159 : vector<16xf32> to vector<16x1xf32>
    %cst_75 = arith.constant 3.200000e+01 : f32
    %161 = vector.broadcast %cst_75 : f32 to vector<16x1xf32>
    %162 = arith.divf %160, %161 : vector<16x1xf32>
    %163 = vector.broadcast %153 : vector<16x1xf32> to vector<16x32xf32>
    %164 = arith.subf %145, %163 : vector<16x32xf32>
    %cst_76 = arith.constant 9.99999974E-6 : f32
    %165 = vector.broadcast %cst_76 : f32 to vector<16x1xf32>
    %166 = arith.addf %162, %165 : vector<16x1xf32>
    %167 = math.rsqrt %166 : vector<16x1xf32>
    %168 = vector.broadcast %167 : vector<16x1xf32> to vector<16x32xf32>
    %169 = arith.mulf %164, %168 : vector<16x32xf32>
    %170 = vector.broadcast %147 : vector<1x32xf32> to vector<16x32xf32>
    %171 = arith.mulf %169, %170 : vector<16x32xf32>
    %172 = vector.broadcast %149 : vector<1x32xf32> to vector<16x32xf32>
    %173 = arith.addf %171, %172 : vector<16x32xf32>
    %c1 = arith.constant 1 : index
    %c0_77 = arith.constant 0 : index
    %c0_78 = arith.constant 0 : index
    %174 = vector.load %arg6[%c1, %c0_77, %c0_78] : memref<2x32x96xf32, #tpu.memory_space<vmem>>, vector<1x32x96xf32>
    %175 = vector.shape_cast %174 : vector<1x32x96xf32> to vector<32x96xf32>
    %cst_79 = arith.constant dense<0.000000e+00> : vector<16x96xf32>
    %176 = tpu.matmul %173, %175, %cst_79 {dimension_numbers = #tpu.dot_dimension_numbers<[1], [0], [0], [1], [0, 0, 1, 1], [], []>} : vector<16x32xf32>, vector<32x96xf32>, vector<16x96xf32> -> vector<16x96xf32>
    %c1_80 = arith.constant 1 : index
    %c0_81 = arith.constant 0 : index
    %c0_82 = arith.constant 0 : index
    %177 = vector.load %arg7[%c1_80, %c0_81, %c0_82] : memref<2x1x96xf32, #tpu.memory_space<vmem>>, vector<1x1x96xf32>
    %178 = vector.shape_cast %177 : vector<1x1x96xf32> to vector<1x96xf32>
    %179 = vector.broadcast %178 : vector<1x96xf32> to vector<16x96xf32>
    %180 = arith.addf %176, %179 : vector<16x96xf32>
    %181 = vector.extract_strided_slice %180 {offsets = [0, 0], sizes = [16, 32], strides = [1, 1]} : vector<16x96xf32> to vector<16x32xf32>
    %182 = vector.shape_cast %181 : vector<16x32xf32> to vector<2x8x32xf32>
    %183 = vector.extract_strided_slice %180 {offsets = [0, 32], sizes = [16, 32], strides = [1, 1]} : vector<16x96xf32> to vector<16x32xf32>
    %184 = vector.shape_cast %183 : vector<16x32xf32> to vector<2x8x32xf32>
    %185 = vector.extract_strided_slice %180 {offsets = [0, 64], sizes = [16, 32], strides = [1, 1]} : vector<16x96xf32> to vector<16x32xf32>
    %186 = vector.shape_cast %185 : vector<16x32xf32> to vector<2x8x32xf32>
    %187 = vector.extract_strided_slice %182 {offsets = [0, 0, 0], sizes = [2, 8, 8], strides = [1, 1, 1]} : vector<2x8x32xf32> to vector<2x8x8xf32>
    %188 = vector.extract_strided_slice %184 {offsets = [0, 0, 0], sizes = [2, 8, 8], strides = [1, 1, 1]} : vector<2x8x32xf32> to vector<2x8x8xf32>
    "tpu.trace_start"() <{level = 10 : i32, message = "bqd,bkd->bqk"}> : () -> ()
    %cst_83 = arith.constant dense<0.000000e+00> : vector<2x8x8xf32>
    %189 = tpu.matmul %187, %188, %cst_83 {dimension_numbers = #tpu.dot_dimension_numbers<[2], [2], [1], [1], [0, 0, 0, 1, 1, 1], [0], [0]>} : vector<2x8x8xf32>, vector<2x8x8xf32>, vector<2x8x8xf32> -> vector<2x8x8xf32>
    "tpu.trace_stop"() : () -> ()
    %190 = arith.addf %189, %13 : vector<2x8x8xf32>
    %cst_84 = arith.constant dense<0xFF800000> : vector<2x8xf32>
    %191 = vector.multi_reduction <maximumf>, %190, %cst_84 [2] : vector<2x8x8xf32> to vector<2x8xf32>
    %192 = vector.shape_cast %191 : vector<2x8xf32> to vector<2x8x1xf32>
    %193 = vector.broadcast %192 : vector<2x8x1xf32> to vector<2x8x8xf32>
    %194 = arith.subf %190, %193 : vector<2x8x8xf32>
    %195 = math.exp %194 : vector<2x8x8xf32>
    %cst_85 = arith.constant dense<0.000000e+00> : vector<2x8xf32>
    %196 = vector.multi_reduction <add>, %195, %cst_85 [2] : vector<2x8x8xf32> to vector<2x8xf32>
    %197 = vector.shape_cast %196 : vector<2x8xf32> to vector<2x8x1xf32>
    %198 = tpu.reciprocal %197 {approx = true} : vector<2x8x1xf32> -> vector<2x8x1xf32>
    %199 = vector.broadcast %198 : vector<2x8x1xf32> to vector<2x8x8xf32>
    %200 = arith.mulf %195, %199 : vector<2x8x8xf32>
    %201 = vector.extract_strided_slice %186 {offsets = [0, 0, 0], sizes = [2, 8, 8], strides = [1, 1, 1]} : vector<2x8x32xf32> to vector<2x8x8xf32>
    "tpu.trace_start"() <{level = 10 : i32, message = "bqk,bkd->bqd"}> : () -> ()
    %cst_86 = arith.constant dense<0.000000e+00> : vector<2x8x8xf32>
    %202 = tpu.matmul %200, %201, %cst_86 {dimension_numbers = #tpu.dot_dimension_numbers<[2], [1], [1], [2], [0, 0, 0, 1, 1, 2], [0], [0]>} : vector<2x8x8xf32>, vector<2x8x8xf32>, vector<2x8x8xf32> -> vector<2x8x8xf32>
    "tpu.trace_stop"() : () -> ()
    %203 = vector.extract_strided_slice %182 {offsets = [0, 0, 8], sizes = [2, 8, 8], strides = [1, 1, 1]} : vector<2x8x32xf32> to vector<2x8x8xf32>
    %204 = vector.extract_strided_slice %184 {offsets = [0, 0, 8], sizes = [2, 8, 8], strides = [1, 1, 1]} : vector<2x8x32xf32> to vector<2x8x8xf32>
    "tpu.trace_start"() <{level = 10 : i32, message = "bqd,bkd->bqk"}> : () -> ()
    %cst_87 = arith.constant dense<0.000000e+00> : vector<2x8x8xf32>
    %205 = tpu.matmul %203, %204, %cst_87 {dimension_numbers = #tpu.dot_dimension_numbers<[2], [2], [1], [1], [0, 0, 0, 1, 1, 1], [0], [0]>} : vector<2x8x8xf32>, vector<2x8x8xf32>, vector<2x8x8xf32> -> vector<2x8x8xf32>
    "tpu.trace_stop"() : () -> ()
    %206 = arith.addf %205, %13 : vector<2x8x8xf32>
    %cst_88 = arith.constant dense<0xFF800000> : vector<2x8xf32>
    %207 = vector.multi_reduction <maximumf>, %206, %cst_88 [2] : vector<2x8x8xf32> to vector<2x8xf32>
    %208 = vector.shape_cast %207 : vector<2x8xf32> to vector<2x8x1xf32>
    %209 = vector.broadcast %208 : vector<2x8x1xf32> to vector<2x8x8xf32>
    %210 = arith.subf %206, %209 : vector<2x8x8xf32>
    %211 = math.exp %210 : vector<2x8x8xf32>
    %cst_89 = arith.constant dense<0.000000e+00> : vector<2x8xf32>
    %212 = vector.multi_reduction <add>, %211, %cst_89 [2] : vector<2x8x8xf32> to vector<2x8xf32>
    %213 = vector.shape_cast %212 : vector<2x8xf32> to vector<2x8x1xf32>
    %214 = tpu.reciprocal %213 {approx = true} : vector<2x8x1xf32> -> vector<2x8x1xf32>
    %215 = vector.broadcast %214 : vector<2x8x1xf32> to vector<2x8x8xf32>
    %216 = arith.mulf %211, %215 : vector<2x8x8xf32>
    %217 = vector.extract_strided_slice %186 {offsets = [0, 0, 8], sizes = [2, 8, 8], strides = [1, 1, 1]} : vector<2x8x32xf32> to vector<2x8x8xf32>
    "tpu.trace_start"() <{level = 10 : i32, message = "bqk,bkd->bqd"}> : () -> ()
    %cst_90 = arith.constant dense<0.000000e+00> : vector<2x8x8xf32>
    %218 = tpu.matmul %216, %217, %cst_90 {dimension_numbers = #tpu.dot_dimension_numbers<[2], [1], [1], [2], [0, 0, 0, 1, 1, 2], [0], [0]>} : vector<2x8x8xf32>, vector<2x8x8xf32>, vector<2x8x8xf32> -> vector<2x8x8xf32>
    "tpu.trace_stop"() : () -> ()
    %219 = vector.extract_strided_slice %182 {offsets = [0, 0, 16], sizes = [2, 8, 8], strides = [1, 1, 1]} : vector<2x8x32xf32> to vector<2x8x8xf32>
    %220 = vector.extract_strided_slice %184 {offsets = [0, 0, 16], sizes = [2, 8, 8], strides = [1, 1, 1]} : vector<2x8x32xf32> to vector<2x8x8xf32>
    "tpu.trace_start"() <{level = 10 : i32, message = "bqd,bkd->bqk"}> : () -> ()
    %cst_91 = arith.constant dense<0.000000e+00> : vector<2x8x8xf32>
    %221 = tpu.matmul %219, %220, %cst_91 {dimension_numbers = #tpu.dot_dimension_numbers<[2], [2], [1], [1], [0, 0, 0, 1, 1, 1], [0], [0]>} : vector<2x8x8xf32>, vector<2x8x8xf32>, vector<2x8x8xf32> -> vector<2x8x8xf32>
    "tpu.trace_stop"() : () -> ()
    %222 = arith.addf %221, %13 : vector<2x8x8xf32>
    %cst_92 = arith.constant dense<0xFF800000> : vector<2x8xf32>
    %223 = vector.multi_reduction <maximumf>, %222, %cst_92 [2] : vector<2x8x8xf32> to vector<2x8xf32>
    %224 = vector.shape_cast %223 : vector<2x8xf32> to vector<2x8x1xf32>
    %225 = vector.broadcast %224 : vector<2x8x1xf32> to vector<2x8x8xf32>
    %226 = arith.subf %222, %225 : vector<2x8x8xf32>
    %227 = math.exp %226 : vector<2x8x8xf32>
    %cst_93 = arith.constant dense<0.000000e+00> : vector<2x8xf32>
    %228 = vector.multi_reduction <add>, %227, %cst_93 [2] : vector<2x8x8xf32> to vector<2x8xf32>
    %229 = vector.shape_cast %228 : vector<2x8xf32> to vector<2x8x1xf32>
    %230 = tpu.reciprocal %229 {approx = true} : vector<2x8x1xf32> -> vector<2x8x1xf32>
    %231 = vector.broadcast %230 : vector<2x8x1xf32> to vector<2x8x8xf32>
    %232 = arith.mulf %227, %231 : vector<2x8x8xf32>
    %233 = vector.extract_strided_slice %186 {offsets = [0, 0, 16], sizes = [2, 8, 8], strides = [1, 1, 1]} : vector<2x8x32xf32> to vector<2x8x8xf32>
    "tpu.trace_start"() <{level = 10 : i32, message = "bqk,bkd->bqd"}> : () -> ()
    %cst_94 = arith.constant dense<0.000000e+00> : vector<2x8x8xf32>
    %234 = tpu.matmul %232, %233, %cst_94 {dimension_numbers = #tpu.dot_dimension_numbers<[2], [1], [1], [2], [0, 0, 0, 1, 1, 2], [0], [0]>} : vector<2x8x8xf32>, vector<2x8x8xf32>, vector<2x8x8xf32> -> vector<2x8x8xf32>
    "tpu.trace_stop"() : () -> ()
    %235 = vector.extract_strided_slice %182 {offsets = [0, 0, 24], sizes = [2, 8, 8], strides = [1, 1, 1]} : vector<2x8x32xf32> to vector<2x8x8xf32>
    %236 = vector.extract_strided_slice %184 {offsets = [0, 0, 24], sizes = [2, 8, 8], strides = [1, 1, 1]} : vector<2x8x32xf32> to vector<2x8x8xf32>
    "tpu.trace_start"() <{level = 10 : i32, message = "bqd,bkd->bqk"}> : () -> ()
    %cst_95 = arith.constant dense<0.000000e+00> : vector<2x8x8xf32>
    %237 = tpu.matmul %235, %236, %cst_95 {dimension_numbers = #tpu.dot_dimension_numbers<[2], [2], [1], [1], [0, 0, 0, 1, 1, 1], [0], [0]>} : vector<2x8x8xf32>, vector<2x8x8xf32>, vector<2x8x8xf32> -> vector<2x8x8xf32>
    "tpu.trace_stop"() : () -> ()
    %238 = arith.addf %237, %13 : vector<2x8x8xf32>
    %cst_96 = arith.constant dense<0xFF800000> : vector<2x8xf32>
    %239 = vector.multi_reduction <maximumf>, %238, %cst_96 [2] : vector<2x8x8xf32> to vector<2x8xf32>
    %240 = vector.shape_cast %239 : vector<2x8xf32> to vector<2x8x1xf32>
    %241 = vector.broadcast %240 : vector<2x8x1xf32> to vector<2x8x8xf32>
    %242 = arith.subf %238, %241 : vector<2x8x8xf32>
    %243 = math.exp %242 : vector<2x8x8xf32>
    %cst_97 = arith.constant dense<0.000000e+00> : vector<2x8xf32>
    %244 = vector.multi_reduction <add>, %243, %cst_97 [2] : vector<2x8x8xf32> to vector<2x8xf32>
    %245 = vector.shape_cast %244 : vector<2x8xf32> to vector<2x8x1xf32>
    %246 = tpu.reciprocal %245 {approx = true} : vector<2x8x1xf32> -> vector<2x8x1xf32>
    %247 = vector.broadcast %246 : vector<2x8x1xf32> to vector<2x8x8xf32>
    %248 = arith.mulf %243, %247 : vector<2x8x8xf32>
    %249 = vector.extract_strided_slice %186 {offsets = [0, 0, 24], sizes = [2, 8, 8], strides = [1, 1, 1]} : vector<2x8x32xf32> to vector<2x8x8xf32>
    "tpu.trace_start"() <{level = 10 : i32, message = "bqk,bkd->bqd"}> : () -> ()
    %cst_98 = arith.constant dense<0.000000e+00> : vector<2x8x8xf32>
    %250 = tpu.matmul %248, %249, %cst_98 {dimension_numbers = #tpu.dot_dimension_numbers<[2], [1], [1], [2], [0, 0, 0, 1, 1, 2], [0], [0]>} : vector<2x8x8xf32>, vector<2x8x8xf32>, vector<2x8x8xf32> -> vector<2x8x8xf32>
    "tpu.trace_stop"() : () -> ()
    %251 = tpu.concatenate %202, %218, %234, %250 in 2 : vector<2x8x8xf32>, vector<2x8x8xf32>, vector<2x8x8xf32>, vector<2x8x8xf32> -> vector<2x8x32xf32>
    %252 = vector.shape_cast %251 : vector<2x8x32xf32> to vector<16x32xf32>
    %c1_99 = arith.constant 1 : index
    %c0_100 = arith.constant 0 : index
    %c0_101 = arith.constant 0 : index
    %253 = vector.load %arg8[%c1_99, %c0_100, %c0_101] : memref<2x32x32xf32, #tpu.memory_space<vmem>>, vector<1x32x32xf32>
    %254 = vector.shape_cast %253 : vector<1x32x32xf32> to vector<32x32xf32>
    %cst_102 = arith.constant dense<0.000000e+00> : vector<16x32xf32>
    %255 = tpu.matmul %252, %254, %cst_102 {dimension_numbers = #tpu.dot_dimension_numbers<[1], [0], [0], [1], [0, 0, 1, 1], [], []>} : vector<16x32xf32>, vector<32x32xf32>, vector<16x32xf32> -> vector<16x32xf32>
    %c1_103 = arith.constant 1 : index
    %c0_104 = arith.constant 0 : index
    %c0_105 = arith.constant 0 : index
    %256 = vector.load %arg9[%c1_103, %c0_104, %c0_105] : memref<2x1x32xf32, #tpu.memory_space<vmem>>, vector<1x1x32xf32>
    %257 = vector.shape_cast %256 : vector<1x1x32xf32> to vector<1x32xf32>
    %258 = vector.broadcast %257 : vector<1x32xf32> to vector<16x32xf32>
    %259 = arith.addf %255, %258 : vector<16x32xf32>
    %260 = arith.addf %173, %259 : vector<16x32xf32>
    %c1_106 = arith.constant 1 : index
    %c0_107 = arith.constant 0 : index
    %c0_108 = arith.constant 0 : index
    %261 = vector.load %arg10[%c1_106, %c0_107, %c0_108] : memref<2x1x32xf32, #tpu.memory_space<vmem>>, vector<1x1x32xf32>
    %262 = vector.shape_cast %261 : vector<1x1x32xf32> to vector<1x32xf32>
    %c1_109 = arith.constant 1 : index
    %c0_110 = arith.constant 0 : index
    %c0_111 = arith.constant 0 : index
    %263 = vector.load %arg11[%c1_109, %c0_110, %c0_111] : memref<2x1x32xf32, #tpu.memory_space<vmem>>, vector<1x1x32xf32>
    %264 = vector.shape_cast %263 : vector<1x1x32xf32> to vector<1x32xf32>
    %cst_112 = arith.constant dense<0.000000e+00> : vector<16xf32>
    %265 = vector.multi_reduction <add>, %260, %cst_112 [1] : vector<16x32xf32> to vector<16xf32>
    %266 = vector.shape_cast %265 : vector<16xf32> to vector<16x1xf32>
    %cst_113 = arith.constant 3.200000e+01 : f32
    %267 = vector.broadcast %cst_113 : f32 to vector<16x1xf32>
    %268 = arith.divf %266, %267 : vector<16x1xf32>
    %269 = vector.broadcast %268 : vector<16x1xf32> to vector<16x32xf32>
    %270 = arith.subf %260, %269 : vector<16x32xf32>
    %271 = vector.broadcast %268 : vector<16x1xf32> to vector<16x32xf32>
    %272 = arith.subf %260, %271 : vector<16x32xf32>
    %273 = arith.mulf %270, %272 : vector<16x32xf32>
    %cst_114 = arith.constant dense<0.000000e+00> : vector<16xf32>
    %274 = vector.multi_reduction <add>, %273, %cst_114 [1] : vector<16x32xf32> to vector<16xf32>
    %275 = vector.shape_cast %274 : vector<16xf32> to vector<16x1xf32>
    %cst_115 = arith.constant 3.200000e+01 : f32
    %276 = vector.broadcast %cst_115 : f32 to vector<16x1xf32>
    %277 = arith.divf %275, %276 : vector<16x1xf32>
    %278 = vector.broadcast %268 : vector<16x1xf32> to vector<16x32xf32>
    %279 = arith.subf %260, %278 : vector<16x32xf32>
    %cst_116 = arith.constant 9.99999974E-6 : f32
    %280 = vector.broadcast %cst_116 : f32 to vector<16x1xf32>
    %281 = arith.addf %277, %280 : vector<16x1xf32>
    %282 = math.rsqrt %281 : vector<16x1xf32>
    %283 = vector.broadcast %282 : vector<16x1xf32> to vector<16x32xf32>
    %284 = arith.mulf %279, %283 : vector<16x32xf32>
    %285 = vector.broadcast %262 : vector<1x32xf32> to vector<16x32xf32>
    %286 = arith.mulf %284, %285 : vector<16x32xf32>
    %287 = vector.broadcast %264 : vector<1x32xf32> to vector<16x32xf32>
    %288 = arith.addf %286, %287 : vector<16x32xf32>
    %c1_117 = arith.constant 1 : index
    %c0_118 = arith.constant 0 : index
    %c0_119 = arith.constant 0 : index
    %289 = vector.load %arg12[%c1_117, %c0_118, %c0_119] : memref<2x32x64xf32, #tpu.memory_space<vmem>>, vector<1x32x64xf32>
    %290 = vector.shape_cast %289 : vector<1x32x64xf32> to vector<32x64xf32>
    %cst_120 = arith.constant dense<0.000000e+00> : vector<16x64xf32>
    %291 = tpu.matmul %288, %290, %cst_120 {dimension_numbers = #tpu.dot_dimension_numbers<[1], [0], [0], [1], [0, 0, 1, 1], [], []>} : vector<16x32xf32>, vector<32x64xf32>, vector<16x64xf32> -> vector<16x64xf32>
    %c1_121 = arith.constant 1 : index
    %c0_122 = arith.constant 0 : index
    %c0_123 = arith.constant 0 : index
    %292 = vector.load %arg13[%c1_121, %c0_122, %c0_123] : memref<2x1x64xf32, #tpu.memory_space<vmem>>, vector<1x1x64xf32>
    %293 = vector.shape_cast %292 : vector<1x1x64xf32> to vector<1x64xf32>
    %294 = vector.broadcast %293 : vector<1x64xf32> to vector<16x64xf32>
    %295 = arith.addf %291, %294 : vector<16x64xf32>
    %cst_124 = arith.constant 0.000000e+00 : f32
    %296 = vector.broadcast %cst_124 : f32 to vector<16x64xf32>
    %297 = arith.maximumf %295, %296 : vector<16x64xf32>
    %c1_125 = arith.constant 1 : index
    %c0_126 = arith.constant 0 : index
    %c0_127 = arith.constant 0 : index
    %298 = vector.load %arg14[%c1_125, %c0_126, %c0_127] : memref<2x64x32xf32, #tpu.memory_space<vmem>>, vector<1x64x32xf32>
    %299 = vector.shape_cast %298 : vector<1x64x32xf32> to vector<64x32xf32>
    %cst_128 = arith.constant dense<0.000000e+00> : vector<16x32xf32>
    %300 = tpu.matmul %297, %299, %cst_128 {dimension_numbers = #tpu.dot_dimension_numbers<[1], [0], [0], [1], [0, 0, 1, 1], [], []>} : vector<16x64xf32>, vector<64x32xf32>, vector<16x32xf32> -> vector<16x32xf32>
    %c1_129 = arith.constant 1 : index
    %c0_130 = arith.constant 0 : index
    %c0_131 = arith.constant 0 : index
    %301 = vector.load %arg15[%c1_129, %c0_130, %c0_131] : memref<2x1x32xf32, #tpu.memory_space<vmem>>, vector<1x1x32xf32>
    %302 = vector.shape_cast %301 : vector<1x1x32xf32> to vector<1x32xf32>
    %303 = vector.broadcast %302 : vector<1x32xf32> to vector<16x32xf32>
    %304 = arith.addf %300, %303 : vector<16x32xf32>
    %305 = arith.addf %288, %304 : vector<16x32xf32>
    %c1_132 = arith.constant 1 : index
    %c0_133 = arith.constant 0 : index
    %c0_134 = arith.constant 0 : index
    %306 = vector.load %arg16[%c1_132, %c0_133, %c0_134] : memref<2x1x32xf32, #tpu.memory_space<vmem>>, vector<1x1x32xf32>
    %307 = vector.shape_cast %306 : vector<1x1x32xf32> to vector<1x32xf32>
    %c1_135 = arith.constant 1 : index
    %c0_136 = arith.constant 0 : index
    %c0_137 = arith.constant 0 : index
    %308 = vector.load %arg17[%c1_135, %c0_136, %c0_137] : memref<2x1x32xf32, #tpu.memory_space<vmem>>, vector<1x1x32xf32>
    %309 = vector.shape_cast %308 : vector<1x1x32xf32> to vector<1x32xf32>
    %cst_138 = arith.constant dense<0.000000e+00> : vector<16xf32>
    %310 = vector.multi_reduction <add>, %305, %cst_138 [1] : vector<16x32xf32> to vector<16xf32>
    %311 = vector.shape_cast %310 : vector<16xf32> to vector<16x1xf32>
    %cst_139 = arith.constant 3.200000e+01 : f32
    %312 = vector.broadcast %cst_139 : f32 to vector<16x1xf32>
    %313 = arith.divf %311, %312 : vector<16x1xf32>
    %314 = vector.broadcast %313 : vector<16x1xf32> to vector<16x32xf32>
    %315 = arith.subf %305, %314 : vector<16x32xf32>
    %316 = vector.broadcast %313 : vector<16x1xf32> to vector<16x32xf32>
    %317 = arith.subf %305, %316 : vector<16x32xf32>
    %318 = arith.mulf %315, %317 : vector<16x32xf32>
    %cst_140 = arith.constant dense<0.000000e+00> : vector<16xf32>
    %319 = vector.multi_reduction <add>, %318, %cst_140 [1] : vector<16x32xf32> to vector<16xf32>
    %320 = vector.shape_cast %319 : vector<16xf32> to vector<16x1xf32>
    %cst_141 = arith.constant 3.200000e+01 : f32
    %321 = vector.broadcast %cst_141 : f32 to vector<16x1xf32>
    %322 = arith.divf %320, %321 : vector<16x1xf32>
    %323 = vector.broadcast %313 : vector<16x1xf32> to vector<16x32xf32>
    %324 = arith.subf %305, %323 : vector<16x32xf32>
    %cst_142 = arith.constant 9.99999974E-6 : f32
    %325 = vector.broadcast %cst_142 : f32 to vector<16x1xf32>
    %326 = arith.addf %322, %325 : vector<16x1xf32>
    %327 = math.rsqrt %326 : vector<16x1xf32>
    %328 = vector.broadcast %327 : vector<16x1xf32> to vector<16x32xf32>
    %329 = arith.mulf %324, %328 : vector<16x32xf32>
    %330 = vector.broadcast %307 : vector<1x32xf32> to vector<16x32xf32>
    %331 = arith.mulf %329, %330 : vector<16x32xf32>
    %332 = vector.broadcast %309 : vector<1x32xf32> to vector<16x32xf32>
    %333 = arith.addf %331, %332 : vector<16x32xf32>
    %334 = vector.shape_cast %333 : vector<16x32xf32> to vector<2x8x32xf32>
    %cst_143 = arith.constant dense<0.000000e+00> : vector<2x32xf32>
    %335 = vector.multi_reduction <add>, %334, %cst_143 [1] : vector<2x8x32xf32> to vector<2x32xf32>
    %cst_144 = arith.constant 8.000000e+00 : f32
    %336 = vector.broadcast %cst_144 : f32 to vector<2x32xf32>
    %337 = arith.divf %335, %336 : vector<2x32xf32>
    %c0_145 = arith.constant 0 : index
    %c0_146 = arith.constant 0 : index
    %338 = vector.load %arg18[%c0_145, %c0_146] : memref<32x128xf32, #tpu.memory_space<vmem>>, vector<32x128xf32>
    %cst_147 = arith.constant dense<0.000000e+00> : vector<2x128xf32>
    %339 = tpu.matmul %337, %338, %cst_147 {dimension_numbers = #tpu.dot_dimension_numbers<[1], [0], [0], [1], [0, 0, 1, 1], [], []>} : vector<2x32xf32>, vector<32x128xf32>, vector<2x128xf32> -> vector<2x128xf32>
    %c0_148 = arith.constant 0 : index
    %c0_149 = arith.constant 0 : index
    %340 = vector.load %arg19[%c0_148, %c0_149] : memref<1x128xf32, #tpu.memory_space<vmem>>, vector<1x128xf32>
    %341 = vector.broadcast %340 : vector<1x128xf32> to vector<2x128xf32>
    %342 = arith.addf %339, %341 : vector<2x128xf32>
    %c0_150 = arith.constant 0 : index
    %c0_151 = arith.constant 0 : index
    %343 = vector.load %arg20[%c0_150, %c0_151] : memref<2x128xf32, #tpu.memory_space<vmem>>, vector<2x128xf32>
    tpu.vector_store %arg20[%c0_150, %c0_151], %342 {strides = array<i32>} : memref<2x128xf32, #tpu.memory_space<vmem>>, vector<2x128xf32>,
    return
  }
  func.func @transform_0(%arg0: i32) -> (i32, i32, i32) {
    %c0_i32 = arith.constant 0 : i32
    %c0_i32_0 = arith.constant 0 : i32
    %c0_i32_1 = arith.constant 0 : i32
    return %arg0, %c0_i32, %c0_i32_0 : i32, i32, i32
  }
  func.func @transform_1(%arg0: i32) -> (i32, i32) {
    %c0_i32 = arith.constant 0 : i32
    %c0_i32_0 = arith.constant 0 : i32
    %c0_i32_1 = arith.constant 0 : i32
    return %c0_i32, %c0_i32_0 : i32, i32
  }
  func.func @transform_2(%arg0: i32) -> (i32, i32) {
    %c0_i32 = arith.constant 0 : i32
    %c0_i32_0 = arith.constant 0 : i32
    return %arg0, %c0_i32 : i32, i32
  }
  func.func @transform_3(%arg0: i32) -> (i32, i32) {
    %c0_i32 = arith.constant 0 : i32
    %c0_i32_0 = arith.constant 0 : i32
    %c0_i32_1 = arith.constant 0 : i32
    return %c0_i32, %c0_i32_0 : i32, i32
  }
  func.func @transform_4(%arg0: i32) -> (i32, i32) {
    %c0_i32 = arith.constant 0 : i32
    %c0_i32_0 = arith.constant 0 : i32
    %c0_i32_1 = arith.constant 0 : i32
    return %c0_i32, %c0_i32_0 : i32, i32
  }
  func.func @transform_5(%arg0: i32) -> (i32, i32, i32) {
    %c0_i32 = arith.constant 0 : i32
    %c0_i32_0 = arith.constant 0 : i32
    %c0_i32_1 = arith.constant 0 : i32
    %c0_i32_2 = arith.constant 0 : i32
    return %c0_i32, %c0_i32_0, %c0_i32_1 : i32, i32, i32
  }
  func.func @transform_6(%arg0: i32) -> (i32, i32, i32) {
    %c0_i32 = arith.constant 0 : i32
    %c0_i32_0 = arith.constant 0 : i32
    %c0_i32_1 = arith.constant 0 : i32
    %c0_i32_2 = arith.constant 0 : i32
    return %c0_i32, %c0_i32_0, %c0_i32_1 : i32, i32, i32
  }
  func.func @transform_7(%arg0: i32) -> (i32, i32, i32) {
    %c0_i32 = arith.constant 0 : i32
    %c0_i32_0 = arith.constant 0 : i32
    %c0_i32_1 = arith.constant 0 : i32
    %c0_i32_2 = arith.constant 0 : i32
    return %c0_i32, %c0_i32_0, %c0_i32_1 : i32, i32, i32
  }
  func.func @transform_8(%arg0: i32) -> (i32, i32, i32) {
    %c0_i32 = arith.constant 0 : i32
    %c0_i32_0 = arith.constant 0 : i32
    %c0_i32_1 = arith.constant 0 : i32
    %c0_i32_2 = arith.constant 0 : i32
    return %c0_i32, %c0_i32_0, %c0_i32_1 : i32, i32, i32
  }
  func.func @transform_9(%arg0: i32) -> (i32, i32, i32) {
    %c0_i32 = arith.constant 0 : i32
    %c0_i32_0 = arith.constant 0 : i32
    %c0_i32_1 = arith.constant 0 : i32
    %c0_i32_2 = arith.constant 0 : i32
    return %c0_i32, %c0_i32_0, %c0_i32_1 : i32, i32, i32
  }
  func.func @transform_10(%arg0: i32) -> (i32, i32, i32) {
    %c0_i32 = arith.constant 0 : i32
    %c0_i32_0 = arith.constant 0 : i32
    %c0_i32_1 = arith.constant 0 : i32
    %c0_i32_2 = arith.constant 0 : i32
    return %c0_i32, %c0_i32_0, %c0_i32_1 : i32, i32, i32
  }
  func.func @transform_11(%arg0: i32) -> (i32, i32, i32) {
    %c0_i32 = arith.constant 0 : i32
    %c0_i32_0 = arith.constant 0 : i32
    %c0_i32_1 = arith.constant 0 : i32
    %c0_i32_2 = arith.constant 0 : i32
    return %c0_i32, %c0_i32_0, %c0_i32_1 : i32, i32, i32
  }
  func.func @transform_12(%arg0: i32) -> (i32, i32, i32) {
    %c0_i32 = arith.constant 0 : i32
    %c0_i32_0 = arith.constant 0 : i32
    %c0_i32_1 = arith.constant 0 : i32
    %c0_i32_2 = arith.constant 0 : i32
    return %c0_i32, %c0_i32_0, %c0_i32_1 : i32, i32, i32
  }
  func.func @transform_13(%arg0: i32) -> (i32, i32, i32) {
    %c0_i32 = arith.constant 0 : i32
    %c0_i32_0 = arith.constant 0 : i32
    %c0_i32_1 = arith.constant 0 : i32
    %c0_i32_2 = arith.constant 0 : i32
    return %c0_i32, %c0_i32_0, %c0_i32_1 : i32, i32, i32
  }
  func.func @transform_14(%arg0: i32) -> (i32, i32, i32) {
    %c0_i32 = arith.constant 0 : i32
    %c0_i32_0 = arith.constant 0 : i32
    %c0_i32_1 = arith.constant 0 : i32
    %c0_i32_2 = arith.constant 0 : i32
    return %c0_i32, %c0_i32_0, %c0_i32_1 : i32, i32, i32
  }
  func.func @transform_15(%arg0: i32) -> (i32, i32, i32) {
    %c0_i32 = arith.constant 0 : i32
    %c0_i32_0 = arith.constant 0 : i32
    %c0_i32_1 = arith.constant 0 : i32
    %c0_i32_2 = arith.constant 0 : i32
    return %c0_i32, %c0_i32_0, %c0_i32_1 : i32, i32, i32
  }
  func.func @transform_16(%arg0: i32) -> (i32, i32, i32) {
    %c0_i32 = arith.constant 0 : i32
    %c0_i32_0 = arith.constant 0 : i32
    %c0_i32_1 = arith.constant 0 : i32
    %c0_i32_2 = arith.constant 0 : i32
    return %c0_i32, %c0_i32_0, %c0_i32_1 : i32, i32, i32
  }
  func.func @transform_17(%arg0: i32) -> (i32, i32) {
    %c0_i32 = arith.constant 0 : i32
    %c0_i32_0 = arith.constant 0 : i32
    %c0_i32_1 = arith.constant 0 : i32
    return %c0_i32, %c0_i32_0 : i32, i32
  }
  func.func @transform_18(%arg0: i32) -> (i32, i32) {
    %c0_i32 = arith.constant 0 : i32
    %c0_i32_0 = arith.constant 0 : i32
    %c0_i32_1 = arith.constant 0 : i32
    return %c0_i32, %c0_i32_0 : i32, i32
  }
  func.func @transform_19(%arg0: i32) -> (i32, i32) {
    %c0_i32 = arith.constant 0 : i32
    %c0_i32_0 = arith.constant 0 : i32
    return %arg0, %c0_i32 : i32, i32
  }
}

module attributes {stable_mosaic.version = 11 : i64} {
  func.func @_fused_forward_kernel(%arg0: i32, %arg1: memref<2x8x8xf32, #tpu.memory_space<vmem>>, %arg2: memref<8x8xf32, #tpu.memory_space<vmem>>, %arg3: memref<2x8xf32, #tpu.memory_space<vmem>>, %arg4: memref<8x32xf32, #tpu.memory_space<vmem>>, %arg5: memref<1x32xf32, #tpu.memory_space<vmem>>, %arg6: memref<2x32x96xf32, #tpu.memory_space<vmem>>, %arg7: memref<2x1x96xf32, #tpu.memory_space<vmem>>, %arg8: memref<2x32x32xf32, #tpu.memory_space<vmem>>, %arg9: memref<2x1x32xf32, #tpu.memory_space<vmem>>, %arg10: memref<2x1x32xf32, #tpu.memory_space<vmem>>, %arg11: memref<2x1x32xf32, #tpu.memory_space<vmem>>, %arg12: memref<2x32x64xf32, #tpu.memory_space<vmem>>, %arg13: memref<2x1x64xf32, #tpu.memory_space<vmem>>, %arg14: memref<2x64x32xf32, #tpu.memory_space<vmem>>, %arg15: memref<2x1x32xf32, #tpu.memory_space<vmem>>, %arg16: memref<2x1x32xf32, #tpu.memory_space<vmem>>, %arg17: memref<2x1x32xf32, #tpu.memory_space<vmem>>, %arg18: memref<32x128xf32, #tpu.memory_space<vmem>>, %arg19: memref<1x128xf32, #tpu.memory_space<vmem>>, %arg20: memref<2x128xf32, #tpu.memory_space<vmem>>) attributes {dimension_semantics = [#tpu.dimension_semantics<parallel>], iteration_bounds = array<i64: 1>, scalar_prefetch = 0 : i64, scratch_operands = 0 : i64, tpu.core_type = #tpu.core_type<tc>, window_params = [{transform_indices = @transform_0, window_bounds = array<i64: 2, 8, 8>}, {pipeline_mode = #tpu.pipeline_mode<synchronous>, transform_indices = @transform_1, window_bounds = array<i64: 8, 8>}, {transform_indices = @transform_2, window_bounds = array<i64: 2, 8>}, {pipeline_mode = #tpu.pipeline_mode<synchronous>, transform_indices = @transform_3, window_bounds = array<i64: 8, 32>}, {pipeline_mode = #tpu.pipeline_mode<synchronous>, transform_indices = @transform_4, window_bounds = array<i64: 1, 32>}, {pipeline_mode = #tpu.pipeline_mode<synchronous>, transform_indices = @transform_5, window_bounds = array<i64: 2, 32, 96>}, {pipeline_mode = #tpu.pipeline_mode<synchronous>, transform_indices = @transform_6, window_bounds = array<i64: 2, 1, 96>}, {pipeline_mode = #tpu.pipeline_mode<synchronous>, transform_indices = @transform_7, window_bounds = array<i64: 2, 32, 32>}, {pipeline_mode = #tpu.pipeline_mode<synchronous>, transform_indices = @transform_8, window_bounds = array<i64: 2, 1, 32>}, {pipeline_mode = #tpu.pipeline_mode<synchronous>, transform_indices = @transform_9, window_bounds = array<i64: 2, 1, 32>}, {pipeline_mode = #tpu.pipeline_mode<synchronous>, transform_indices = @transform_10, window_bounds = array<i64: 2, 1, 32>}, {pipeline_mode = #tpu.pipeline_mode<synchronous>, transform_indices = @transform_11, window_bounds = array<i64: 2, 32, 64>}, {pipeline_mode = #tpu.pipeline_mode<synchronous>, transform_indices = @transform_12, window_bounds = array<i64: 2, 1, 64>}, {pipeline_mode = #tpu.pipeline_mode<synchronous>, transform_indices = @transform_13, window_bounds = array<i64: 2, 64, 32>}, {pipeline_mode = #tpu.pipeline_mode<synchronous>, transform_indices = @transform_14, window_bounds = array<i64: 2, 1, 32>}, {pipeline_mode = #tpu.pipeline_mode<synchronous>, transform_indices = @transform_15, window_bounds = array<i64: 2, 1, 32>}, {pipeline_mode = #tpu.pipeline_mode<synchronous>, transform_indices = @transform_16, window_bounds = array<i64: 2, 1, 32>}, {pipeline_mode = #tpu.pipeline_mode<synchronous>, transform_indices = @transform_17, window_bounds = array<i64: 32, 128>}, {pipeline_mode = #tpu.pipeline_mode<synchronous>, transform_indices = @transform_18, window_bounds = array<i64: 1, 128>}, {transform_indices = @transform_19, window_bounds = array<i64: 2, 128>}]} {
    %c0 = arith.constant 0 : index
    %c0_0 = arith.constant 0 : index
    %c0_1 = arith.constant 0 : index
    %0 = vector.load %arg1[%c0, %c0_0, %c0_1] : memref<2x8x8xf32, #tpu.memory_space<vmem>>, vector<2x8x8xf32>
    %1 = vector.shape_cast %0 : vector<2x8x8xf32> to vector<16x8xf32>
    %c0_2 = arith.constant 0 : index
    %c0_3 = arith.constant 0 : index
    %2 = vector.load %arg4[%c0_2, %c0_3] : memref<8x32xf32, #tpu.memory_space<vmem>>, vector<8x32xf32>
    %cst = arith.constant dense<0.000000e+00> : vector<16x32xf32>
    %3 = tpu.matmul %1, %2, %cst {dimension_numbers = #tpu.dot_dimension_numbers<[1], [0], [0], [1], [0, 0, 1, 1], [], []>} : vector<16x8xf32>, vector<8x32xf32>, vector<16x32xf32> -> vector<16x32xf32>
    %c0_4 = arith.constant 0 : index
    %c0_5 = arith.constant 0 : index
    %4 = vector.load %arg5[%c0_4, %c0_5] : memref<1x32xf32, #tpu.memory_space<vmem>>, vector<1x32xf32>
    %5 = vector.broadcast %4 : vector<1x32xf32> to vector<16x32xf32>
    %6 = arith.addf %3, %5 : vector<16x32xf32>
    %c0_6 = arith.constant 0 : index
    %c0_7 = arith.constant 0 : index
    %7 = vector.load %arg2[%c0_6, %c0_7] : memref<8x8xf32, #tpu.memory_space<vmem>>, vector<8x8xf32>
    %8 = vector.shape_cast %7 : vector<8x8xf32> to vector<1x8x8xf32>
    %c0_8 = arith.constant 0 : index
    %c0_9 = arith.constant 0 : index
    %9 = vector.load %arg3[%c0_8, %c0_9] : memref<2x8xf32, #tpu.memory_space<vmem>>, vector<2x8xf32>
    %10 = vector.shape_cast %9 : vector<2x8xf32> to vector<2x1x8xf32>
    %11 = vector.broadcast %8 : vector<1x8x8xf32> to vector<2x8x8xf32>
    %12 = vector.broadcast %10 : vector<2x1x8xf32> to vector<2x8x8xf32>
    %13 = arith.addf %11, %12 : vector<2x8x8xf32>
    %c0_10 = arith.constant 0 : index
    %c0_11 = arith.constant 0 : index
    %c0_12 = arith.constant 0 : index
    %14 = vector.load %arg6[%c0_10, %c0_11, %c0_12] : memref<2x32x96xf32, #tpu.memory_space<vmem>>, vector<1x32x96xf32>
    %15 = vector.shape_cast %14 : vector<1x32x96xf32> to vector<32x96xf32>
    %cst_13 = arith.constant dense<0.000000e+00> : vector<16x96xf32>
    %16 = tpu.matmul %6, %15, %cst_13 {dimension_numbers = #tpu.dot_dimension_numbers<[1], [0], [0], [1], [0, 0, 1, 1], [], []>} : vector<16x32xf32>, vector<32x96xf32>, vector<16x96xf32> -> vector<16x96xf32>
    %c0_14 = arith.constant 0 : index
    %c0_15 = arith.constant 0 : index
    %c0_16 = arith.constant 0 : index
    %17 = vector.load %arg7[%c0_14, %c0_15, %c0_16] : memref<2x1x96xf32, #tpu.memory_space<vmem>>, vector<1x1x96xf32>
    %18 = vector.shape_cast %17 : vector<1x1x96xf32> to vector<1x96xf32>
    %19 = vector.broadcast %18 : vector<1x96xf32> to vector<16x96xf32>
    %20 = arith.addf %16, %19 : vector<16x96xf32>
    %21 = vector.extract_strided_slice %20 {offsets = [0, 0], sizes = [16, 32], strides = [1, 1]} : vector<16x96xf32> to vector<16x32xf32>
    %22 = vector.shape_cast %21 : vector<16x32xf32> to vector<2x8x32xf32>
    %23 = vector.extract_strided_slice %20 {offsets = [0, 32], sizes = [16, 32], strides = [1, 1]} : vector<16x96xf32> to vector<16x32xf32>
    %24 = vector.shape_cast %23 : vector<16x32xf32> to vector<2x8x32xf32>
    %25 = vector.extract_strided_slice %20 {offsets = [0, 64], sizes = [16, 32], strides = [1, 1]} : vector<16x96xf32> to vector<16x32xf32>
    %26 = vector.shape_cast %25 : vector<16x32xf32> to vector<2x8x32xf32>
    %27 = vector.extract_strided_slice %22 {offsets = [0, 0, 0], sizes = [2, 8, 8], strides = [1, 1, 1]} : vector<2x8x32xf32> to vector<2x8x8xf32>
    %28 = vector.extract_strided_slice %24 {offsets = [0, 0, 0], sizes = [2, 8, 8], strides = [1, 1, 1]} : vector<2x8x32xf32> to vector<2x8x8xf32>
    "tpu.trace_start"() <{level = 10 : i32, message = "bqd,bkd->bqk"}> : () -> ()
    %cst_17 = arith.constant dense<0.000000e+00> : vector<2x8x8xf32>
    %29 = tpu.matmul %27, %28, %cst_17 {dimension_numbers = #tpu.dot_dimension_numbers<[2], [2], [1], [1], [0, 0, 0, 1, 1, 1], [0], [0]>} : vector<2x8x8xf32>, vector<2x8x8xf32>, vector<2x8x8xf32> -> vector<2x8x8xf32>
    "tpu.trace_stop"() : () -> ()
    %30 = arith.addf %29, %13 : vector<2x8x8xf32>
    %cst_18 = arith.constant dense<0xFF800000> : vector<2x8xf32>
    %31 = vector.multi_reduction <maximumf>, %30, %cst_18 [2] : vector<2x8x8xf32> to vector<2x8xf32>
    %32 = vector.shape_cast %31 : vector<2x8xf32> to vector<2x8x1xf32>
    %33 = vector.broadcast %32 : vector<2x8x1xf32> to vector<2x8x8xf32>
    %34 = arith.subf %30, %33 : vector<2x8x8xf32>
    %35 = math.exp %34 : vector<2x8x8xf32>
    %cst_19 = arith.constant dense<0.000000e+00> : vector<2x8xf32>
    %36 = vector.multi_reduction <add>, %35, %cst_19 [2] : vector<2x8x8xf32> to vector<2x8xf32>
    %37 = vector.shape_cast %36 : vector<2x8xf32> to vector<2x8x1xf32>
    %38 = tpu.reciprocal %37 {approx = true} : vector<2x8x1xf32> -> vector<2x8x1xf32>
    %39 = vector.broadcast %38 : vector<2x8x1xf32> to vector<2x8x8xf32>
    %40 = arith.mulf %35, %39 : vector<2x8x8xf32>
    %41 = vector.extract_strided_slice %26 {offsets = [0, 0, 0], sizes = [2, 8, 8], strides = [1, 1, 1]} : vector<2x8x32xf32> to vector<2x8x8xf32>
    "tpu.trace_start"() <{level = 10 : i32, message = "bqk,bkd->bqd"}> : () -> ()
    %cst_20 = arith.constant dense<0.000000e+00> : vector<2x8x8xf32>
    %42 = tpu.matmul %40, %41, %cst_20 {dimension_numbers = #tpu.dot_dimension_numbers<[2], [1], [1], [2], [0, 0, 0, 1, 1, 2], [0], [0]>} : vector<2x8x8xf32>, vector<2x8x8xf32>, vector<2x8x8xf32> -> vector<2x8x8xf32>
    "tpu.trace_stop"() : () -> ()
    %43 = vector.extract_strided_slice %22 {offsets = [0, 0, 8], sizes = [2, 8, 8], strides = [1, 1, 1]} : vector<2x8x32xf32> to vector<2x8x8xf32>
    %44 = vector.extract_strided_slice %24 {offsets = [0, 0, 8], sizes = [2, 8, 8], strides = [1, 1, 1]} : vector<2x8x32xf32> to vector<2x8x8xf32>
    "tpu.trace_start"() <{level = 10 : i32, message = "bqd,bkd->bqk"}> : () -> ()
    %cst_21 = arith.constant dense<0.000000e+00> : vector<2x8x8xf32>
    %45 = tpu.matmul %43, %44, %cst_21 {dimension_numbers = #tpu.dot_dimension_numbers<[2], [2], [1], [1], [0, 0, 0, 1, 1, 1], [0], [0]>} : vector<2x8x8xf32>, vector<2x8x8xf32>, vector<2x8x8xf32> -> vector<2x8x8xf32>
    "tpu.trace_stop"() : () -> ()
    %46 = arith.addf %45, %13 : vector<2x8x8xf32>
    %cst_22 = arith.constant dense<0xFF800000> : vector<2x8xf32>
    %47 = vector.multi_reduction <maximumf>, %46, %cst_22 [2] : vector<2x8x8xf32> to vector<2x8xf32>
    %48 = vector.shape_cast %47 : vector<2x8xf32> to vector<2x8x1xf32>
    %49 = vector.broadcast %48 : vector<2x8x1xf32> to vector<2x8x8xf32>
    %50 = arith.subf %46, %49 : vector<2x8x8xf32>
    %51 = math.exp %50 : vector<2x8x8xf32>
    %cst_23 = arith.constant dense<0.000000e+00> : vector<2x8xf32>
    %52 = vector.multi_reduction <add>, %51, %cst_23 [2] : vector<2x8x8xf32> to vector<2x8xf32>
    %53 = vector.shape_cast %52 : vector<2x8xf32> to vector<2x8x1xf32>
    %54 = tpu.reciprocal %53 {approx = true} : vector<2x8x1xf32> -> vector<2x8x1xf32>
    %55 = vector.broadcast %54 : vector<2x8x1xf32> to vector<2x8x8xf32>
    %56 = arith.mulf %51, %55 : vector<2x8x8xf32>
    %57 = vector.extract_strided_slice %26 {offsets = [0, 0, 8], sizes = [2, 8, 8], strides = [1, 1, 1]} : vector<2x8x32xf32> to vector<2x8x8xf32>
    "tpu.trace_start"() <{level = 10 : i32, message = "bqk,bkd->bqd"}> : () -> ()
    %cst_24 = arith.constant dense<0.000000e+00> : vector<2x8x8xf32>
    %58 = tpu.matmul %56, %57, %cst_24 {dimension_numbers = #tpu.dot_dimension_numbers<[2], [1], [1], [2], [0, 0, 0, 1, 1, 2], [0], [0]>} : vector<2x8x8xf32>, vector<2x8x8xf32>, vector<2x8x8xf32> -> vector<2x8x8xf32>
    "tpu.trace_stop"() : () -> ()
    %59 = vector.extract_strided_slice %22 {offsets = [0, 0, 16], sizes = [2, 8, 8], strides = [1, 1, 1]} : vector<2x8x32xf32> to vector<2x8x8xf32>
    %60 = vector.extract_strided_slice %24 {offsets = [0, 0, 16], sizes = [2, 8, 8], strides = [1, 1, 1]} : vector<2x8x32xf32> to vector<2x8x8xf32>
    "tpu.trace_start"() <{level = 10 : i32, message = "bqd,bkd->bqk"}> : () -> ()
    %cst_25 = arith.constant dense<0.000000e+00> : vector<2x8x8xf32>
    %61 = tpu.matmul %59, %60, %cst_25 {dimension_numbers = #tpu.dot_dimension_numbers<[2], [2], [1], [1], [0, 0, 0, 1, 1, 1], [0], [0]>} : vector<2x8x8xf32>, vector<2x8x8xf32>, vector<2x8x8xf32> -> vector<2x8x8xf32>
    "tpu.trace_stop"() : () -> ()
    %62 = arith.addf %61, %13 : vector<2x8x8xf32>
    %cst_26 = arith.constant dense<0xFF800000> : vector<2x8xf32>
    %63 = vector.multi_reduction <maximumf>, %62, %cst_26 [2] : vector<2x8x8xf32> to vector<2x8xf32>
    %64 = vector.shape_cast %63 : vector<2x8xf32> to vector<2x8x1xf32>
    %65 = vector.broadcast %64 : vector<2x8x1xf32> to vector<2x8x8xf32>
    %66 = arith.subf %62, %65 : vector<2x8x8xf32>
    %67 = math.exp %66 : vector<2x8x8xf32>
    %cst_27 = arith.constant dense<0.000000e+00> : vector<2x8xf32>
    %68 = vector.multi_reduction <add>, %67, %cst_27 [2] : vector<2x8x8xf32> to vector<2x8xf32>
    %69 = vector.shape_cast %68 : vector<2x8xf32> to vector<2x8x1xf32>
    %70 = tpu.reciprocal %69 {approx = true} : vector<2x8x1xf32> -> vector<2x8x1xf32>
    %71 = vector.broadcast %70 : vector<2x8x1xf32> to vector<2x8x8xf32>
    %72 = arith.mulf %67, %71 : vector<2x8x8xf32>
    %73 = vector.extract_strided_slice %26 {offsets = [0, 0, 16], sizes = [2, 8, 8], strides = [1, 1, 1]} : vector<2x8x32xf32> to vector<2x8x8xf32>
    "tpu.trace_start"() <{level = 10 : i32, message = "bqk,bkd->bqd"}> : () -> ()
    %cst_28 = arith.constant dense<0.000000e+00> : vector<2x8x8xf32>
    %74 = tpu.matmul %72, %73, %cst_28 {dimension_numbers = #tpu.dot_dimension_numbers<[2], [1], [1], [2], [0, 0, 0, 1, 1, 2], [0], [0]>} : vector<2x8x8xf32>, vector<2x8x8xf32>, vector<2x8x8xf32> -> vector<2x8x8xf32>
    "tpu.trace_stop"() : () -> ()
    %75 = vector.extract_strided_slice %22 {offsets = [0, 0, 24], sizes = [2, 8, 8], strides = [1, 1, 1]} : vector<2x8x32xf32> to vector<2x8x8xf32>
    %76 = vector.extract_strided_slice %24 {offsets = [0, 0, 24], sizes = [2, 8, 8], strides = [1, 1, 1]} : vector<2x8x32xf32> to vector<2x8x8xf32>
    "tpu.trace_start"() <{level = 10 : i32, message = "bqd,bkd->bqk"}> : () -> ()
    %cst_29 = arith.constant dense<0.000000e+00> : vector<2x8x8xf32>
    %77 = tpu.matmul %75, %76, %cst_29 {dimension_numbers = #tpu.dot_dimension_numbers<[2], [2], [1], [1], [0, 0, 0, 1, 1, 1], [0], [0]>} : vector<2x8x8xf32>, vector<2x8x8xf32>, vector<2x8x8xf32> -> vector<2x8x8xf32>
    "tpu.trace_stop"() : () -> ()
    %78 = arith.addf %77, %13 : vector<2x8x8xf32>
    %cst_30 = arith.constant dense<0xFF800000> : vector<2x8xf32>
    %79 = vector.multi_reduction <maximumf>, %78, %cst_30 [2] : vector<2x8x8xf32> to vector<2x8xf32>
    %80 = vector.shape_cast %79 : vector<2x8xf32> to vector<2x8x1xf32>
    %81 = vector.broadcast %80 : vector<2x8x1xf32> to vector<2x8x8xf32>
    %82 = arith.subf %78, %81 : vector<2x8x8xf32>
    %83 = math.exp %82 : vector<2x8x8xf32>
    %cst_31 = arith.constant dense<0.000000e+00> : vector<2x8xf32>
    %84 = vector.multi_reduction <add>, %83, %cst_31 [2] : vector<2x8x8xf32> to vector<2x8xf32>
    %85 = vector.shape_cast %84 : vector<2x8xf32> to vector<2x8x1xf32>
    %86 = tpu.reciprocal %85 {approx = true} : vector<2x8x1xf32> -> vector<2x8x1xf32>
    %87 = vector.broadcast %86 : vector<2x8x1xf32> to vector<2x8x8xf32>
    %88 = arith.mulf %83, %87 : vector<2x8x8xf32>
    %89 = vector.extract_strided_slice %26 {offsets = [0, 0, 24], sizes = [2, 8, 8], strides = [1, 1, 1]} : vector<2x8x32xf32> to vector<2x8x8xf32>
    "tpu.trace_start"() <{level = 10 : i32, message = "bqk,bkd->bqd"}> : () -> ()
    %cst_32 = arith.constant dense<0.000000e+00> : vector<2x8x8xf32>
    %90 = tpu.matmul %88, %89, %cst_32 {dimension_numbers = #tpu.dot_dimension_numbers<[2], [1], [1], [2], [0, 0, 0, 1, 1, 2], [0], [0]>} : vector<2x8x8xf32>, vector<2x8x8xf32>, vector<2x8x8xf32> -> vector<2x8x8xf32>
    "tpu.trace_stop"() : () -> ()
    %91 = tpu.concatenate %42, %58, %74, %90 in 2 : vector<2x8x8xf32>, vector<2x8x8xf32>, vector<2x8x8xf32>, vector<2x8x8xf32> -> vector<2x8x32xf32>
    %92 = vector.shape_cast %91 : vector<2x8x32xf32> to vector<16x32xf32>
    %c0_33 = arith.constant 0 : index
    %c0_34 = arith.constant 0 : index
    %c0_35 = arith.constant 0 : index
    %93 = vector.load %arg8[%c0_33, %c0_34, %c0_35] : memref<2x32x32xf32, #tpu.memory_space<vmem>>, vector<1x32x32xf32>
    %94 = vector.shape_cast %93 : vector<1x32x32xf32> to vector<32x32xf32>
    %cst_36 = arith.constant dense<0.000000e+00> : vector<16x32xf32>
    %95 = tpu.matmul %92, %94, %cst_36 {dimension_numbers = #tpu.dot_dimension_numbers<[1], [0], [0], [1], [0, 0, 1, 1], [], []>} : vector<16x32xf32>, vector<32x32xf32>, vector<16x32xf32> -> vector<16x32xf32>
    %c0_37 = arith.constant 0 : index
    %c0_38 = arith.constant 0 : index
    %c0_39 = arith.constant 0 : index
    %96 = vector.load %arg9[%c0_37, %c0_38, %c0_39] : memref<2x1x32xf32, #tpu.memory_space<vmem>>, vector<1x1x32xf32>
    %97 = vector.shape_cast %96 : vector<1x1x32xf32> to vector<1x32xf32>
    %98 = vector.broadcast %97 : vector<1x32xf32> to vector<16x32xf32>
    %99 = arith.addf %95, %98 : vector<16x32xf32>
    %100 = arith.addf %6, %99 : vector<16x32xf32>
    %c0_40 = arith.constant 0 : index
    %c0_41 = arith.constant 0 : index
    %c0_42 = arith.constant 0 : index
    %101 = vector.load %arg10[%c0_40, %c0_41, %c0_42] : memref<2x1x32xf32, #tpu.memory_space<vmem>>, vector<1x1x32xf32>
    %102 = vector.shape_cast %101 : vector<1x1x32xf32> to vector<1x32xf32>
    %c0_43 = arith.constant 0 : index
    %c0_44 = arith.constant 0 : index
    %c0_45 = arith.constant 0 : index
    %103 = vector.load %arg11[%c0_43, %c0_44, %c0_45] : memref<2x1x32xf32, #tpu.memory_space<vmem>>, vector<1x1x32xf32>
    %104 = vector.shape_cast %103 : vector<1x1x32xf32> to vector<1x32xf32>
    %cst_46 = arith.constant dense<0.000000e+00> : vector<16xf32>
    %105 = vector.multi_reduction <add>, %100, %cst_46 [1] : vector<16x32xf32> to vector<16xf32>
    %106 = vector.shape_cast %105 : vector<16xf32> to vector<16x1xf32>
    %cst_47 = arith.constant 3.200000e+01 : f32
    %107 = vector.broadcast %cst_47 : f32 to vector<16x1xf32>
    %108 = arith.divf %106, %107 : vector<16x1xf32>
    %109 = vector.broadcast %108 : vector<16x1xf32> to vector<16x32xf32>
    %110 = arith.subf %100, %109 : vector<16x32xf32>
    %111 = vector.broadcast %108 : vector<16x1xf32> to vector<16x32xf32>
    %112 = arith.subf %100, %111 : vector<16x32xf32>
    %113 = arith.mulf %110, %112 : vector<16x32xf32>
    %cst_48 = arith.constant dense<0.000000e+00> : vector<16xf32>
    %114 = vector.multi_reduction <add>, %113, %cst_48 [1] : vector<16x32xf32> to vector<16xf32>
    %115 = vector.shape_cast %114 : vector<16xf32> to vector<16x1xf32>
    %cst_49 = arith.constant 3.200000e+01 : f32
    %116 = vector.broadcast %cst_49 : f32 to vector<16x1xf32>
    %117 = arith.divf %115, %116 : vector<16x1xf32>
    %118 = vector.broadcast %108 : vector<16x1xf32> to vector<16x32xf32>
    %119 = arith.subf %100, %118 : vector<16x32xf32>
    %cst_50 = arith.constant 9.99999974E-6 : f32
    %120 = vector.broadcast %cst_50 : f32 to vector<16x1xf32>
    %121 = arith.addf %117, %120 : vector<16x1xf32>
    %122 = math.rsqrt %121 : vector<16x1xf32>
    %123 = vector.broadcast %122 : vector<16x1xf32> to vector<16x32xf32>
    %124 = arith.mulf %119, %123 : vector<16x32xf32>
    %125 = vector.broadcast %102 : vector<1x32xf32> to vector<16x32xf32>
    %126 = arith.mulf %124, %125 : vector<16x32xf32>
    %127 = vector.broadcast %104 : vector<1x32xf32> to vector<16x32xf32>
    %128 = arith.addf %126, %127 : vector<16x32xf32>
    %c0_51 = arith.constant 0 : index
    %c0_52 = arith.constant 0 : index
    %c0_53 = arith.constant 0 : index
    %129 = vector.load %arg12[%c0_51, %c0_52, %c0_53] : memref<2x32x64xf32, #tpu.memory_space<vmem>>, vector<1x32x64xf32>
    %130 = vector.shape_cast %129 : vector<1x32x64xf32> to vector<32x64xf32>
    %cst_54 = arith.constant dense<0.000000e+00> : vector<16x64xf32>
    %131 = tpu.matmul %128, %130, %cst_54 {dimension_numbers = #tpu.dot_dimension_numbers<[1], [0], [0], [1], [0, 0, 1, 1], [], []>} : vector<16x32xf32>, vector<32x64xf32>, vector<16x64xf32> -> vector<16x64xf32>
    %c0_55 = arith.constant 0 : index
    %c0_56 = arith.constant 0 : index
    %c0_57 = arith.constant 0 : index
    %132 = vector.load %arg13[%c0_55, %c0_56, %c0_57] : memref<2x1x64xf32, #tpu.memory_space<vmem>>, vector<1x1x64xf32>
    %133 = vector.shape_cast %132 : vector<1x1x64xf32> to vector<1x64xf32>
    %134 = vector.broadcast %133 : vector<1x64xf32> to vector<16x64xf32>
    %135 = arith.addf %131, %134 : vector<16x64xf32>
    %cst_58 = arith.constant 0.000000e+00 : f32
    %136 = vector.broadcast %cst_58 : f32 to vector<16x64xf32>
    %137 = arith.maximumf %135, %136 : vector<16x64xf32>
    %c0_59 = arith.constant 0 : index
    %c0_60 = arith.constant 0 : index
    %c0_61 = arith.constant 0 : index
    %138 = vector.load %arg14[%c0_59, %c0_60, %c0_61] : memref<2x64x32xf32, #tpu.memory_space<vmem>>, vector<1x64x32xf32>
    %139 = vector.shape_cast %138 : vector<1x64x32xf32> to vector<64x32xf32>
    %cst_62 = arith.constant dense<0.000000e+00> : vector<16x32xf32>
    %140 = tpu.matmul %137, %139, %cst_62 {dimension_numbers = #tpu.dot_dimension_numbers<[1], [0], [0], [1], [0, 0, 1, 1], [], []>} : vector<16x64xf32>, vector<64x32xf32>, vector<16x32xf32> -> vector<16x32xf32>
    %c0_63 = arith.constant 0 : index
    %c0_64 = arith.constant 0 : index
    %c0_65 = arith.constant 0 : index
    %141 = vector.load %arg15[%c0_63, %c0_64, %c0_65] : memref<2x1x32xf32, #tpu.memory_space<vmem>>, vector<1x1x32xf32>
    %142 = vector.shape_cast %141 : vector<1x1x32xf32> to vector<1x32xf32>
    %143 = vector.broadcast %142 : vector<1x32xf32> to vector<16x32xf32>
    %144 = arith.addf %140, %143 : vector<16x32xf32>
    %145 = arith.addf %128, %144 : vector<16x32xf32>
    %c0_66 = arith.constant 0 : index
    %c0_67 = arith.constant 0 : index
    %c0_68 = arith.constant 0 : index
    %146 = vector.load %arg16[%c0_66, %c0_67, %c0_68] : memref<2x1x32xf32, #tpu.memory_space<vmem>>, vector<1x1x32xf32>
    %147 = vector.shape_cast %146 : vector<1x1x32xf32> to vector<1x32xf32>
    %c0_69 = arith.constant 0 : index
    %c0_70 = arith.constant 0 : index
    %c0_71 = arith.constant 0 : index
    %148 = vector.load %arg17[%c0_69, %c0_70, %c0_71] : memref<2x1x32xf32, #tpu.memory_space<vmem>>, vector<1x1x32xf32>
    %149 = vector.shape_cast %148 : vector<1x1x32xf32> to vector<1x32xf32>
    %cst_72 = arith.constant dense<0.000000e+00> : vector<16xf32>
    %150 = vector.multi_reduction <add>, %145, %cst_72 [1] : vector<16x32xf32> to vector<16xf32>
    %151 = vector.shape_cast %150 : vector<16xf32> to vector<16x1xf32>
    %cst_73 = arith.constant 3.200000e+01 : f32
    %152 = vector.broadcast %cst_73 : f32 to vector<16x1xf32>
    %153 = arith.divf %151, %152 : vector<16x1xf32>
    %154 = vector.broadcast %153 : vector<16x1xf32> to vector<16x32xf32>
    %155 = arith.subf %145, %154 : vector<16x32xf32>
    %156 = vector.broadcast %153 : vector<16x1xf32> to vector<16x32xf32>
    %157 = arith.subf %145, %156 : vector<16x32xf32>
    %158 = arith.mulf %155, %157 : vector<16x32xf32>
    %cst_74 = arith.constant dense<0.000000e+00> : vector<16xf32>
    %159 = vector.multi_reduction <add>, %158, %cst_74 [1] : vector<16x32xf32> to vector<16xf32>
    %160 = vector.shape_cast %159 : vector<16xf32> to vector<16x1xf32>
    %cst_75 = arith.constant 3.200000e+01 : f32
    %161 = vector.broadcast %cst_75 : f32 to vector<16x1xf32>
    %162 = arith.divf %160, %161 : vector<16x1xf32>
    %163 = vector.broadcast %153 : vector<16x1xf32> to vector<16x32xf32>
    %164 = arith.subf %145, %163 : vector<16x32xf32>
    %cst_76 = arith.constant 9.99999974E-6 : f32
    %165 = vector.broadcast %cst_76 : f32 to vector<16x1xf32>
    %166 = arith.addf %162, %165 : vector<16x1xf32>
    %167 = math.rsqrt %166 : vector<16x1xf32>
    %168 = vector.broadcast %167 : vector<16x1xf32> to vector<16x32xf32>
    %169 = arith.mulf %164, %168 : vector<16x32xf32>
    %170 = vector.broadcast %147 : vector<1x32xf32> to vector<16x32xf32>
    %171 = arith.mulf %169, %170 : vector<16x32xf32>
    %172 = vector.broadcast %149 : vector<1x32xf32> to vector<16x32xf32>
    %173 = arith.addf %171, %172 : vector<16x32xf32>
    %c1 = arith.constant 1 : index
    %c0_77 = arith.constant 0 : index
    %c0_78 = arith.constant 0 : index
    %174 = vector.load %arg6[%c1, %c0_77, %c0_78] : memref<2x32x96xf32, #tpu.memory_space<vmem>>, vector<1x32x96xf32>
    %175 = vector.shape_cast %174 : vector<1x32x96xf32> to vector<32x96xf32>
    %cst_79 = arith.constant dense<0.000000e+00> : vector<16x96xf32>
    %176 = tpu.matmul %173, %175, %cst_79 {dimension_numbers = #tpu.dot_dimension_numbers<[1], [0], [0], [1], [0, 0, 1, 1], [], []>} : vector<16x32xf32>, vector<32x96xf32>, vector<16x96xf32> -> vector<16x96xf32>
    %c1_80 = arith.constant 1 : index
    %c0_81 = arith.constant 0 : index
    %c0_82 = arith.constant 0 : index
    %177 = vector.load %arg7[%c1_80, %c0_81, %c0_82] : memref<2x1x96xf32, #tpu.memory_space<vmem>>, vector<1x1x96xf32>
    %178 = vector.shape_cast %177 : vector<1x1x96xf32> to vector<1x96xf32>
    %179 = vector.broadcast %178 : vector<1x96xf32> to vector<16x96xf32>
    %180 = arith.addf %176, %179 : vector<16x96xf32>
    %181 = vector.extract_strided_slice %180 {offsets = [0, 0], sizes = [16, 32], strides = [1, 1]} : vector<16x96xf32> to vector<16x32xf32>
    %182 = vector.shape_cast %181 : vector<16x32xf32> to vector<2x8x32xf32>
    %183 = vector.extract_strided_slice %180 {offsets = [0, 32], sizes = [16, 32], strides = [1, 1]} : vector<16x96xf32> to vector<16x32xf32>
    %184 = vector.shape_cast %183 : vector<16x32xf32> to vector<2x8x32xf32>
    %185 = vector.extract_strided_slice %180 {offsets = [0, 64], sizes = [16, 32], strides = [1, 1]} : vector<16x96xf32> to vector<16x32xf32>
    %186 = vector.shape_cast %185 : vector<16x32xf32> to vector<2x8x32xf32>
    %187 = vector.extract_strided_slice %182 {offsets = [0, 0, 0], sizes = [2, 8, 8], strides = [1, 1, 1]} : vector<2x8x32xf32> to vector<2x8x8xf32>
    %188 = vector.extract_strided_slice %184 {offsets = [0, 0, 0], sizes = [2, 8, 8], strides = [1, 1, 1]} : vector<2x8x32xf32> to vector<2x8x8xf32>
    "tpu.trace_start"() <{level = 10 : i32, message = "bqd,bkd->bqk"}> : () -> ()
    %cst_83 = arith.constant dense<0.000000e+00> : vector<2x8x8xf32>
    %189 = tpu.matmul %187, %188, %cst_83 {dimension_numbers = #tpu.dot_dimension_numbers<[2], [2], [1], [1], [0, 0, 0, 1, 1, 1], [0], [0]>} : vector<2x8x8xf32>, vector<2x8x8xf32>, vector<2x8x8xf32> -> vector<2x8x8xf32>
    "tpu.trace_stop"() : () -> ()
    %190 = arith.addf %189, %13 : vector<2x8x8xf32>
    %cst_84 = arith.constant dense<0xFF800000> : vector<2x8xf32>
    %191 = vector.multi_reduction <maximumf>, %190, %cst_84 [2] : vector<2x8x8xf32> to vector<2x8xf32>
    %192 = vector.shape_cast %191 : vector<2x8xf32> to vector<2x8x1xf32>
    %193 = vector.broadcast %192 : vector<2x8x1xf32> to vector<2x8x8xf32>
    %194 = arith.subf %190, %193 : vector<2x8x8xf32>
    %195 = math.exp %194 : vector<2x8x8xf32>
    %cst_85 = arith.constant dense<0.000000e+00> : vector<2x8xf32>
    %196 = vector.multi_reduction <add>, %195, %cst_85 [2] : vector<2x8x8xf32> to vector<2x8xf32>
    %197 = vector.shape_cast %196 : vector<2x8xf32> to vector<2x8x1xf32>
    %198 = tpu.reciprocal %197 {approx = true} : vector<2x8x1xf32> -> vector<2x8x1xf32>
    %199 = vector.broadcast %198 : vector<2x8x1xf32> to vector<2x8x8xf32>
    %200 = arith.mulf %195, %199 : vector<2x8x8xf32>
    %201 = vector.extract_strided_slice %186 {offsets = [0, 0, 0], sizes = [2, 8, 8], strides = [1, 1, 1]} : vector<2x8x32xf32> to vector<2x8x8xf32>
    "tpu.trace_start"() <{level = 10 : i32, message = "bqk,bkd->bqd"}> : () -> ()
    %cst_86 = arith.constant dense<0.000000e+00> : vector<2x8x8xf32>
    %202 = tpu.matmul %200, %201, %cst_86 {dimension_numbers = #tpu.dot_dimension_numbers<[2], [1], [1], [2], [0, 0, 0, 1, 1, 2], [0], [0]>} : vector<2x8x8xf32>, vector<2x8x8xf32>, vector<2x8x8xf32> -> vector<2x8x8xf32>
    "tpu.trace_stop"() : () -> ()
    %203 = vector.extract_strided_slice %182 {offsets = [0, 0, 8], sizes = [2, 8, 8], strides = [1, 1, 1]} : vector<2x8x32xf32> to vector<2x8x8xf32>
    %204 = vector.extract_strided_slice %184 {offsets = [0, 0, 8], sizes = [2, 8, 8], strides = [1, 1, 1]} : vector<2x8x32xf32> to vector<2x8x8xf32>
    "tpu.trace_start"() <{level = 10 : i32, message = "bqd,bkd->bqk"}> : () -> ()
    %cst_87 = arith.constant dense<0.000000e+00> : vector<2x8x8xf32>
    %205 = tpu.matmul %203, %204, %cst_87 {dimension_numbers = #tpu.dot_dimension_numbers<[2], [2], [1], [1], [0, 0, 0, 1, 1, 1], [0], [0]>} : vector<2x8x8xf32>, vector<2x8x8xf32>, vector<2x8x8xf32> -> vector<2x8x8xf32>
    "tpu.trace_stop"() : () -> ()
    %206 = arith.addf %205, %13 : vector<2x8x8xf32>
    %cst_88 = arith.constant dense<0xFF800000> : vector<2x8xf32>
    %207 = vector.multi_reduction <maximumf>, %206, %cst_88 [2] : vector<2x8x8xf32> to vector<2x8xf32>
    %208 = vector.shape_cast %207 : vector<2x8xf32> to vector<2x8x1xf32>
    %209 = vector.broadcast %208 : vector<2x8x1xf32> to vector<2x8x8xf32>
    %210 = arith.subf %206, %209 : vector<2x8x8xf32>
    %211 = math.exp %210 : vector<2x8x8xf32>
    %cst_89 = arith.constant dense<0.000000e+00> : vector<2x8xf32>
    %212 = vector.multi_reduction <add>, %211, %cst_89 [2] : vector<2x8x8xf32> to vector<2x8xf32>
    %213 = vector.shape_cast %212 : vector<2x8xf32> to vector<2x8x1xf32>
    %214 = tpu.reciprocal %213 {approx = true} : vector<2x8x1xf32> -> vector<2x8x1xf32>
    %215 = vector.broadcast %214 : vector<2x8x1xf32> to vector<2x8x8xf32>
    %216 = arith.mulf %211, %215 : vector<2x8x8xf32>
    %217 = vector.extract_strided_slice %186 {offsets = [0, 0, 8], sizes = [2, 8, 8], strides = [1, 1, 1]} : vector<2x8x32xf32> to vector<2x8x8xf32>
    "tpu.trace_start"() <{level = 10 : i32, message = "bqk,bkd->bqd"}> : () -> ()
    %cst_90 = arith.constant dense<0.000000e+00> : vector<2x8x8xf32>
    %218 = tpu.matmul %216, %217, %cst_90 {dimension_numbers = #tpu.dot_dimension_numbers<[2], [1], [1], [2], [0, 0, 0, 1, 1, 2], [0], [0]>} : vector<2x8x8xf32>, vector<2x8x8xf32>, vector<2x8x8xf32> -> vector<2x8x8xf32>
    "tpu.trace_stop"() : () -> ()
    %219 = vector.extract_strided_slice %182 {offsets = [0, 0, 16], sizes = [2, 8, 8], strides = [1, 1, 1]} : vector<2x8x32xf32> to vector<2x8x8xf32>
    %220 = vector.extract_strided_slice %184 {offsets = [0, 0, 16], sizes = [2, 8, 8], strides = [1, 1, 1]} : vector<2x8x32xf32> to vector<2x8x8xf32>
    "tpu.trace_start"() <{level = 10 : i32, message = "bqd,bkd->bqk"}> : () -> ()
    %cst_91 = arith.constant dense<0.000000e+00> : vector<2x8x8xf32>
    %221 = tpu.matmul %219, %220, %cst_91 {dimension_numbers = #tpu.dot_dimension_numbers<[2], [2], [1], [1], [0, 0, 0, 1, 1, 1], [0], [0]>} : vector<2x8x8xf32>, vector<2x8x8xf32>, vector<2x8x8xf32> -> vector<2x8x8xf32>
    "tpu.trace_stop"() : () -> ()
    %222 = arith.addf %221, %13 : vector<2x8x8xf32>
    %cst_92 = arith.constant dense<0xFF800000> : vector<2x8xf32>
    %223 = vector.multi_reduction <maximumf>, %222, %cst_92 [2] : vector<2x8x8xf32> to vector<2x8xf32>
    %224 = vector.shape_cast %223 : vector<2x8xf32> to vector<2x8x1xf32>
    %225 = vector.broadcast %224 : vector<2x8x1xf32> to vector<2x8x8xf32>
    %226 = arith.subf %222, %225 : vector<2x8x8xf32>
    %227 = math.exp %226 : vector<2x8x8xf32>
    %cst_93 = arith.constant dense<0.000000e+00> : vector<2x8xf32>
    %228 = vector.multi_reduction <add>, %227, %cst_93 [2] : vector<2x8x8xf32> to vector<2x8xf32>
    %229 = vector.shape_cast %228 : vector<2x8xf32> to vector<2x8x1xf32>
    %230 = tpu.reciprocal %229 {approx = true} : vector<2x8x1xf32> -> vector<2x8x1xf32>
    %231 = vector.broadcast %230 : vector<2x8x1xf32> to vector<2x8x8xf32>
    %232 = arith.mulf %227, %231 : vector<2x8x8xf32>
    %233 = vector.extract_strided_slice %186 {offsets = [0, 0, 16], sizes = [2, 8, 8], strides = [1, 1, 1]} : vector<2x8x32xf32> to vector<2x8x8xf32>
    "tpu.trace_start"() <{level = 10 : i32, message = "bqk,bkd->bqd"}> : () -> ()
    %cst_94 = arith.constant dense<0.000000e+00> : vector<2x8x8xf32>
    %234 = tpu.matmul %232, %233, %cst_94 {dimension_numbers = #tpu.dot_dimension_numbers<[2], [1], [1], [2], [0, 0, 0, 1, 1, 2], [0], [0]>} : vector<2x8x8xf32>, vector<2x8x8xf32>, vector<2x8x8xf32> -> vector<2x8x8xf32>
    "tpu.trace_stop"() : () -> ()
    %235 = vector.extract_strided_slice %182 {offsets = [0, 0, 24], sizes = [2, 8, 8], strides = [1, 1, 1]} : vector<2x8x32xf32> to vector<2x8x8xf32>
    %236 = vector.extract_strided_slice %184 {offsets = [0, 0, 24], sizes = [2, 8, 8], strides = [1, 1, 1]} : vector<2x8x32xf32> to vector<2x8x8xf32>
    "tpu.trace_start"() <{level = 10 : i32, message = "bqd,bkd->bqk"}> : () -> ()
    %cst_95 = arith.constant dense<0.000000e+00> : vector<2x8x8xf32>
    %237 = tpu.matmul %235, %236, %cst_95 {dimension_numbers = #tpu.dot_dimension_numbers<[2], [2], [1], [1], [0, 0, 0, 1, 1, 1], [0], [0]>} : vector<2x8x8xf32>, vector<2x8x8xf32>, vector<2x8x8xf32> -> vector<2x8x8xf32>
    "tpu.trace_stop"() : () -> ()
    %238 = arith.addf %237, %13 : vector<2x8x8xf32>
    %cst_96 = arith.constant dense<0xFF800000> : vector<2x8xf32>
    %239 = vector.multi_reduction <maximumf>, %238, %cst_96 [2] : vector<2x8x8xf32> to vector<2x8xf32>
    %240 = vector.shape_cast %239 : vector<2x8xf32> to vector<2x8x1xf32>
    %241 = vector.broadcast %240 : vector<2x8x1xf32> to vector<2x8x8xf32>
    %242 = arith.subf %238, %241 : vector<2x8x8xf32>
    %243 = math.exp %242 : vector<2x8x8xf32>
    %cst_97 = arith.constant dense<0.000000e+00> : vector<2x8xf32>
    %244 = vector.multi_reduction <add>, %243, %cst_97 [2] : vector<2x8x8xf32> to vector<2x8xf32>
    %245 = vector.shape_cast %244 : vector<2x8xf32> to vector<2x8x1xf32>
    %246 = tpu.reciprocal %245 {approx = true} : vector<2x8x1xf32> -> vector<2x8x1xf32>
    %247 = vector.broadcast %246 : vector<2x8x1xf32> to vector<2x8x8xf32>
    %248 = arith.mulf %243, %247 : vector<2x8x8xf32>
    %249 = vector.extract_strided_slice %186 {offsets = [0, 0, 24], sizes = [2, 8, 8], strides = [1, 1, 1]} : vector<2x8x32xf32> to vector<2x8x8xf32>
    "tpu.trace_start"() <{level = 10 : i32, message = "bqk,bkd->bqd"}> : () -> ()
    %cst_98 = arith.constant dense<0.000000e+00> : vector<2x8x8xf32>
    %250 = tpu.matmul %248, %249, %cst_98 {dimension_numbers = #tpu.dot_dimension_numbers<[2], [1], [1], [2], [0, 0, 0, 1, 1, 2], [0], [0]>} : vector<2x8x8xf32>, vector<2x8x8xf32>, vector<2x8x8xf32> -> vector<2x8x8xf32>
    "tpu.trace_stop"() : () -> ()
    %251 = tpu.concatenate %202, %218, %234, %250 in 2 : vector<2x8x8xf32>, vector<2x8x8xf32>, vector<2x8x8xf32>, vector<2x8x8xf32> -> vector<2x8x32xf32>
    %252 = vector.shape_cast %251 : vector<2x8x32xf32> to vector<16x32xf32>
    %c1_99 = arith.constant 1 : index
    %c0_100 = arith.constant 0 : index
    %c0_101 = arith.constant 0 : index
    %253 = vector.load %arg8[%c1_99, %c0_100, %c0_101] : memref<2x32x32xf32, #tpu.memory_space<vmem>>, vector<1x32x32xf32>
    %254 = vector.shape_cast %253 : vector<1x32x32xf32> to vector<32x32xf32>
    %cst_102 = arith.constant dense<0.000000e+00> : vector<16x32xf32>
    %255 = tpu.matmul %252, %254, %cst_102 {dimension_numbers = #tpu.dot_dimension_numbers<[1], [0], [0], [1], [0, 0, 1, 1], [], []>} : vector<16x32xf32>, vector<32x32xf32>, vector<16x32xf32> -> vector<16x32xf32>
    %c1_103 = arith.constant 1 : index
    %c0_104 = arith.constant 0 : index
    %c0_105 = arith.constant 0 : index
    %256 = vector.load %arg9[%c1_103, %c0_104, %c0_105] : memref<2x1x32xf32, #tpu.memory_space<vmem>>, vector<1x1x32xf32>
    %257 = vector.shape_cast %256 : vector<1x1x32xf32> to vector<1x32xf32>
    %258 = vector.broadcast %257 : vector<1x32xf32> to vector<16x32xf32>
    %259 = arith.addf %255, %258 : vector<16x32xf32>
    %260 = arith.addf %173, %259 : vector<16x32xf32>
    %c1_106 = arith.constant 1 : index
    %c0_107 = arith.constant 0 : index
    %c0_108 = arith.constant 0 : index
    %261 = vector.load %arg10[%c1_106, %c0_107, %c0_108] : memref<2x1x32xf32, #tpu.memory_space<vmem>>, vector<1x1x32xf32>
    %262 = vector.shape_cast %261 : vector<1x1x32xf32> to vector<1x32xf32>
    %c1_109 = arith.constant 1 : index
    %c0_110 = arith.constant 0 : index
    %c0_111 = arith.constant 0 : index
    %263 = vector.load %arg11[%c1_109, %c0_110, %c0_111] : memref<2x1x32xf32, #tpu.memory_space<vmem>>, vector<1x1x32xf32>
    %264 = vector.shape_cast %263 : vector<1x1x32xf32> to vector<1x32xf32>
    %cst_112 = arith.constant dense<0.000000e+00> : vector<16xf32>
    %265 = vector.multi_reduction <add>, %260, %cst_112 [1] : vector<16x32xf32> to vector<16xf32>
    %266 = vector.shape_cast %265 : vector<16xf32> to vector<16x1xf32>
    %cst_113 = arith.constant 3.200000e+01 : f32
    %267 = vector.broadcast %cst_113 : f32 to vector<16x1xf32>
    %268 = arith.divf %266, %267 : vector<16x1xf32>
    %269 = vector.broadcast %268 : vector<16x1xf32> to vector<16x32xf32>
    %270 = arith.subf %260, %269 : vector<16x32xf32>
    %271 = vector.broadcast %268 : vector<16x1xf32> to vector<16x32xf32>
    %272 = arith.subf %260, %271 : vector<16x32xf32>
    %273 = arith.mulf %270, %272 : vector<16x32xf32>
    %cst_114 = arith.constant dense<0.000000e+00> : vector<16xf32>
    %274 = vector.multi_reduction <add>, %273, %cst_114 [1] : vector<16x32xf32> to vector<16xf32>
    %275 = vector.shape_cast %274 : vector<16xf32> to vector<16x1xf32>
    %cst_115 = arith.constant 3.200000e+01 : f32
    %276 = vector.broadcast %cst_115 : f32 to vector<16x1xf32>
    %277 = arith.divf %275, %276 : vector<16x1xf32>
    %278 = vector.broadcast %268 : vector<16x1xf32> to vector<16x32xf32>
    %279 = arith.subf %260, %278 : vector<16x32xf32>
    %cst_116 = arith.constant 9.99999974E-6 : f32
    %280 = vector.broadcast %cst_116 : f32 to vector<16x1xf32>
    %281 = arith.addf %277, %280 : vector<16x1xf32>
    %282 = math.rsqrt %281 : vector<16x1xf32>
    %283 = vector.broadcast %282 : vector<16x1xf32> to vector<16x32xf32>
    %284 = arith.mulf %279, %283 : vector<16x32xf32>
    %285 = vector.broadcast %262 : vector<1x32xf32> to vector<16x32xf32>
    %286 = arith.mulf %284, %285 : vector<16x32xf32>
    %287 = vector.broadcast %264 : vector<1x32xf32> to vector<16x32xf32>
    %288 = arith.addf %286, %287 : vector<16x32xf32>
    %c1_117 = arith.constant 1 : index
    %c0_118 = arith.constant 0 : index
    %c0_119 = arith.constant 0 : index
    %289 = vector.load %arg12[%c1_117, %c0_118, %c0_119] : memref<2x32x64xf32, #tpu.memory_space<vmem>>, vector<1x32x64xf32>
    %290 = vector.shape_cast %289 : vector<1x32x64xf32> to vector<32x64xf32>
    %cst_120 = arith.constant dense<0.000000e+00> : vector<16x64xf32>
    %291 = tpu.matmul %288, %290, %cst_120 {dimension_numbers = #tpu.dot_dimension_numbers<[1], [0], [0], [1], [0, 0, 1, 1], [], []>} : vector<16x32xf32>, vector<32x64xf32>, vector<16x64xf32> -> vector<16x64xf32>
    %c1_121 = arith.constant 1 : index
    %c0_122 = arith.constant 0 : index
    %c0_123 = arith.constant 0 : index
    %292 = vector.load %arg13[%c1_121, %c0_122, %c0_123] : memref<2x1x64xf32, #tpu.memory_space<vmem>>, vector<1x1x64xf32>
    %293 = vector.shape_cast %292 : vector<1x1x64xf32> to vector<1x64xf32>
    %294 = vector.broadcast %293 : vector<1x64xf32> to vector<16x64xf32>
    %295 = arith.addf %291, %294 : vector<16x64xf32>
    %cst_124 = arith.constant 0.000000e+00 : f32
    %296 = vector.broadcast %cst_124 : f32 to vector<16x64xf32>
    %297 = arith.maximumf %295, %296 : vector<16x64xf32>
    %c1_125 = arith.constant 1 : index
    %c0_126 = arith.constant 0 : index
    %c0_127 = arith.constant 0 : index
    %298 = vector.load %arg14[%c1_125, %c0_126, %c0_127] : memref<2x64x32xf32, #tpu.memory_space<vmem>>, vector<1x64x32xf32>
    %299 = vector.shape_cast %298 : vector<1x64x32xf32> to vector<64x32xf32>
    %cst_128 = arith.constant dense<0.000000e+00> : vector<16x32xf32>
    %300 = tpu.matmul %297, %299, %cst_128 {dimension_numbers = #tpu.dot_dimension_numbers<[1], [0], [0], [1], [0, 0, 1, 1], [], []>} : vector<16x64xf32>, vector<64x32xf32>, vector<16x32xf32> -> vector<16x32xf32>
    %c1_129 = arith.constant 1 : index
    %c0_130 = arith.constant 0 : index
    %c0_131 = arith.constant 0 : index
    %301 = vector.load %arg15[%c1_129, %c0_130, %c0_131] : memref<2x1x32xf32, #tpu.memory_space<vmem>>, vector<1x1x32xf32>
    %302 = vector.shape_cast %301 : vector<1x1x32xf32> to vector<1x32xf32>
    %303 = vector.broadcast %302 : vector<1x32xf32> to vector<16x32xf32>
    %304 = arith.addf %300, %303 : vector<16x32xf32>
    %305 = arith.addf %288, %304 : vector<16x32xf32>
    %c1_132 = arith.constant 1 : index
    %c0_133 = arith.constant 0 : index
    %c0_134 = arith.constant 0 : index
    %306 = vector.load %arg16[%c1_132, %c0_133, %c0_134] : memref<2x1x32xf32, #tpu.memory_space<vmem>>, vector<1x1x32xf32>
    %307 = vector.shape_cast %306 : vector<1x1x32xf32> to vector<1x32xf32>
    %c1_135 = arith.constant 1 : index
    %c0_136 = arith.constant 0 : index
    %c0_137 = arith.constant 0 : index
    %308 = vector.load %arg17[%c1_135, %c0_136, %c0_137] : memref<2x1x32xf32, #tpu.memory_space<vmem>>, vector<1x1x32xf32>
    %309 = vector.shape_cast %308 : vector<1x1x32xf32> to vector<1x32xf32>
    %cst_138 = arith.constant dense<0.000000e+00> : vector<16xf32>
    %310 = vector.multi_reduction <add>, %305, %cst_138 [1] : vector<16x32xf32> to vector<16xf32>
    %311 = vector.shape_cast %310 : vector<16xf32> to vector<16x1xf32>
    %cst_139 = arith.constant 3.200000e+01 : f32
    %312 = vector.broadcast %cst_139 : f32 to vector<16x1xf32>
    %313 = arith.divf %311, %312 : vector<16x1xf32>
    %314 = vector.broadcast %313 : vector<16x1xf32> to vector<16x32xf32>
    %315 = arith.subf %305, %314 : vector<16x32xf32>
    %316 = vector.broadcast %313 : vector<16x1xf32> to vector<16x32xf32>
    %317 = arith.subf %305, %316 : vector<16x32xf32>
    %318 = arith.mulf %315, %317 : vector<16x32xf32>
    %cst_140 = arith.constant dense<0.000000e+00> : vector<16xf32>
    %319 = vector.multi_reduction <add>, %318, %cst_140 [1] : vector<16x32xf32> to vector<16xf32>
    %320 = vector.shape_cast %319 : vector<16xf32> to vector<16x1xf32>
    %cst_141 = arith.constant 3.200000e+01 : f32
    %321 = vector.broadcast %cst_141 : f32 to vector<16x1xf32>
    %322 = arith.divf %320, %321 : vector<16x1xf32>
    %323 = vector.broadcast %313 : vector<16x1xf32> to vector<16x32xf32>
    %324 = arith.subf %305, %323 : vector<16x32xf32>
    %cst_142 = arith.constant 9.99999974E-6 : f32
    %325 = vector.broadcast %cst_142 : f32 to vector<16x1xf32>
    %326 = arith.addf %322, %325 : vector<16x1xf32>
    %327 = math.rsqrt %326 : vector<16x1xf32>
    %328 = vector.broadcast %327 : vector<16x1xf32> to vector<16x32xf32>
    %329 = arith.mulf %324, %328 : vector<16x32xf32>
    %330 = vector.broadcast %307 : vector<1x32xf32> to vector<16x32xf32>
    %331 = arith.mulf %329, %330 : vector<16x32xf32>
    %332 = vector.broadcast %309 : vector<1x32xf32> to vector<16x32xf32>
    %333 = arith.addf %331, %332 : vector<16x32xf32>
    %334 = vector.shape_cast %333 : vector<16x32xf32> to vector<2x8x32xf32>
    %cst_143 = arith.constant dense<0.000000e+00> : vector<2x32xf32>
    %335 = vector.multi_reduction <add>, %334, %cst_143 [1] : vector<2x8x32xf32> to vector<2x32xf32>
    %cst_144 = arith.constant 8.000000e+00 : f32
    %336 = vector.broadcast %cst_144 : f32 to vector<2x32xf32>
    %337 = arith.divf %335, %336 : vector<2x32xf32>
    %c0_145 = arith.constant 0 : index
    %c0_146 = arith.constant 0 : index
    %338 = vector.load %arg18[%c0_145, %c0_146] : memref<32x128xf32, #tpu.memory_space<vmem>>, vector<32x128xf32>
    %cst_147 = arith.constant dense<0.000000e+00> : vector<2x128xf32>
    %339 = tpu.matmul %337, %338, %cst_147 {dimension_numbers = #tpu.dot_dimension_numbers<[1], [0], [0], [1], [0, 0, 1, 1], [], []>} : vector<2x32xf32>, vector<32x128xf32>, vector<2x128xf32> -> vector<2x128xf32>
    %c0_148 = arith.constant 0 : index
    %c0_149 = arith.constant 0 : index
    %340 = vector.load %arg19[%c0_148, %c0_149] : memref<1x128xf32, #tpu.memory_space<vmem>>, vector<1x128xf32>
    %341 = vector.broadcast %340 : vector<1x128xf32> to vector<2x128xf32>
    %342 = arith.addf %339, %341 : vector<2x128xf32>
    %c0_150 = arith.constant 0 : index
    %c0_151 = arith.constant 0 : index
    %343 = vector.load %arg20[%c0_150, %c0_151] : memref<2x128xf32, #tpu.memory_space<vmem>>, vector<2x128xf32>
    tpu.vector_store %arg20[%c0_150, %c0_151], %342 {strides = array<i32>} : memref<2x128xf32, #tpu.memory_space<vmem>>, vector<2x128xf32>,
    return
  }
  func.func @transform_0(%arg0: i32) -> (i32, i32, i32) {
    %c0_i32 = arith.constant 0 : i32
    %c0_i32_0 = arith.constant 0 : i32
    %c0_i32_1 = arith.constant 0 : i32
    return %arg0, %c0_i32, %c0_i32_0 : i32, i32, i32
  }
  func.func @transform_1(%arg0: i32) -> (i32, i32) {
    %c0_i32 = arith.constant 0 : i32
    %c0_i32_0 = arith.constant 0 : i32
    %c0_i32_1 = arith.constant 0 : i32
    return %c0_i32, %c0_i32_0 : i32, i32
  }
  func.func @transform_2(%arg0: i32) -> (i32, i32) {
    %c0_i32 = arith.constant 0 : i32
    %c0_i32_0 = arith.constant 0 : i32
    return %arg0, %c0_i32 : i32, i32
  }
  func.func @transform_3(%arg0: i32) -> (i32, i32) {
    %c0_i32 = arith.constant 0 : i32
    %c0_i32_0 = arith.constant 0 : i32
    %c0_i32_1 = arith.constant 0 : i32
    return %c0_i32, %c0_i32_0 : i32, i32
  }
  func.func @transform_4(%arg0: i32) -> (i32, i32) {
    %c0_i32 = arith.constant 0 : i32
    %c0_i32_0 = arith.constant 0 : i32
    %c0_i32_1 = arith.constant 0 : i32
    return %c0_i32, %c0_i32_0 : i32, i32
  }
  func.func @transform_5(%arg0: i32) -> (i32, i32, i32) {
    %c0_i32 = arith.constant 0 : i32
    %c0_i32_0 = arith.constant 0 : i32
    %c0_i32_1 = arith.constant 0 : i32
    %c0_i32_2 = arith.constant 0 : i32
    return %c0_i32, %c0_i32_0, %c0_i32_1 : i32, i32, i32
  }
  func.func @transform_6(%arg0: i32) -> (i32, i32, i32) {
    %c0_i32 = arith.constant 0 : i32
    %c0_i32_0 = arith.constant 0 : i32
    %c0_i32_1 = arith.constant 0 : i32
    %c0_i32_2 = arith.constant 0 : i32
    return %c0_i32, %c0_i32_0, %c0_i32_1 : i32, i32, i32
  }
  func.func @transform_7(%arg0: i32) -> (i32, i32, i32) {
    %c0_i32 = arith.constant 0 : i32
    %c0_i32_0 = arith.constant 0 : i32
    %c0_i32_1 = arith.constant 0 : i32
    %c0_i32_2 = arith.constant 0 : i32
    return %c0_i32, %c0_i32_0, %c0_i32_1 : i32, i32, i32
  }
  func.func @transform_8(%arg0: i32) -> (i32, i32, i32) {
    %c0_i32 = arith.constant 0 : i32
    %c0_i32_0 = arith.constant 0 : i32
    %c0_i32_1 = arith.constant 0 : i32
    %c0_i32_2 = arith.constant 0 : i32
    return %c0_i32, %c0_i32_0, %c0_i32_1 : i32, i32, i32
  }
  func.func @transform_9(%arg0: i32) -> (i32, i32, i32) {
    %c0_i32 = arith.constant 0 : i32
    %c0_i32_0 = arith.constant 0 : i32
    %c0_i32_1 = arith.constant 0 : i32
    %c0_i32_2 = arith.constant 0 : i32
    return %c0_i32, %c0_i32_0, %c0_i32_1 : i32, i32, i32
  }
  func.func @transform_10(%arg0: i32) -> (i32, i32, i32) {
    %c0_i32 = arith.constant 0 : i32
    %c0_i32_0 = arith.constant 0 : i32
    %c0_i32_1 = arith.constant 0 : i32
    %c0_i32_2 = arith.constant 0 : i32
    return %c0_i32, %c0_i32_0, %c0_i32_1 : i32, i32, i32
  }
  func.func @transform_11(%arg0: i32) -> (i32, i32, i32) {
    %c0_i32 = arith.constant 0 : i32
    %c0_i32_0 = arith.constant 0 : i32
    %c0_i32_1 = arith.constant 0 : i32
    %c0_i32_2 = arith.constant 0 : i32
    return %c0_i32, %c0_i32_0, %c0_i32_1 : i32, i32, i32
  }
  func.func @transform_12(%arg0: i32) -> (i32, i32, i32) {
    %c0_i32 = arith.constant 0 : i32
    %c0_i32_0 = arith.constant 0 : i32
    %c0_i32_1 = arith.constant 0 : i32
    %c0_i32_2 = arith.constant 0 : i32
    return %c0_i32, %c0_i32_0, %c0_i32_1 : i32, i32, i32
  }
  func.func @transform_13(%arg0: i32) -> (i32, i32, i32) {
    %c0_i32 = arith.constant 0 : i32
    %c0_i32_0 = arith.constant 0 : i32
    %c0_i32_1 = arith.constant 0 : i32
    %c0_i32_2 = arith.constant 0 : i32
    return %c0_i32, %c0_i32_0, %c0_i32_1 : i32, i32, i32
  }
  func.func @transform_14(%arg0: i32) -> (i32, i32, i32) {
    %c0_i32 = arith.constant 0 : i32
    %c0_i32_0 = arith.constant 0 : i32
    %c0_i32_1 = arith.constant 0 : i32
    %c0_i32_2 = arith.constant 0 : i32
    return %c0_i32, %c0_i32_0, %c0_i32_1 : i32, i32, i32
  }
  func.func @transform_15(%arg0: i32) -> (i32, i32, i32) {
    %c0_i32 = arith.constant 0 : i32
    %c0_i32_0 = arith.constant 0 : i32
    %c0_i32_1 = arith.constant 0 : i32
    %c0_i32_2 = arith.constant 0 : i32
    return %c0_i32, %c0_i32_0, %c0_i32_1 : i32, i32, i32
  }
  func.func @transform_16(%arg0: i32) -> (i32, i32, i32) {
    %c0_i32 = arith.constant 0 : i32
    %c0_i32_0 = arith.constant 0 : i32
    %c0_i32_1 = arith.constant 0 : i32
    %c0_i32_2 = arith.constant 0 : i32
    return %c0_i32, %c0_i32_0, %c0_i32_1 : i32, i32, i32
  }
  func.func @transform_17(%arg0: i32) -> (i32, i32) {
    %c0_i32 = arith.constant 0 : i32
    %c0_i32_0 = arith.constant 0 : i32
    %c0_i32_1 = arith.constant 0 : i32
    return %c0_i32, %c0_i32_0 : i32, i32
  }
  func.func @transform_18(%arg0: i32) -> (i32, i32) {
    %c0_i32 = arith.constant 0 : i32
    %c0_i32_0 = arith.constant 0 : i32
    %c0_i32_1 = arith.constant 0 : i32
    return %c0_i32, %c0_i32_0 : i32, i32
  }
  func.func @transform_19(%arg0: i32) -> (i32, i32) {
    %c0_i32 = arith.constant 0 : i32
    %c0_i32_0 = arith.constant 0 : i32
    return %arg0, %c0_i32 : i32, i32
  }
}

</mosaic_0001>

<llo_original>
// kernel: tpu_custom_call.1
$region0: #{tpu_custom_call.1}
  #allocation0 [shape = 'u32[]', space=smem, size = 0x4, offset = 0x4, fixed_abs, tag = 'smem constant byte address 0x4 - core index']
  #allocation1 [shape = 'u32[72,128]{1,0:T(1,128)}', space=vmem, size = 0x9000, scoped, tag = 'internal scratch']
  %s0 = inlined_call_operand.hbm [shape: f32[2,8,8], index: 0, kind: input, shape index: {}]
  %s1 = inlined_call_operand.hbm [shape: f32[8,8], index: 1, kind: input, shape index: {}]
  %s2 = inlined_call_operand.hbm [shape: f32[2,8], index: 2, kind: input, shape index: {}]
  %s3 = inlined_call_operand.hbm [shape: f32[8,32], index: 3, kind: input, shape index: {}]
  %s4 = inlined_call_operand.hbm [shape: f32[1,32], index: 4, kind: input, shape index: {}]
  %s5 = inlined_call_operand.vmem [shape: f32[2,32,96], index: 5, kind: input, shape index: {}]
  %s6 = inlined_call_operand.vmem [shape: f32[2,1,96], index: 6, kind: input, shape index: {}]
  %s7 = inlined_call_operand.vmem [shape: f32[2,32,32], index: 7, kind: input, shape index: {}]
  %s8 = inlined_call_operand.vmem [shape: f32[2,1,32], index: 8, kind: input, shape index: {}]
  %s9 = inlined_call_operand.vmem [shape: f32[2,1,32], index: 9, kind: input, shape index: {}]
  %s10 = inlined_call_operand.vmem [shape: f32[2,1,32], index: 10, kind: input, shape index: {}]
  %s11 = inlined_call_operand.vmem [shape: f32[2,32,64], index: 11, kind: input, shape index: {}]
  %s12 = inlined_call_operand.vmem [shape: f32[2,1,64], index: 12, kind: input, shape index: {}]
  %s13 = inlined_call_operand.vmem [shape: f32[2,64,32], index: 13, kind: input, shape index: {}]
  %s14 = inlined_call_operand.hbm [shape: f32[2,1,32], index: 14, kind: input, shape index: {}]
  %s15 = inlined_call_operand.vmem [shape: f32[2,1,32], index: 15, kind: input, shape index: {}]
  %s16 = inlined_call_operand.vmem [shape: f32[2,1,32], index: 16, kind: input, shape index: {}]
  %s17 = inlined_call_operand.hbm [shape: f32[32,128], index: 17, kind: input, shape index: {}]
  %s18 = inlined_call_operand.vmem [shape: f32[1,128], index: 18, kind: input, shape index: {}]
  %s19 = inlined_call_operand.hbm [shape: f32[2,128], index: 19, kind: output, shape index: {}]
  %s20 = sld [smem:[#allocation0]]
  $region114: #{tpu_custom_call.1} parent=0
    _
  %s22 = ssub.s32 1, %s20
  %s23 = scalar_select 0, %s22, %s20
  $region1: #{tpu_custom_call.1} parent=0
    #allocation2 [shape = 'u8[8192]{0}', space=vmem, size = 0x2000, scoped, tag = 'input window, operand 0, single buffered']
    #allocation3 [shape = 's32[1]{0}', space=sflag, size = 0x4, scoped, tag = 'scoped memory for tpu_custom_call.1']
    #allocation4 [shape = 's32[1]{0}', space=sflag, size = 0x4, scoped, tag = 'scoped memory for tpu_custom_call.1']
    #allocation5 [shape = 'u8[4096]{0}', space=vmem, size = 0x1000, scoped, tag = 'input window, operand 1, single buffered']
    #allocation6 [shape = 's32[1]{0}', space=sflag, size = 0x4, scoped, tag = 'scoped memory for tpu_custom_call.1']
    #allocation7 [shape = 'u8[1024]{0}', space=vmem, size = 0x400, scoped, tag = 'input window, operand 2, single buffered']
    #allocation8 [shape = 'u8[4096]{0}', space=vmem, size = 0x1000, scoped, tag = 'input window, operand 3, single buffered']
    #allocation9 [shape = 's32[1]{0}', space=sflag, size = 0x4, scoped, tag = 'scoped memory for tpu_custom_call.1']
    #allocation10 [shape = 'u8[512]{0}', space=vmem, size = 0x400, scoped, tag = 'input window, operand 4, single buffered']
    #allocation11 [shape = 'u8[1024]{0}', space=vmem, size = 0x400, scoped, tag = 'input window, operand 14, single buffered']
    #allocation12 [shape = 's32[1]{0}', space=sflag, size = 0x4, scoped, tag = 'scoped memory for tpu_custom_call.1']
    #allocation13 [shape = 'u8[16384]{0}', space=vmem, size = 0x4000, scoped, tag = 'input window, operand 17, single buffered']
    #allocation14 [shape = 'u8[1024]{0}', space=vmem, size = 0x400, scoped, tag = 'output window, operand 0, single buffered']
    %24 = vsyncpa [#allocation3], 0
    %25 = vsyncpa [#allocation6], 0
    %26 = vsyncpa [#allocation9], 0
    %27 = vsyncpa [#allocation12], 0
    %28 = vsyncpa [#allocation4], 0
    // Predicated region
    $region2: #{tpu_custom_call.1} parent=1 // pred_check
      _
    $region3: #{tpu_custom_call.1} parent=1 // pred_check_branch
      %30 = sbr.rel (0) target = $region5
    $region4: #{tpu_custom_call.1} parent=1 // pred_region
      %32 = vsyncadd [#allocation3], 0
      %s33 = sshll.u32 %s0, 4
      %s34 = int_to_ptr.hbm [resolvable:$true] %s33
      %s35 = sshll.u32 [#allocation2], 4
      %s36 = int_to_ptr.vmem [resolvable:$true] %s35
      %41 = dma.hbm_to_vmem [thread:$0]  %s34, 256, %s36, [#allocation3], 128, 128, 8
    $region5: #{tpu_custom_call.1} parent=1 // pred_fallthru
      _
    // Predicated region
    $region6: #{tpu_custom_call.1} parent=1 // pred_check
      _
    $region7: #{tpu_custom_call.1} parent=1 // pred_check_branch
      %43 = sbr.rel (0) target = $region9
    $region8: #{tpu_custom_call.1} parent=1 // pred_region
      %45 = vsyncadd [#allocation6], 0
      %s47 = sshll.u32 %s1, 4
      %s48 = int_to_ptr.hbm [resolvable:$true] %s47
      %s49 = sshll.u32 [#allocation5], 4
      %s50 = int_to_ptr.vmem [resolvable:$true] %s49
      %52 = dma.hbm_to_vmem [thread:$0]  %s48, 128, %s50, [#allocation6]
    $region9: #{tpu_custom_call.1} parent=1 // pred_fallthru
      _
    // Predicated region
    $region10: #{tpu_custom_call.1} parent=1 // pred_check
      _
    $region11: #{tpu_custom_call.1} parent=1 // pred_check_branch
      %54 = sbr.rel (0) target = $region13
    $region12: #{tpu_custom_call.1} parent=1 // pred_region
      %56 = vsyncadd [#allocation6], 0
      %s58 = sshll.u32 %s2, 4
      %s59 = int_to_ptr.hbm [resolvable:$true] %s58
      %s60 = sshll.u32 [#allocation7], 4
      %s61 = int_to_ptr.vmem [resolvable:$true] %s60
      %63 = dma.hbm_to_vmem [thread:$0]  %s59, 32, %s61, [#allocation6]
    $region13: #{tpu_custom_call.1} parent=1 // pred_fallthru
      _
    // Predicated region
    $region14: #{tpu_custom_call.1} parent=1 // pred_check
      _
    $region15: #{tpu_custom_call.1} parent=1 // pred_check_branch
      %65 = sbr.rel (0) target = $region17
    $region16: #{tpu_custom_call.1} parent=1 // pred_region
      %67 = vsyncadd [#allocation9], 0
      %s69 = sshll.u32 %s3, 4
      %s70 = int_to_ptr.hbm [resolvable:$true] %s69
      %s71 = sshll.u32 [#allocation8], 4
      %s72 = int_to_ptr.vmem [resolvable:$true] %s71
      %74 = dma.hbm_to_vmem [thread:$0]  %s70, 128, %s72, [#allocation9]
    $region17: #{tpu_custom_call.1} parent=1 // pred_fallthru
      _
    // Predicated region
    $region18: #{tpu_custom_call.1} parent=1 // pred_check
      _
    $region19: #{tpu_custom_call.1} parent=1 // pred_check_branch
      %76 = sbr.rel (0) target = $region21
    $region20: #{tpu_custom_call.1} parent=1 // pred_region
      %78 = vsyncadd [#allocation9], 0
      %s80 = sshll.u32 %s4, 4
      %s81 = int_to_ptr.hbm [resolvable:$true] %s80
      %s82 = sshll.u32 [#allocation10], 4
      %s83 = int_to_ptr.vmem [resolvable:$true] %s82
      %85 = dma.hbm_to_vmem [thread:$0]  %s81, 16, %s83, [#allocation9]
    $region21: #{tpu_custom_call.1} parent=1 // pred_fallthru
      _
    // Predicated region
    $region22: #{tpu_custom_call.1} parent=1 // pred_check
      _
    $region23: #{tpu_custom_call.1} parent=1 // pred_check_branch
      %87 = sbr.rel (0) target = $region25
    $region24: #{tpu_custom_call.1} parent=1 // pred_region
      _
    $region25: #{tpu_custom_call.1} parent=1 // pred_fallthru
      _
    // Predicated region
    $region26: #{tpu_custom_call.1} parent=1 // pred_check
      _
    $region27: #{tpu_custom_call.1} parent=1 // pred_check_branch
      %89 = sbr.rel (0) target = $region29
    $region28: #{tpu_custom_call.1} parent=1 // pred_region
      _
    $region29: #{tpu_custom_call.1} parent=1 // pred_fallthru
      _
    // Predicated region
    $region30: #{tpu_custom_call.1} parent=1 // pred_check
      _
    $region31: #{tpu_custom_call.1} parent=1 // pred_check_branch
      %91 = sbr.rel (0) target = $region33
    $region32: #{tpu_custom_call.1} parent=1 // pred_region
      _
    $region33: #{tpu_custom_call.1} parent=1 // pred_fallthru
      _
    // Predicated region
    $region34: #{tpu_custom_call.1} parent=1 // pred_check
      _
    $region35: #{tpu_custom_call.1} parent=1 // pred_check_branch
      %93 = sbr.rel (0) target = $region37
    $region36: #{tpu_custom_call.1} parent=1 // pred_region
      _
    $region37: #{tpu_custom_call.1} parent=1 // pred_fallthru
      _
    // Predicated region
    $region38: #{tpu_custom_call.1} parent=1 // pred_check
      _
    $region39: #{tpu_custom_call.1} parent=1 // pred_check_branch
      %95 = sbr.rel (0) target = $region41
    $region40: #{tpu_custom_call.1} parent=1 // pred_region
      _
    $region41: #{tpu_custom_call.1} parent=1 // pred_fallthru
      _
    // Predicated region
    $region42: #{tpu_custom_call.1} parent=1 // pred_check
      _
    $region43: #{tpu_custom_call.1} parent=1 // pred_check_branch
      %97 = sbr.rel (0) target = $region45
    $region44: #{tpu_custom_call.1} parent=1 // pred_region
      _
    $region45: #{tpu_custom_call.1} parent=1 // pred_fallthru
      _
    // Predicated region
    $region46: #{tpu_custom_call.1} parent=1 // pred_check
      _
    $region47: #{tpu_custom_call.1} parent=1 // pred_check_branch
      %99 = sbr.rel (0) target = $region49
    $region48: #{tpu_custom_call.1} parent=1 // pred_region
      _
    $region49: #{tpu_custom_call.1} parent=1 // pred_fallthru
      _
    // Predicated region
    $region50: #{tpu_custom_call.1} parent=1 // pred_check
      _
    $region51: #{tpu_custom_call.1} parent=1 // pred_check_branch
      %101 = sbr.rel (0) target = $region53
    $region52: #{tpu_custom_call.1} parent=1 // pred_region
      _
    $region53: #{tpu_custom_call.1} parent=1 // pred_fallthru
      _
    // Predicated region
    $region54: #{tpu_custom_call.1} parent=1 // pred_check
      _
    $region55: #{tpu_custom_call.1} parent=1 // pred_check_branch
      %103 = sbr.rel (0) target = $region57
    $region56: #{tpu_custom_call.1} parent=1 // pred_region
      _
    $region57: #{tpu_custom_call.1} parent=1 // pred_fallthru
      _
    // Predicated region
    $region58: #{tpu_custom_call.1} parent=1 // pred_check
      _
    $region59: #{tpu_custom_call.1} parent=1 // pred_check_branch
      %105 = sbr.rel (0) target = $region61
    $region60: #{tpu_custom_call.1} parent=1 // pred_region
      %107 = vsyncadd [#allocation12], 0
      %s108 = sshll.u32 %s14, 4
      %s109 = int_to_ptr.hbm [resolvable:$true] %s108
      %s110 = sshll.u32 [#allocation11], 4
      %s111 = int_to_ptr.vmem [resolvable:$true] %s110
      %116 = dma.hbm_to_vmem [thread:$0]  %s109, 32, %s111, [#allocation12], 16, 16, 1
    $region61: #{tpu_custom_call.1} parent=1 // pred_fallthru
      _
    // Predicated region
    $region62: #{tpu_custom_call.1} parent=1 // pred_check
      _
    $region63: #{tpu_custom_call.1} parent=1 // pred_check_branch
      %118 = sbr.rel (0) target = $region65
    $region64: #{tpu_custom_call.1} parent=1 // pred_region
      _
    $region65: #{tpu_custom_call.1} parent=1 // pred_fallthru
      _
    // Predicated region
    $region66: #{tpu_custom_call.1} parent=1 // pred_check
      _
    $region67: #{tpu_custom_call.1} parent=1 // pred_check_branch
      %120 = sbr.rel (0) target = $region69
    $region68: #{tpu_custom_call.1} parent=1 // pred_region
      _
    $region69: #{tpu_custom_call.1} parent=1 // pred_fallthru
      _
    // Predicated region
    $region70: #{tpu_custom_call.1} parent=1 // pred_check
      _
    $region71: #{tpu_custom_call.1} parent=1 // pred_check_branch
      %122 = sbr.rel (0) target = $region73
    $region72: #{tpu_custom_call.1} parent=1 // pred_region
      %124 = vsyncadd [#allocation12], 0
      %s125 = sshll.u32 %s17, 4
      %s126 = int_to_ptr.hbm [resolvable:$true] %s125
      %s127 = sshll.u32 [#allocation13], 4
      %s128 = int_to_ptr.vmem [resolvable:$true] %s127
      %133 = dma.hbm_to_vmem [thread:$0]  %s126, 512, %s128, [#allocation12], 128, 128, 8
    $region73: #{tpu_custom_call.1} parent=1 // pred_fallthru
      _
    // Predicated region
    $region74: #{tpu_custom_call.1} parent=1 // pred_check
      _
    $region75: #{tpu_custom_call.1} parent=1 // pred_check_branch
      %135 = sbr.rel (0) target = $region77
    $region76: #{tpu_custom_call.1} parent=1 // pred_region
      _
    $region77: #{tpu_custom_call.1} parent=1 // pred_fallthru
      _
    // Predicated region
    $region78: #{tpu_custom_call.1} parent=1 // pred_check
      _
    $region79: #{tpu_custom_call.1} parent=1 // pred_check_branch
      %137 = sbr.rel (0) target = $region81
    $region80: #{tpu_custom_call.1} parent=1 // pred_region
      %139 = dma.done [#allocation3], 256
    $region81: #{tpu_custom_call.1} parent=1 // pred_fallthru
      _
    // Predicated region
    $region82: #{tpu_custom_call.1} parent=1 // pred_check
      _
    $region83: #{tpu_custom_call.1} parent=1 // pred_check_branch
      %141 = sbr.rel (0) target = $region85
    $region84: #{tpu_custom_call.1} parent=1 // pred_region
      %143 = dma.done [#allocation6], 128
    $region85: #{tpu_custom_call.1} parent=1 // pred_fallthru
      _
    // Predicated region
    $region86: #{tpu_custom_call.1} parent=1 // pred_check
      _
    $region87: #{tpu_custom_call.1} parent=1 // pred_check_branch
      %145 = sbr.rel (0) target = $region89
    $region88: #{tpu_custom_call.1} parent=1 // pred_region
      %147 = dma.done [#allocation6], 32
    $region89: #{tpu_custom_call.1} parent=1 // pred_fallthru
      _
    // Predicated region
    $region90: #{tpu_custom_call.1} parent=1 // pred_check
      _
    $region91: #{tpu_custom_call.1} parent=1 // pred_check_branch
      %149 = sbr.rel (0) target = $region93
    $region92: #{tpu_custom_call.1} parent=1 // pred_region
      %151 = dma.done [#allocation9], 128
    $region93: #{tpu_custom_call.1} parent=1 // pred_fallthru
      _
    // Predicated region
    $region94: #{tpu_custom_call.1} parent=1 // pred_check
      _
    $region95: #{tpu_custom_call.1} parent=1 // pred_check_branch
      %153 = sbr.rel (0) target = $region97
    $region96: #{tpu_custom_call.1} parent=1 // pred_region
      %155 = dma.done [#allocation9], 16
    $region97: #{tpu_custom_call.1} parent=1 // pred_fallthru
      _
    // Predicated region
    $region98: #{tpu_custom_call.1} parent=1 // pred_check
      _
    $region99: #{tpu_custom_call.1} parent=1 // pred_check_branch
      %157 = sbr.rel (0) target = $region101
    $region100: #{tpu_custom_call.1} parent=1 // pred_region
      %159 = dma.done [#allocation12], 32
    $region101: #{tpu_custom_call.1} parent=1 // pred_fallthru
      _
    // Predicated region
    $region102: #{tpu_custom_call.1} parent=1 // pred_check
      _
    $region103: #{tpu_custom_call.1} parent=1 // pred_check_branch
      %161 = sbr.rel (0) target = $region105
    $region104: #{tpu_custom_call.1} parent=1 // pred_region
      %163 = dma.done [#allocation12], 512
    $region105: #{tpu_custom_call.1} parent=1 // pred_fallthru
      _
    %v164 = vld [vmem:[#allocation2] sm:$0xff]
    %v165 = vld [vmem:[#allocation2 + $0x8] sm:$0xff]
    %v166 = vld [vmem:[#allocation8] sm:$0xff]
    %v167 = vld [vmem:[#allocation10] sm:$0x1]
    %v169 = vperm.slane %v167, 0
    %vm171 = vcmask 64512
    %v173 = vsel %vm171, %v164, 0
    %v176 = vsel %vm171, %v165, 0
    %178 = vmatpush.msra.mxu0 0.0
    %179 = vmatpush.msra.mxu0 0.0
    %180 = vmatpush.msra.mxu0 0.0
    %181 = vmatpush.msra.mxu0 0.0
    %182 = vmatpush.msra.mxu0 0.0
    %183 = vmatpush.msra.mxu0 0.0
    %184 = vmatpush.msra.mxu0 0.0
    %185 = vmatpush.msra.mxu0 0.0
    %186 = vmatpush.msra.mxu0 0.0
    %187 = vmatpush.msra.mxu0 0.0
    %188 = vmatpush.msra.mxu0 0.0
    %189 = vmatpush.msra.mxu0 0.0
    %190 = vmatpush.msra.mxu0 0.0
    %191 = vmatpush.msra.mxu0 0.0
    %192 = vmatpush.msra.mxu0 0.0
    %193 = vmatpush.msra.mxu0 %v166
    %194 = vmatmul.f32.gmra.mxu0 %v173
    %v195 = vpop.f32.mrf.mxu0
    %v196 = vadd.f32 %v169, %v195
    %197 = vmatmul.f32.gmra.mxu0 %v176
    %v198 = vpop.f32.mrf.mxu0
    %v199 = vadd.f32 %v169, %v198
    %200 = vdwg.mxu0
    %v201 = vld [vmem:[#allocation5] sm:$0xff]
    %v202 = vld [vmem:[#allocation7] sm:$0x3]
    %v204 = vrot.slane %v202, 1
    %v205 = vperm.slane %v202, 0
    %v206 = vperm.slane %v204, 0
    %v209 = vadd.f32 %v201, %v205
    %v210 = vadd.f32 %v201, %v206
    %v211 = vld [vmem:[%s5] sm:$0xff]
    %v212 = vld [vmem:[%s5 + $0x8] sm:$0xff]
    %v213 = vld [vmem:[%s5 + $0x10] sm:$0xff]
    %v214 = vld [vmem:[%s5 + $0x18] sm:$0xff]
    %v215 = vld [vmem:[%s6] sm:$0x1]
    %v217 = vperm.slane %v215, 0
    %vm219 = vcmask 261120
    %v221 = vsel %vm219, %v196, 0
    %v224 = vsel %vm219, %v199, 0
    %226 = vmatpush.msra.mxu0 0.0
    %227 = vmatpush.msra.mxu0 0.0
    %228 = vmatpush.msra.mxu0 0.0
    %229 = vmatpush.msra.mxu0 0.0
    %230 = vmatpush.msra.mxu0 0.0
    %231 = vmatpush.msra.mxu0 0.0
    %232 = vmatpush.msra.mxu0 0.0
    %233 = vmatpush.msra.mxu0 0.0
    %234 = vmatpush.msra.mxu0 0.0
    %235 = vmatpush.msra.mxu0 0.0
    %236 = vmatpush.msra.mxu0 0.0
    %237 = vmatpush.msra.mxu0 0.0
    %238 = vmatpush.msra.mxu0 %v214
    %239 = vmatpush.msra.mxu0 %v213
    %240 = vmatpush.msra.mxu0 %v212
    %241 = vmatpush.msra.mxu0 %v211
    %242 = vmatmul.f32.gmra.mxu0 %v221
    %v243 = vpop.f32.mrf.mxu0
    %v244 = vadd.f32 %v217, %v243
    %245 = vmatmul.f32.gmra.mxu0 %v224
    %v246 = vpop.f32.mrf.mxu0
    %v247 = vadd.f32 %v217, %v246
    %248 = vdwg.mxu0
    %250 = vrot.lane.b32.xlu0 %v244, 96
    %v251 = vpop.permute.xlu0 %250
    %v252 = vsel %vm171, %v244, 0
    %v254 = vsel %vm171, %v251, 0
    %256 = vmatpush.xpose.msra.mxu0 0.0
    %257 = vmatpush.xpose.msra.mxu0 0.0
    %258 = vmatpush.xpose.msra.mxu0 0.0
    %259 = vmatpush.xpose.msra.mxu0 0.0
    %260 = vmatpush.xpose.msra.mxu0 0.0
    %261 = vmatpush.xpose.msra.mxu0 0.0
    %262 = vmatpush.xpose.msra.mxu0 0.0
    %263 = vmatpush.xpose.msra.mxu0 0.0
    %264 = vmatpush.xpose.msra.mxu0 0.0
    %265 = vmatpush.xpose.msra.mxu0 0.0
    %266 = vmatpush.xpose.msra.mxu0 0.0
    %267 = vmatpush.xpose.msra.mxu0 0.0
    %268 = vmatpush.xpose.msra.mxu0 0.0
    %269 = vmatpush.xpose.msra.mxu0 0.0
    %270 = vmatpush.xpose.msra.mxu0 0.0
    %271 = vmatpush.xpose.msra.mxu0 %v254
    %272 = vmatmul.f32.gmra.mxu0 %v252
    %v273 = vpop.f32.mrf.mxu0
    %v274 = vadd.f32 %v209, %v273
    %275 = vdwg.mxu0
    %277 = vrot.lane.b32.xlu0 %v247, 96
    %v278 = vpop.permute.xlu0 %277
    %v279 = vsel %vm171, %v247, 0
    %v281 = vsel %vm171, %v278, 0
    %283 = vmatpush.xpose.msra.mxu0 0.0
    %284 = vmatpush.xpose.msra.mxu0 0.0
    %285 = vmatpush.xpose.msra.mxu0 0.0
    %286 = vmatpush.xpose.msra.mxu0 0.0
    %287 = vmatpush.xpose.msra.mxu0 0.0
    %288 = vmatpush.xpose.msra.mxu0 0.0
    %289 = vmatpush.xpose.msra.mxu0 0.0
    %290 = vmatpush.xpose.msra.mxu0 0.0
    %291 = vmatpush.xpose.msra.mxu0 0.0
    %292 = vmatpush.xpose.msra.mxu0 0.0
    %293 = vmatpush.xpose.msra.mxu0 0.0
    %294 = vmatpush.xpose.msra.mxu0 0.0
    %295 = vmatpush.xpose.msra.mxu0 0.0
    %296 = vmatpush.xpose.msra.mxu0 0.0
    %297 = vmatpush.xpose.msra.mxu0 0.0
    %298 = vmatpush.xpose.msra.mxu0 %v281
    %299 = vmatmul.f32.gmra.mxu0 %v279
    %v300 = vpop.f32.mrf.mxu0
    %v301 = vadd.f32 %v210, %v300
    %302 = vdwg.mxu0
    %v303 = vsel %vm171, %v274, -inf
    %304 = vmax.xlane.f32.xlu0 %v303
    %v305 = vpop.xlane.xlu0 %304
    %v306 = vsel %vm171, %v301, -inf
    %307 = vmax.xlane.f32.xlu0 %v306
    %v308 = vpop.xlane.xlu0 %307
    %v309 = vsub.f32 %v274, %v305
    %v310 = vsub.f32 %v301, %v308
    %v311 = vmul.f32 %v309, 1.442695
    %v312 = vpow.pop %v311
    %v313 = vmul.f32 %v310, 1.442695
    %v314 = vpow.pop %v313
    %v315 = vsel %vm171, %v312, 0.0
    %316 = vadd.xlane.f32.xlu0 %v315
    %v317 = vpop.xlane.xlu0 %316
    %v318 = vsel %vm171, %v314, 0.0
    %319 = vadd.xlane.f32.xlu0 %v318
    %v320 = vpop.xlane.xlu0 %319
    %v321 = vrcp.pop %v317
    %v322 = vrcp.pop %v320
    %v323 = vmul.f32 %v312, %v321
    %v324 = vmul.f32 %v314, %v322
    %325 = vrot.lane.b32.xlu0 %v244, 64
    %v326 = vpop.permute.xlu0 %325
    %v329 = vsel %vm171, %v323, 0
    %331 = vmatpush.msra.mxu0 0.0
    %332 = vmatpush.msra.mxu0 0.0
    %333 = vmatpush.msra.mxu0 0.0
    %334 = vmatpush.msra.mxu0 0.0
    %335 = vmatpush.msra.mxu0 0.0
    %336 = vmatpush.msra.mxu0 0.0
    %337 = vmatpush.msra.mxu0 0.0
    %338 = vmatpush.msra.mxu0 0.0
    %339 = vmatpush.msra.mxu0 0.0
    %340 = vmatpush.msra.mxu0 0.0
    %341 = vmatpush.msra.mxu0 0.0
    %342 = vmatpush.msra.mxu0 0.0
    %343 = vmatpush.msra.mxu0 0.0
    %344 = vmatpush.msra.mxu0 0.0
    %345 = vmatpush.msra.mxu0 0.0
    %346 = vmatpush.msra.mxu0 %v326
    %347 = vmatmul.f32.gmra.mxu0 %v329
    %v348 = vpop.f32.mrf.mxu0
    %v349 = vadd.f32 0.0, %v348
    %350 = vdwg.mxu0
    %351 = vrot.lane.b32.xlu0 %v247, 64
    %v352 = vpop.permute.xlu0 %351
    %v355 = vsel %vm171, %v324, 0
    %357 = vmatpush.msra.mxu0 0.0
    %358 = vmatpush.msra.mxu0 0.0
    %359 = vmatpush.msra.mxu0 0.0
    %360 = vmatpush.msra.mxu0 0.0
    %361 = vmatpush.msra.mxu0 0.0
    %362 = vmatpush.msra.mxu0 0.0
    %363 = vmatpush.msra.mxu0 0.0
    %364 = vmatpush.msra.mxu0 0.0
    %365 = vmatpush.msra.mxu0 0.0
    %366 = vmatpush.msra.mxu0 0.0
    %367 = vmatpush.msra.mxu0 0.0
    %368 = vmatpush.msra.mxu0 0.0
    %369 = vmatpush.msra.mxu0 0.0
    %370 = vmatpush.msra.mxu0 0.0
    %371 = vmatpush.msra.mxu0 0.0
    %372 = vmatpush.msra.mxu0 %v352
    %373 = vmatmul.f32.gmra.mxu0 %v355
    %v374 = vpop.f32.mrf.mxu0
    %v375 = vadd.f32 0.0, %v374
    %376 = vdwg.mxu0
    %377 = vrot.lane.b32.xlu0 %v244, 120
    %v378 = vpop.permute.xlu0 %377
    %379 = vrot.lane.b32.xlu0 %v244, 88
    %v380 = vpop.permute.xlu0 %379
    %v381 = vsel %vm171, %v378, 0
    %v383 = vsel %vm171, %v380, 0
    %385 = vmatpush.xpose.msra.mxu0 0.0
    %386 = vmatpush.xpose.msra.mxu0 0.0
    %387 = vmatpush.xpose.msra.mxu0 0.0
    %388 = vmatpush.xpose.msra.mxu0 0.0
    %389 = vmatpush.xpose.msra.mxu0 0.0
    %390 = vmatpush.xpose.msra.mxu0 0.0
    %391 = vmatpush.xpose.msra.mxu0 0.0
    %392 = vmatpush.xpose.msra.mxu0 0.0
    %393 = vmatpush.xpose.msra.mxu0 0.0
    %394 = vmatpush.xpose.msra.mxu0 0.0
    %395 = vmatpush.xpose.msra.mxu0 0.0
    %396 = vmatpush.xpose.msra.mxu0 0.0
    %397 = vmatpush.xpose.msra.mxu0 0.0
    %398 = vmatpush.xpose.msra.mxu0 0.0
    %399 = vmatpush.xpose.msra.mxu0 0.0
    %400 = vmatpush.xpose.msra.mxu0 %v383
    %401 = vmatmul.f32.gmra.mxu0 %v381
    %v402 = vpop.f32.mrf.mxu0
    %v403 = vadd.f32 %v209, %v402
    %404 = vdwg.mxu0
    %405 = vrot.lane.b32.xlu0 %v247, 120
    %v406 = vpop.permute.xlu0 %405
    %407 = vrot.lane.b32.xlu0 %v247, 88
    %v408 = vpop.permute.xlu0 %407
    %v409 = vsel %vm171, %v406, 0
    %v411 = vsel %vm171, %v408, 0
    %413 = vmatpush.xpose.msra.mxu0 0.0
    %414 = vmatpush.xpose.msra.mxu0 0.0
    %415 = vmatpush.xpose.msra.mxu0 0.0
    %416 = vmatpush.xpose.msra.mxu0 0.0
    %417 = vmatpush.xpose.msra.mxu0 0.0
    %418 = vmatpush.xpose.msra.mxu0 0.0
    %419 = vmatpush.xpose.msra.mxu0 0.0
    %420 = vmatpush.xpose.msra.mxu0 0.0
    %421 = vmatpush.xpose.msra.mxu0 0.0
    %422 = vmatpush.xpose.msra.mxu0 0.0
    %423 = vmatpush.xpose.msra.mxu0 0.0
    %424 = vmatpush.xpose.msra.mxu0 0.0
    %425 = vmatpush.xpose.msra.mxu0 0.0
    %426 = vmatpush.xpose.msra.mxu0 0.0
    %427 = vmatpush.xpose.msra.mxu0 0.0
    %428 = vmatpush.xpose.msra.mxu0 %v411
    %429 = vmatmul.f32.gmra.mxu0 %v409
    %v430 = vpop.f32.mrf.mxu0
    %v431 = vadd.f32 %v210, %v430
    %432 = vdwg.mxu0
    %v433 = vsel %vm171, %v403, -inf
    %434 = vmax.xlane.f32.xlu0 %v433
    %v435 = vpop.xlane.xlu0 %434
    %v436 = vsel %vm171, %v431, -inf
    %437 = vmax.xlane.f32.xlu0 %v436
    %v438 = vpop.xlane.xlu0 %437
    %v439 = vsub.f32 %v403, %v435
    %v440 = vsub.f32 %v431, %v438
    %v441 = vmul.f32 %v439, 1.442695
    %v442 = vpow.pop %v441
    %v443 = vmul.f32 %v440, 1.442695
    %v444 = vpow.pop %v443
    %v445 = vsel %vm171, %v442, 0.0
    %446 = vadd.xlane.f32.xlu0 %v445
    %v447 = vpop.xlane.xlu0 %446
    %v448 = vsel %vm171, %v444, 0.0
    %449 = vadd.xlane.f32.xlu0 %v448
    %v450 = vpop.xlane.xlu0 %449
    %v451 = vrcp.pop %v447
    %v452 = vrcp.pop %v450
    %v453 = vmul.f32 %v442, %v451
    %v454 = vmul.f32 %v444, %v452
    %455 = vrot.lane.b32.xlu0 %v244, 56
    %v456 = vpop.permute.xlu0 %455
    %v459 = vsel %vm171, %v453, 0
    %461 = vmatpush.msra.mxu0 0.0
    %462 = vmatpush.msra.mxu0 0.0
    %463 = vmatpush.msra.mxu0 0.0
    %464 = vmatpush.msra.mxu0 0.0
    %465 = vmatpush.msra.mxu0 0.0
    %466 = vmatpush.msra.mxu0 0.0
    %467 = vmatpush.msra.mxu0 0.0
    %468 = vmatpush.msra.mxu0 0.0
    %469 = vmatpush.msra.mxu0 0.0
    %470 = vmatpush.msra.mxu0 0.0
    %471 = vmatpush.msra.mxu0 0.0
    %472 = vmatpush.msra.mxu0 0.0
    %473 = vmatpush.msra.mxu0 0.0
    %474 = vmatpush.msra.mxu0 0.0
    %475 = vmatpush.msra.mxu0 0.0
    %476 = vmatpush.msra.mxu0 %v456
    %477 = vmatmul.f32.gmra.mxu0 %v459
    %v478 = vpop.f32.mrf.mxu0
    %v479 = vadd.f32 0.0, %v478
    %480 = vdwg.mxu0
    %481 = vrot.lane.b32.xlu0 %v247, 56
    %v482 = vpop.permute.xlu0 %481
    %v485 = vsel %vm171, %v454, 0
    %487 = vmatpush.msra.mxu0 0.0
    %488 = vmatpush.msra.mxu0 0.0
    %489 = vmatpush.msra.mxu0 0.0
    %490 = vmatpush.msra.mxu0 0.0
    %491 = vmatpush.msra.mxu0 0.0
    %492 = vmatpush.msra.mxu0 0.0
    %493 = vmatpush.msra.mxu0 0.0
    %494 = vmatpush.msra.mxu0 0.0
    %495 = vmatpush.msra.mxu0 0.0
    %496 = vmatpush.msra.mxu0 0.0
    %497 = vmatpush.msra.mxu0 0.0
    %498 = vmatpush.msra.mxu0 0.0
    %499 = vmatpush.msra.mxu0 0.0
    %500 = vmatpush.msra.mxu0 0.0
    %501 = vmatpush.msra.mxu0 0.0
    %502 = vmatpush.msra.mxu0 %v482
    %503 = vmatmul.f32.gmra.mxu0 %v485
    %v504 = vpop.f32.mrf.mxu0
    %v505 = vadd.f32 0.0, %v504
    %506 = vdwg.mxu0
    %507 = vrot.lane.b32.xlu0 %v244, 112
    %v508 = vpop.permute.xlu0 %507
    %509 = vrot.lane.b32.xlu0 %v244, 80
    %v510 = vpop.permute.xlu0 %509
    %v511 = vsel %vm171, %v508, 0
    %v513 = vsel %vm171, %v510, 0
    %515 = vmatpush.xpose.msra.mxu0 0.0
    %516 = vmatpush.xpose.msra.mxu0 0.0
    %517 = vmatpush.xpose.msra.mxu0 0.0
    %518 = vmatpush.xpose.msra.mxu0 0.0
    %519 = vmatpush.xpose.msra.mxu0 0.0
    %520 = vmatpush.xpose.msra.mxu0 0.0
    %521 = vmatpush.xpose.msra.mxu0 0.0
    %522 = vmatpush.xpose.msra.mxu0 0.0
    %523 = vmatpush.xpose.msra.mxu0 0.0
    %524 = vmatpush.xpose.msra.mxu0 0.0
    %525 = vmatpush.xpose.msra.mxu0 0.0
    %526 = vmatpush.xpose.msra.mxu0 0.0
    %527 = vmatpush.xpose.msra.mxu0 0.0
    %528 = vmatpush.xpose.msra.mxu0 0.0
    %529 = vmatpush.xpose.msra.mxu0 0.0
    %530 = vmatpush.xpose.msra.mxu0 %v513
    %531 = vmatmul.f32.gmra.mxu0 %v511
    %v532 = vpop.f32.mrf.mxu0
    %v533 = vadd.f32 %v209, %v532
    %534 = vdwg.mxu0
    %535 = vrot.lane.b32.xlu0 %v247, 112
    %v536 = vpop.permute.xlu0 %535
    %537 = vrot.lane.b32.xlu0 %v247, 80
    %v538 = vpop.permute.xlu0 %537
    %v539 = vsel %vm171, %v536, 0
    %v541 = vsel %vm171, %v538, 0
    %543 = vmatpush.xpose.msra.mxu0 0.0
    %544 = vmatpush.xpose.msra.mxu0 0.0
    %545 = vmatpush.xpose.msra.mxu0 0.0
    %546 = vmatpush.xpose.msra.mxu0 0.0
    %547 = vmatpush.xpose.msra.mxu0 0.0
    %548 = vmatpush.xpose.msra.mxu0 0.0
    %549 = vmatpush.xpose.msra.mxu0 0.0
    %550 = vmatpush.xpose.msra.mxu0 0.0
    %551 = vmatpush.xpose.msra.mxu0 0.0
    %552 = vmatpush.xpose.msra.mxu0 0.0
    %553 = vmatpush.xpose.msra.mxu0 0.0
    %554 = vmatpush.xpose.msra.mxu0 0.0
    %555 = vmatpush.xpose.msra.mxu0 0.0
    %556 = vmatpush.xpose.msra.mxu0 0.0
    %557 = vmatpush.xpose.msra.mxu0 0.0
    %558 = vmatpush.xpose.msra.mxu0 %v541
    %559 = vmatmul.f32.gmra.mxu0 %v539
    %v560 = vpop.f32.mrf.mxu0
    %v561 = vadd.f32 %v210, %v560
    %562 = vdwg.mxu0
    %v563 = vsel %vm171, %v533, -inf
    %564 = vmax.xlane.f32.xlu0 %v563
    %v565 = vpop.xlane.xlu0 %564
    %v566 = vsel %vm171, %v561, -inf
    %567 = vmax.xlane.f32.xlu0 %v566
    %v568 = vpop.xlane.xlu0 %567
    %v569 = vsub.f32 %v533, %v565
    %v570 = vsub.f32 %v561, %v568
    %v571 = vmul.f32 %v569, 1.442695
    %v572 = vpow.pop %v571
    %v573 = vmul.f32 %v570, 1.442695
    %v574 = vpow.pop %v573
    %v575 = vsel %vm171, %v572, 0.0
    %576 = vadd.xlane.f32.xlu0 %v575
    %v577 = vpop.xlane.xlu0 %576
    %v578 = vsel %vm171, %v574, 0.0
    %579 = vadd.xlane.f32.xlu0 %v578
    %v580 = vpop.xlane.xlu0 %579
    %v581 = vrcp.pop %v577
    %v582 = vrcp.pop %v580
    %v583 = vmul.f32 %v572, %v581
    %v584 = vmul.f32 %v574, %v582
    %585 = vrot.lane.b32.xlu0 %v244, 48
    %v586 = vpop.permute.xlu0 %585
    %v589 = vsel %vm171, %v583, 0
    %591 = vmatpush.msra.mxu0 0.0
    %592 = vmatpush.msra.mxu0 0.0
    %593 = vmatpush.msra.mxu0 0.0
    %594 = vmatpush.msra.mxu0 0.0
    %595 = vmatpush.msra.mxu0 0.0
    %596 = vmatpush.msra.mxu0 0.0
    %597 = vmatpush.msra.mxu0 0.0
    %598 = vmatpush.msra.mxu0 0.0
    %599 = vmatpush.msra.mxu0 0.0
    %600 = vmatpush.msra.mxu0 0.0
    %601 = vmatpush.msra.mxu0 0.0
    %602 = vmatpush.msra.mxu0 0.0
    %603 = vmatpush.msra.mxu0 0.0
    %604 = vmatpush.msra.mxu0 0.0
    %605 = vmatpush.msra.mxu0 0.0
    %606 = vmatpush.msra.mxu0 %v586
    %607 = vmatmul.f32.gmra.mxu0 %v589
    %v608 = vpop.f32.mrf.mxu0
    %v609 = vadd.f32 0.0, %v608
    %610 = vdwg.mxu0
    %611 = vrot.lane.b32.xlu0 %v247, 48
    %v612 = vpop.permute.xlu0 %611
    %v615 = vsel %vm171, %v584, 0
    %617 = vmatpush.msra.mxu0 0.0
    %618 = vmatpush.msra.mxu0 0.0
    %619 = vmatpush.msra.mxu0 0.0
    %620 = vmatpush.msra.mxu0 0.0
    %621 = vmatpush.msra.mxu0 0.0
    %622 = vmatpush.msra.mxu0 0.0
    %623 = vmatpush.msra.mxu0 0.0
    %624 = vmatpush.msra.mxu0 0.0
    %625 = vmatpush.msra.mxu0 0.0
    %626 = vmatpush.msra.mxu0 0.0
    %627 = vmatpush.msra.mxu0 0.0
    %628 = vmatpush.msra.mxu0 0.0
    %629 = vmatpush.msra.mxu0 0.0
    %630 = vmatpush.msra.mxu0 0.0
    %631 = vmatpush.msra.mxu0 0.0
    %632 = vmatpush.msra.mxu0 %v612
    %633 = vmatmul.f32.gmra.mxu0 %v615
    %v634 = vpop.f32.mrf.mxu0
    %v635 = vadd.f32 0.0, %v634
    %636 = vdwg.mxu0
    %637 = vrot.lane.b32.xlu0 %v244, 104
    %v638 = vpop.permute.xlu0 %637
    %639 = vrot.lane.b32.xlu0 %v244, 72
    %v640 = vpop.permute.xlu0 %639
    %v641 = vsel %vm171, %v638, 0
    %v643 = vsel %vm171, %v640, 0
    %645 = vmatpush.xpose.msra.mxu0 0.0
    %646 = vmatpush.xpose.msra.mxu0 0.0
    %647 = vmatpush.xpose.msra.mxu0 0.0
    %648 = vmatpush.xpose.msra.mxu0 0.0
    %649 = vmatpush.xpose.msra.mxu0 0.0
    %650 = vmatpush.xpose.msra.mxu0 0.0
    %651 = vmatpush.xpose.msra.mxu0 0.0
    %652 = vmatpush.xpose.msra.mxu0 0.0
    %653 = vmatpush.xpose.msra.mxu0 0.0
    %654 = vmatpush.xpose.msra.mxu0 0.0
    %655 = vmatpush.xpose.msra.mxu0 0.0
    %656 = vmatpush.xpose.msra.mxu0 0.0
    %657 = vmatpush.xpose.msra.mxu0 0.0
    %658 = vmatpush.xpose.msra.mxu0 0.0
    %659 = vmatpush.xpose.msra.mxu0 0.0
    %660 = vmatpush.xpose.msra.mxu0 %v643
    %661 = vmatmul.f32.gmra.mxu0 %v641
    %v662 = vpop.f32.mrf.mxu0
    %v663 = vadd.f32 %v209, %v662
    %664 = vdwg.mxu0
    %665 = vrot.lane.b32.xlu0 %v247, 104
    %v666 = vpop.permute.xlu0 %665
    %667 = vrot.lane.b32.xlu0 %v247, 72
    %v668 = vpop.permute.xlu0 %667
    %v669 = vsel %vm171, %v666, 0
    %v671 = vsel %vm171, %v668, 0
    %673 = vmatpush.xpose.msra.mxu0 0.0
    %674 = vmatpush.xpose.msra.mxu0 0.0
    %675 = vmatpush.xpose.msra.mxu0 0.0
    %676 = vmatpush.xpose.msra.mxu0 0.0
    %677 = vmatpush.xpose.msra.mxu0 0.0
    %678 = vmatpush.xpose.msra.mxu0 0.0
    %679 = vmatpush.xpose.msra.mxu0 0.0
    %680 = vmatpush.xpose.msra.mxu0 0.0
    %681 = vmatpush.xpose.msra.mxu0 0.0
    %682 = vmatpush.xpose.msra.mxu0 0.0
    %683 = vmatpush.xpose.msra.mxu0 0.0
    %684 = vmatpush.xpose.msra.mxu0 0.0
    %685 = vmatpush.xpose.msra.mxu0 0.0
    %686 = vmatpush.xpose.msra.mxu0 0.0
    %687 = vmatpush.xpose.msra.mxu0 0.0
    %688 = vmatpush.xpose.msra.mxu0 %v671
    %689 = vmatmul.f32.gmra.mxu0 %v669
    %v690 = vpop.f32.mrf.mxu0
    %v691 = vadd.f32 %v210, %v690
    %692 = vdwg.mxu0
    %v693 = vsel %vm171, %v663, -inf
    %694 = vmax.xlane.f32.xlu0 %v693
    %v695 = vpop.xlane.xlu0 %694
    %v696 = vsel %vm171, %v691, -inf
    %697 = vmax.xlane.f32.xlu0 %v696
    %v698 = vpop.xlane.xlu0 %697
    %v699 = vsub.f32 %v663, %v695
    %v700 = vsub.f32 %v691, %v698
    %v701 = vmul.f32 %v699, 1.442695
    %v702 = vpow.pop %v701
    %v703 = vmul.f32 %v700, 1.442695
    %v704 = vpow.pop %v703
    %v705 = vsel %vm171, %v702, 0.0
    %706 = vadd.xlane.f32.xlu0 %v705
    %v707 = vpop.xlane.xlu0 %706
    %v708 = vsel %vm171, %v704, 0.0
    %709 = vadd.xlane.f32.xlu0 %v708
    %v710 = vpop.xlane.xlu0 %709
    %v711 = vrcp.pop %v707
    %v712 = vrcp.pop %v710
    %v713 = vmul.f32 %v702, %v711
    %v714 = vmul.f32 %v704, %v712
    %715 = vrot.lane.b32.xlu0 %v244, 40
    %v716 = vpop.permute.xlu0 %715
    %v719 = vsel %vm171, %v713, 0
    %721 = vmatpush.msra.mxu0 0.0
    %722 = vmatpush.msra.mxu0 0.0
    %723 = vmatpush.msra.mxu0 0.0
    %724 = vmatpush.msra.mxu0 0.0
    %725 = vmatpush.msra.mxu0 0.0
    %726 = vmatpush.msra.mxu0 0.0
    %727 = vmatpush.msra.mxu0 0.0
    %728 = vmatpush.msra.mxu0 0.0
    %729 = vmatpush.msra.mxu0 0.0
    %730 = vmatpush.msra.mxu0 0.0
    %731 = vmatpush.msra.mxu0 0.0
    %732 = vmatpush.msra.mxu0 0.0
    %733 = vmatpush.msra.mxu0 0.0
    %734 = vmatpush.msra.mxu0 0.0
    %735 = vmatpush.msra.mxu0 0.0
    %736 = vmatpush.msra.mxu0 %v716
    %737 = vmatmul.f32.gmra.mxu0 %v719
    %v738 = vpop.f32.mrf.mxu0
    %v739 = vadd.f32 0.0, %v738
    %740 = vdwg.mxu0
    %741 = vrot.lane.b32.xlu0 %v247, 40
    %v742 = vpop.permute.xlu0 %741
    %v745 = vsel %vm171, %v714, 0
    %747 = vmatpush.msra.mxu0 0.0
    %748 = vmatpush.msra.mxu0 0.0
    %749 = vmatpush.msra.mxu0 0.0
    %750 = vmatpush.msra.mxu0 0.0
    %751 = vmatpush.msra.mxu0 0.0
    %752 = vmatpush.msra.mxu0 0.0
    %753 = vmatpush.msra.mxu0 0.0
    %754 = vmatpush.msra.mxu0 0.0
    %755 = vmatpush.msra.mxu0 0.0
    %756 = vmatpush.msra.mxu0 0.0
    %757 = vmatpush.msra.mxu0 0.0
    %758 = vmatpush.msra.mxu0 0.0
    %759 = vmatpush.msra.mxu0 0.0
    %760 = vmatpush.msra.mxu0 0.0
    %761 = vmatpush.msra.mxu0 0.0
    %762 = vmatpush.msra.mxu0 %v742
    %763 = vmatmul.f32.gmra.mxu0 %v745
    %v764 = vpop.f32.mrf.mxu0
    %v765 = vadd.f32 0.0, %v764
    %766 = vdwg.mxu0
    %769 = vrot.lane.b32.xlu0 %v479, 8
    %v770 = vpop.permute.xlu0 %769
    %771 = vrot.lane.b32.xlu0 %v505, 8
    %v772 = vpop.permute.xlu0 %771
    %777 = vrot.lane.b32.xlu0 %v609, 16
    %v778 = vpop.permute.xlu0 %777
    %779 = vrot.lane.b32.xlu0 %v635, 16
    %v780 = vpop.permute.xlu0 %779
    %785 = vrot.lane.b32.xlu0 %v739, 24
    %v786 = vpop.permute.xlu0 %785
    %787 = vrot.lane.b32.xlu0 %v765, 24
    %v788 = vpop.permute.xlu0 %787
    %v791 = vsel %vm171, %v349, %v770
    %v792 = vsel %vm171, %v375, %v772
    %vm793 = vcmask 130048
    %v794 = vsel %vm793, %v791, %v778
    %v795 = vsel %vm793, %v792, %v780
    %vm796 = vcmask 195584
    %v797 = vsel %vm796, %v794, %v786
    %v798 = vsel %vm796, %v795, %v788
    %v799 = vld [vmem:[%s7] sm:$0xff]
    %v800 = vld [vmem:[%s7 + $0x8] sm:$0xff]
    %v801 = vld [vmem:[%s7 + $0x10] sm:$0xff]
    %v802 = vld [vmem:[%s7 + $0x18] sm:$0xff]
    %v803 = vld [vmem:[%s8] sm:$0x1]
    %v805 = vperm.slane %v803, 0
    %v808 = vsel %vm219, %v797, 0
    %v811 = vsel %vm219, %v798, 0
    %813 = vmatpush.msra.mxu0 0.0
    %814 = vmatpush.msra.mxu0 0.0
    %815 = vmatpush.msra.mxu0 0.0
    %816 = vmatpush.msra.mxu0 0.0
    %817 = vmatpush.msra.mxu0 0.0
    %818 = vmatpush.msra.mxu0 0.0
    %819 = vmatpush.msra.mxu0 0.0
    %820 = vmatpush.msra.mxu0 0.0
    %821 = vmatpush.msra.mxu0 0.0
    %822 = vmatpush.msra.mxu0 0.0
    %823 = vmatpush.msra.mxu0 0.0
    %824 = vmatpush.msra.mxu0 0.0
    %825 = vmatpush.msra.mxu0 %v802
    %826 = vmatpush.msra.mxu0 %v801
    %827 = vmatpush.msra.mxu0 %v800
    %828 = vmatpush.msra.mxu0 %v799
    %829 = vmatmul.f32.gmra.mxu0 %v808
    %v830 = vpop.f32.mrf.mxu0
    %v831 = vadd.f32 %v805, %v830
    %832 = vmatmul.f32.gmra.mxu0 %v811
    %v833 = vpop.f32.mrf.mxu0
    %v834 = vadd.f32 %v805, %v833
    %835 = vdwg.mxu0
    %v836 = vadd.f32 %v196, %v831
    %v837 = vadd.f32 %v199, %v834
    %v838 = vld [vmem:[%s9] sm:$0x1]
    %v839 = vld [vmem:[%s10] sm:$0x1]
    %v840 = vsel %vm219, %v836, 0.0
    %841 = vadd.xlane.f32.xlu0 %v840
    %v842 = vpop.xlane.xlu0 %841
    %v843 = vsel %vm219, %v837, 0.0
    %844 = vadd.xlane.f32.xlu0 %v843
    %v845 = vpop.xlane.xlu0 %844
    %v846 = vrcp.pop 32.0
    %v847 = vmul.f32 32.0, %v846
    %v848 = vsub.f32 1.0, %v847
    %v849 = vmul.f32 %v846, %v848
    %v850 = vadd.f32 %v846, %v849
    %vm851 = vweird.f32 %v846
    %v852 = vsel %vm851, %v846, %v850
    %v853 = vmul.f32 %v842, %v852
    %v854 = vmul.f32 %v845, %v852
    %v855 = vsub.f32 %v836, %v853
    %v856 = vsub.f32 %v837, %v854
    %v857 = vmul.f32 %v855, %v855
    %v858 = vmul.f32 %v856, %v856
    %v859 = vsel %vm219, %v857, 0.0
    %860 = vadd.xlane.f32.xlu0 %v859
    %v861 = vpop.xlane.xlu0 %860
    %v862 = vsel %vm219, %v858, 0.0
    %863 = vadd.xlane.f32.xlu0 %v862
    %v864 = vpop.xlane.xlu0 %863
    %v865 = vmul.f32 %v861, %v852
    %v866 = vmul.f32 %v864, %v852
    %v867 = vadd.f32 %v865, 1e-05
    %v868 = vadd.f32 %v866, 1e-05
    %v869 = vrsqrt.pop %v867
    %v870 = vmul.f32 %v869, %v867
    %v871 = vmul.f32 %v870, %v869
    %v872 = vmul.f32 0.5, %v871
    %v873 = vsub.f32 1.5, %v872
    %v874 = vmul.f32 %v869, %v873
    %vm875 = vweird.f32 %v867
    %vm876 = vweird.f32 %v869
    %vm877 = vmor %vm875, %vm876
    %v878 = vsel %vm877, %v869, %v874
    %v879 = vrsqrt.pop %v868
    %v880 = vmul.f32 %v879, %v868
    %v881 = vmul.f32 %v880, %v879
    %v882 = vmul.f32 0.5, %v881
    %v883 = vsub.f32 1.5, %v882
    %v884 = vmul.f32 %v879, %v883
    %vm885 = vweird.f32 %v868
    %vm886 = vweird.f32 %v879
    %vm887 = vmor %vm885, %vm886
    %v888 = vsel %vm887, %v879, %v884
    %v889 = vmul.f32 %v855, %v878
    %v890 = vmul.f32 %v856, %v888
    %v892 = vperm.slane %v838, 0
    %v894 = vmul.f32 %v889, %v892
    %v895 = vmul.f32 %v890, %v892
    %v897 = vperm.slane %v839, 0
    %v899 = vadd.f32 %v894, %v897
    %v900 = vadd.f32 %v895, %v897
    %v901 = vld [vmem:[%s11] sm:$0xff]
    %v902 = vld [vmem:[%s11 + $0x8] sm:$0xff]
    %v903 = vld [vmem:[%s11 + $0x10] sm:$0xff]
    %v904 = vld [vmem:[%s11 + $0x18] sm:$0xff]
    %v905 = vld [vmem:[%s12] sm:$0x1]
    %v907 = vperm.slane %v905, 0
    %v910 = vsel %vm219, %v899, 0
    %v913 = vsel %vm219, %v900, 0
    %915 = vmatpush.msra.mxu0 0.0
    %916 = vmatpush.msra.mxu0 0.0
    %917 = vmatpush.msra.mxu0 0.0
    %918 = vmatpush.msra.mxu0 0.0
    %919 = vmatpush.msra.mxu0 0.0
    %920 = vmatpush.msra.mxu0 0.0
    %921 = vmatpush.msra.mxu0 0.0
    %922 = vmatpush.msra.mxu0 0.0
    %923 = vmatpush.msra.mxu0 0.0
    %924 = vmatpush.msra.mxu0 0.0
    %925 = vmatpush.msra.mxu0 0.0
    %926 = vmatpush.msra.mxu0 0.0
    %927 = vmatpush.msra.mxu0 %v904
    %928 = vmatpush.msra.mxu0 %v903
    %929 = vmatpush.msra.mxu0 %v902
    %930 = vmatpush.msra.mxu0 %v901
    %931 = vmatmul.f32.gmra.mxu0 %v910
    %v932 = vpop.f32.mrf.mxu0
    %v933 = vadd.f32 %v907, %v932
    %934 = vmatmul.f32.gmra.mxu0 %v913
    %v935 = vpop.f32.mrf.mxu0
    %v936 = vadd.f32 %v907, %v935
    %937 = vdwg.mxu0
    %v938 = vmax.f32 %v933, 0.0
    %v939 = vmax.f32 %v936, 0.0
    %v940 = vld [vmem:[%s13] sm:$0xff]
    %v941 = vld [vmem:[%s13 + $0x8] sm:$0xff]
    %v942 = vld [vmem:[%s13 + $0x10] sm:$0xff]
    %v943 = vld [vmem:[%s13 + $0x18] sm:$0xff]
    %v944 = vld [vmem:[%s13 + $0x20] sm:$0xff]
    %v945 = vld [vmem:[%s13 + $0x28] sm:$0xff]
    %v946 = vld [vmem:[%s13 + $0x30] sm:$0xff]
    %v947 = vld [vmem:[%s13 + $0x38] sm:$0xff]
    %v948 = vld [vmem:[#allocation11] sm:$0x1]
    %v950 = vperm.slane %v948, 0
    %vm952 = vcmask 523264
    %v954 = vsel %vm952, %v938, 0
    %v957 = vsel %vm952, %v939, 0
    %959 = vmatpush.msra.mxu0 0.0
    %960 = vmatpush.msra.mxu0 0.0
    %961 = vmatpush.msra.mxu0 0.0
    %962 = vmatpush.msra.mxu0 0.0
    %963 = vmatpush.msra.mxu0 0.0
    %964 = vmatpush.msra.mxu0 0.0
    %965 = vmatpush.msra.mxu0 0.0
    %966 = vmatpush.msra.mxu0 0.0
    %967 = vmatpush.msra.mxu0 %v947
    %968 = vmatpush.msra.mxu0 %v946
    %969 = vmatpush.msra.mxu0 %v945
    %970 = vmatpush.msra.mxu0 %v944
    %971 = vmatpush.msra.mxu0 %v943
    %972 = vmatpush.msra.mxu0 %v942
    %973 = vmatpush.msra.mxu0 %v941
    %974 = vmatpush.msra.mxu0 %v940
    %975 = vmatmul.f32.gmra.mxu0 %v954
    %v976 = vpop.f32.mrf.mxu0
    %v977 = vadd.f32 %v950, %v976
    %978 = vmatmul.f32.gmra.mxu0 %v957
    %v979 = vpop.f32.mrf.mxu0
    %v980 = vadd.f32 %v950, %v979
    %981 = vdwg.mxu0
    %v982 = vadd.f32 %v899, %v977
    %v983 = vadd.f32 %v900, %v980
    %v984 = vld [vmem:[%s15] sm:$0x1]
    %v985 = vld [vmem:[%s16] sm:$0x1]
    %v986 = vsel %vm219, %v982, 0.0
    %987 = vadd.xlane.f32.xlu0 %v986
    %v988 = vpop.xlane.xlu0 %987
    %v989 = vsel %vm219, %v983, 0.0
    %990 = vadd.xlane.f32.xlu0 %v989
    %v991 = vpop.xlane.xlu0 %990
    %v992 = vmul.f32 %v988, %v852
    %v993 = vmul.f32 %v991, %v852
    %v994 = vsub.f32 %v982, %v992
    %v995 = vsub.f32 %v983, %v993
    %v996 = vmul.f32 %v994, %v994
    %v997 = vmul.f32 %v995, %v995
    %v998 = vsel %vm219, %v996, 0.0
    %999 = vadd.xlane.f32.xlu0 %v998
    %v1000 = vpop.xlane.xlu0 %999
    %v1001 = vsel %vm219, %v997, 0.0
    %1002 = vadd.xlane.f32.xlu0 %v1001
    %v1003 = vpop.xlane.xlu0 %1002
    %v1004 = vmul.f32 %v1000, %v852
    %v1005 = vmul.f32 %v1003, %v852
    %v1006 = vadd.f32 %v1004, 1e-05
    %v1007 = vadd.f32 %v1005, 1e-05
    %v1008 = vrsqrt.pop %v1006
    %v1009 = vmul.f32 %v1008, %v1006
    %v1010 = vmul.f32 %v1009, %v1008
    %v1011 = vmul.f32 0.5, %v1010
    %v1012 = vsub.f32 1.5, %v1011
    %v1013 = vmul.f32 %v1008, %v1012
    %vm1014 = vweird.f32 %v1006
    %vm1015 = vweird.f32 %v1008
    %vm1016 = vmor %vm1014, %vm1015
    %v1017 = vsel %vm1016, %v1008, %v1013
    %v1018 = vrsqrt.pop %v1007
    %v1019 = vmul.f32 %v1018, %v1007
    %v1020 = vmul.f32 %v1019, %v1018
    %v1021 = vmul.f32 0.5, %v1020
    %v1022 = vsub.f32 1.5, %v1021
    %v1023 = vmul.f32 %v1018, %v1022
    %vm1024 = vweird.f32 %v1007
    %vm1025 = vweird.f32 %v1018
    %vm1026 = vmor %vm1024, %vm1025
    %v1027 = vsel %vm1026, %v1018, %v1023
    %v1028 = vmul.f32 %v994, %v1017
    %v1029 = vmul.f32 %v995, %v1027
    %v1031 = vperm.slane %v984, 0
    %v1033 = vmul.f32 %v1028, %v1031
    %v1034 = vmul.f32 %v1029, %v1031
    %v1036 = vperm.slane %v985, 0
    %v1038 = vadd.f32 %v1033, %v1036
    %v1039 = vadd.f32 %v1034, %v1036
    %s1040 = scalar_lea.vmem %s5, 32
    %v1041 = vld [vmem:[%s1040] sm:$0xff]
    %v1042 = vld [vmem:[%s1040 + $0x8] sm:$0xff]
    %v1043 = vld [vmem:[%s1040 + $0x10] sm:$0xff]
    %v1044 = vld [vmem:[%s1040 + $0x18] sm:$0xff]
    %s1045 = scalar_lea.vmem %s6, 1
    %v1046 = vld [vmem:[%s1045] sm:$0x1]
    %v1048 = vperm.slane %v1046, 0
    %v1051 = vsel %vm219, %v1038, 0
    %v1054 = vsel %vm219, %v1039, 0
    %1056 = vmatpush.msra.mxu0 0.0
    %1057 = vmatpush.msra.mxu0 0.0
    %1058 = vmatpush.msra.mxu0 0.0
    %1059 = vmatpush.msra.mxu0 0.0
    %1060 = vmatpush.msra.mxu0 0.0
    %1061 = vmatpush.msra.mxu0 0.0
    %1062 = vmatpush.msra.mxu0 0.0
    %1063 = vmatpush.msra.mxu0 0.0
    %1064 = vmatpush.msra.mxu0 0.0
    %1065 = vmatpush.msra.mxu0 0.0
    %1066 = vmatpush.msra.mxu0 0.0
    %1067 = vmatpush.msra.mxu0 0.0
    %1068 = vmatpush.msra.mxu0 %v1044
    %1069 = vmatpush.msra.mxu0 %v1043
    %1070 = vmatpush.msra.mxu0 %v1042
    %1071 = vmatpush.msra.mxu0 %v1041
    %1072 = vmatmul.f32.gmra.mxu0 %v1051
    %v1073 = vpop.f32.mrf.mxu0
    %v1074 = vadd.f32 %v1048, %v1073
    %1075 = vmatmul.f32.gmra.mxu0 %v1054
    %v1076 = vpop.f32.mrf.mxu0
    %v1077 = vadd.f32 %v1048, %v1076
    %1078 = vdwg.mxu0
    %1080 = vrot.lane.b32.xlu0 %v1074, 96
    %v1081 = vpop.permute.xlu0 %1080
    %v1082 = vsel %vm171, %v1074, 0
    %v1084 = vsel %vm171, %v1081, 0
    %1086 = vmatpush.xpose.msra.mxu0 0.0
    %1087 = vmatpush.xpose.msra.mxu0 0.0
    %1088 = vmatpush.xpose.msra.mxu0 0.0
    %1089 = vmatpush.xpose.msra.mxu0 0.0
    %1090 = vmatpush.xpose.msra.mxu0 0.0
    %1091 = vmatpush.xpose.msra.mxu0 0.0
    %1092 = vmatpush.xpose.msra.mxu0 0.0
    %1093 = vmatpush.xpose.msra.mxu0 0.0
    %1094 = vmatpush.xpose.msra.mxu0 0.0
    %1095 = vmatpush.xpose.msra.mxu0 0.0
    %1096 = vmatpush.xpose.msra.mxu0 0.0
    %1097 = vmatpush.xpose.msra.mxu0 0.0
    %1098 = vmatpush.xpose.msra.mxu0 0.0
    %1099 = vmatpush.xpose.msra.mxu0 0.0
    %1100 = vmatpush.xpose.msra.mxu0 0.0
    %1101 = vmatpush.xpose.msra.mxu0 %v1084
    %1102 = vmatmul.f32.gmra.mxu0 %v1082
    %v1103 = vpop.f32.mrf.mxu0
    %v1104 = vadd.f32 %v209, %v1103
    %1105 = vdwg.mxu0
    %1107 = vrot.lane.b32.xlu0 %v1077, 96
    %v1108 = vpop.permute.xlu0 %1107
    %v1109 = vsel %vm171, %v1077, 0
    %v1111 = vsel %vm171, %v1108, 0
    %1113 = vmatpush.xpose.msra.mxu0 0.0
    %1114 = vmatpush.xpose.msra.mxu0 0.0
    %1115 = vmatpush.xpose.msra.mxu0 0.0
    %1116 = vmatpush.xpose.msra.mxu0 0.0
    %1117 = vmatpush.xpose.msra.mxu0 0.0
    %1118 = vmatpush.xpose.msra.mxu0 0.0
    %1119 = vmatpush.xpose.msra.mxu0 0.0
    %1120 = vmatpush.xpose.msra.mxu0 0.0
    %1121 = vmatpush.xpose.msra.mxu0 0.0
    %1122 = vmatpush.xpose.msra.mxu0 0.0
    %1123 = vmatpush.xpose.msra.mxu0 0.0
    %1124 = vmatpush.xpose.msra.mxu0 0.0
    %1125 = vmatpush.xpose.msra.mxu0 0.0
    %1126 = vmatpush.xpose.msra.mxu0 0.0
    %1127 = vmatpush.xpose.msra.mxu0 0.0
    %1128 = vmatpush.xpose.msra.mxu0 %v1111
    %1129 = vmatmul.f32.gmra.mxu0 %v1109
    %v1130 = vpop.f32.mrf.mxu0
    %v1131 = vadd.f32 %v210, %v1130
    %1132 = vdwg.mxu0
    %v1133 = vsel %vm171, %v1104, -inf
    %1134 = vmax.xlane.f32.xlu0 %v1133
    %v1135 = vpop.xlane.xlu0 %1134
    %v1136 = vsel %vm171, %v1131, -inf
    %1137 = vmax.xlane.f32.xlu0 %v1136
    %v1138 = vpop.xlane.xlu0 %1137
    %v1139 = vsub.f32 %v1104, %v1135
    %v1140 = vsub.f32 %v1131, %v1138
    %v1141 = vmul.f32 %v1139, 1.442695
    %v1142 = vpow.pop %v1141
    %v1143 = vmul.f32 %v1140, 1.442695
    %v1144 = vpow.pop %v1143
    %v1145 = vsel %vm171, %v1142, 0.0
    %1146 = vadd.xlane.f32.xlu0 %v1145
    %v1147 = vpop.xlane.xlu0 %1146
    %v1148 = vsel %vm171, %v1144, 0.0
    %1149 = vadd.xlane.f32.xlu0 %v1148
    %v1150 = vpop.xlane.xlu0 %1149
    %v1151 = vrcp.pop %v1147
    %v1152 = vrcp.pop %v1150
    %v1153 = vmul.f32 %v1142, %v1151
    %v1154 = vmul.f32 %v1144, %v1152
    %1155 = vrot.lane.b32.xlu0 %v1074, 64
    %v1156 = vpop.permute.xlu0 %1155
    %v1159 = vsel %vm171, %v1153, 0
    %1161 = vmatpush.msra.mxu0 0.0
    %1162 = vmatpush.msra.mxu0 0.0
    %1163 = vmatpush.msra.mxu0 0.0
    %1164 = vmatpush.msra.mxu0 0.0
    %1165 = vmatpush.msra.mxu0 0.0
    %1166 = vmatpush.msra.mxu0 0.0
    %1167 = vmatpush.msra.mxu0 0.0
    %1168 = vmatpush.msra.mxu0 0.0
    %1169 = vmatpush.msra.mxu0 0.0
    %1170 = vmatpush.msra.mxu0 0.0
    %1171 = vmatpush.msra.mxu0 0.0
    %1172 = vmatpush.msra.mxu0 0.0
    %1173 = vmatpush.msra.mxu0 0.0
    %1174 = vmatpush.msra.mxu0 0.0
    %1175 = vmatpush.msra.mxu0 0.0
    %1176 = vmatpush.msra.mxu0 %v1156
    %1177 = vmatmul.f32.gmra.mxu0 %v1159
    %v1178 = vpop.f32.mrf.mxu0
    %v1179 = vadd.f32 0.0, %v1178
    %1180 = vdwg.mxu0
    %1181 = vrot.lane.b32.xlu0 %v1077, 64
    %v1182 = vpop.permute.xlu0 %1181
    %v1185 = vsel %vm171, %v1154, 0
    %1187 = vmatpush.msra.mxu0 0.0
    %1188 = vmatpush.msra.mxu0 0.0
    %1189 = vmatpush.msra.mxu0 0.0
    %1190 = vmatpush.msra.mxu0 0.0
    %1191 = vmatpush.msra.mxu0 0.0
    %1192 = vmatpush.msra.mxu0 0.0
    %1193 = vmatpush.msra.mxu0 0.0
    %1194 = vmatpush.msra.mxu0 0.0
    %1195 = vmatpush.msra.mxu0 0.0
    %1196 = vmatpush.msra.mxu0 0.0
    %1197 = vmatpush.msra.mxu0 0.0
    %1198 = vmatpush.msra.mxu0 0.0
    %1199 = vmatpush.msra.mxu0 0.0
    %1200 = vmatpush.msra.mxu0 0.0
    %1201 = vmatpush.msra.mxu0 0.0
    %1202 = vmatpush.msra.mxu0 %v1182
    %1203 = vmatmul.f32.gmra.mxu0 %v1185
    %v1204 = vpop.f32.mrf.mxu0
    %v1205 = vadd.f32 0.0, %v1204
    %1206 = vdwg.mxu0
    %1207 = vrot.lane.b32.xlu0 %v1074, 120
    %v1208 = vpop.permute.xlu0 %1207
    %1209 = vrot.lane.b32.xlu0 %v1074, 88
    %v1210 = vpop.permute.xlu0 %1209
    %v1211 = vsel %vm171, %v1208, 0
    %v1213 = vsel %vm171, %v1210, 0
    %1215 = vmatpush.xpose.msra.mxu0 0.0
    %1216 = vmatpush.xpose.msra.mxu0 0.0
    %1217 = vmatpush.xpose.msra.mxu0 0.0
    %1218 = vmatpush.xpose.msra.mxu0 0.0
    %1219 = vmatpush.xpose.msra.mxu0 0.0
    %1220 = vmatpush.xpose.msra.mxu0 0.0
    %1221 = vmatpush.xpose.msra.mxu0 0.0
    %1222 = vmatpush.xpose.msra.mxu0 0.0
    %1223 = vmatpush.xpose.msra.mxu0 0.0
    %1224 = vmatpush.xpose.msra.mxu0 0.0
    %1225 = vmatpush.xpose.msra.mxu0 0.0
    %1226 = vmatpush.xpose.msra.mxu0 0.0
    %1227 = vmatpush.xpose.msra.mxu0 0.0
    %1228 = vmatpush.xpose.msra.mxu0 0.0
    %1229 = vmatpush.xpose.msra.mxu0 0.0
    %1230 = vmatpush.xpose.msra.mxu0 %v1213
    %1231 = vmatmul.f32.gmra.mxu0 %v1211
    %v1232 = vpop.f32.mrf.mxu0
    %v1233 = vadd.f32 %v209, %v1232
    %1234 = vdwg.mxu0
    %1235 = vrot.lane.b32.xlu0 %v1077, 120
    %v1236 = vpop.permute.xlu0 %1235
    %1237 = vrot.lane.b32.xlu0 %v1077, 88
    %v1238 = vpop.permute.xlu0 %1237
    %v1239 = vsel %vm171, %v1236, 0
    %v1241 = vsel %vm171, %v1238, 0
    %1243 = vmatpush.xpose.msra.mxu0 0.0
    %1244 = vmatpush.xpose.msra.mxu0 0.0
    %1245 = vmatpush.xpose.msra.mxu0 0.0
    %1246 = vmatpush.xpose.msra.mxu0 0.0
    %1247 = vmatpush.xpose.msra.mxu0 0.0
    %1248 = vmatpush.xpose.msra.mxu0 0.0
    %1249 = vmatpush.xpose.msra.mxu0 0.0
    %1250 = vmatpush.xpose.msra.mxu0 0.0
    %1251 = vmatpush.xpose.msra.mxu0 0.0
    %1252 = vmatpush.xpose.msra.mxu0 0.0
    %1253 = vmatpush.xpose.msra.mxu0 0.0
    %1254 = vmatpush.xpose.msra.mxu0 0.0
    %1255 = vmatpush.xpose.msra.mxu0 0.0
    %1256 = vmatpush.xpose.msra.mxu0 0.0
    %1257 = vmatpush.xpose.msra.mxu0 0.0
    %1258 = vmatpush.xpose.msra.mxu0 %v1241
    %1259 = vmatmul.f32.gmra.mxu0 %v1239
    %v1260 = vpop.f32.mrf.mxu0
    %v1261 = vadd.f32 %v210, %v1260
    %1262 = vdwg.mxu0
    %v1263 = vsel %vm171, %v1233, -inf
    %1264 = vmax.xlane.f32.xlu0 %v1263
    %v1265 = vpop.xlane.xlu0 %1264
    %v1266 = vsel %vm171, %v1261, -inf
    %1267 = vmax.xlane.f32.xlu0 %v1266
    %v1268 = vpop.xlane.xlu0 %1267
    %v1269 = vsub.f32 %v1233, %v1265
    %v1270 = vsub.f32 %v1261, %v1268
    %v1271 = vmul.f32 %v1269, 1.442695
    %v1272 = vpow.pop %v1271
    %v1273 = vmul.f32 %v1270, 1.442695
    %v1274 = vpow.pop %v1273
    %v1275 = vsel %vm171, %v1272, 0.0
    %1276 = vadd.xlane.f32.xlu0 %v1275
    %v1277 = vpop.xlane.xlu0 %1276
    %v1278 = vsel %vm171, %v1274, 0.0
    %1279 = vadd.xlane.f32.xlu0 %v1278
    %v1280 = vpop.xlane.xlu0 %1279
    %v1281 = vrcp.pop %v1277
    %v1282 = vrcp.pop %v1280
    %v1283 = vmul.f32 %v1272, %v1281
    %v1284 = vmul.f32 %v1274, %v1282
    %1285 = vrot.lane.b32.xlu0 %v1074, 56
    %v1286 = vpop.permute.xlu0 %1285
    %v1289 = vsel %vm171, %v1283, 0
    %1291 = vmatpush.msra.mxu0 0.0
    %1292 = vmatpush.msra.mxu0 0.0
    %1293 = vmatpush.msra.mxu0 0.0
    %1294 = vmatpush.msra.mxu0 0.0
    %1295 = vmatpush.msra.mxu0 0.0
    %1296 = vmatpush.msra.mxu0 0.0
    %1297 = vmatpush.msra.mxu0 0.0
    %1298 = vmatpush.msra.mxu0 0.0
    %1299 = vmatpush.msra.mxu0 0.0
    %1300 = vmatpush.msra.mxu0 0.0
    %1301 = vmatpush.msra.mxu0 0.0
    %1302 = vmatpush.msra.mxu0 0.0
    %1303 = vmatpush.msra.mxu0 0.0
    %1304 = vmatpush.msra.mxu0 0.0
    %1305 = vmatpush.msra.mxu0 0.0
    %1306 = vmatpush.msra.mxu0 %v1286
    %1307 = vmatmul.f32.gmra.mxu0 %v1289
    %v1308 = vpop.f32.mrf.mxu0
    %v1309 = vadd.f32 0.0, %v1308
    %1310 = vdwg.mxu0
    %1311 = vrot.lane.b32.xlu0 %v1077, 56
    %v1312 = vpop.permute.xlu0 %1311
    %v1315 = vsel %vm171, %v1284, 0
    %1317 = vmatpush.msra.mxu0 0.0
    %1318 = vmatpush.msra.mxu0 0.0
    %1319 = vmatpush.msra.mxu0 0.0
    %1320 = vmatpush.msra.mxu0 0.0
    %1321 = vmatpush.msra.mxu0 0.0
    %1322 = vmatpush.msra.mxu0 0.0
    %1323 = vmatpush.msra.mxu0 0.0
    %1324 = vmatpush.msra.mxu0 0.0
    %1325 = vmatpush.msra.mxu0 0.0
    %1326 = vmatpush.msra.mxu0 0.0
    %1327 = vmatpush.msra.mxu0 0.0
    %1328 = vmatpush.msra.mxu0 0.0
    %1329 = vmatpush.msra.mxu0 0.0
    %1330 = vmatpush.msra.mxu0 0.0
    %1331 = vmatpush.msra.mxu0 0.0
    %1332 = vmatpush.msra.mxu0 %v1312
    %1333 = vmatmul.f32.gmra.mxu0 %v1315
    %v1334 = vpop.f32.mrf.mxu0
    %v1335 = vadd.f32 0.0, %v1334
    %1336 = vdwg.mxu0
    %1337 = vrot.lane.b32.xlu0 %v1074, 112
    %v1338 = vpop.permute.xlu0 %1337
    %1339 = vrot.lane.b32.xlu0 %v1074, 80
    %v1340 = vpop.permute.xlu0 %1339
    %v1341 = vsel %vm171, %v1338, 0
    %v1343 = vsel %vm171, %v1340, 0
    %1345 = vmatpush.xpose.msra.mxu0 0.0
    %1346 = vmatpush.xpose.msra.mxu0 0.0
    %1347 = vmatpush.xpose.msra.mxu0 0.0
    %1348 = vmatpush.xpose.msra.mxu0 0.0
    %1349 = vmatpush.xpose.msra.mxu0 0.0
    %1350 = vmatpush.xpose.msra.mxu0 0.0
    %1351 = vmatpush.xpose.msra.mxu0 0.0
    %1352 = vmatpush.xpose.msra.mxu0 0.0
    %1353 = vmatpush.xpose.msra.mxu0 0.0
    %1354 = vmatpush.xpose.msra.mxu0 0.0
    %1355 = vmatpush.xpose.msra.mxu0 0.0
    %1356 = vmatpush.xpose.msra.mxu0 0.0
    %1357 = vmatpush.xpose.msra.mxu0 0.0
    %1358 = vmatpush.xpose.msra.mxu0 0.0
    %1359 = vmatpush.xpose.msra.mxu0 0.0
    %1360 = vmatpush.xpose.msra.mxu0 %v1343
    %1361 = vmatmul.f32.gmra.mxu0 %v1341
    %v1362 = vpop.f32.mrf.mxu0
    %v1363 = vadd.f32 %v209, %v1362
    %1364 = vdwg.mxu0
    %1365 = vrot.lane.b32.xlu0 %v1077, 112
    %v1366 = vpop.permute.xlu0 %1365
    %1367 = vrot.lane.b32.xlu0 %v1077, 80
    %v1368 = vpop.permute.xlu0 %1367
    %v1369 = vsel %vm171, %v1366, 0
    %v1371 = vsel %vm171, %v1368, 0
    %1373 = vmatpush.xpose.msra.mxu0 0.0
    %1374 = vmatpush.xpose.msra.mxu0 0.0
    %1375 = vmatpush.xpose.msra.mxu0 0.0
    %1376 = vmatpush.xpose.msra.mxu0 0.0
    %1377 = vmatpush.xpose.msra.mxu0 0.0
    %1378 = vmatpush.xpose.msra.mxu0 0.0
    %1379 = vmatpush.xpose.msra.mxu0 0.0
    %1380 = vmatpush.xpose.msra.mxu0 0.0
    %1381 = vmatpush.xpose.msra.mxu0 0.0
    %1382 = vmatpush.xpose.msra.mxu0 0.0
    %1383 = vmatpush.xpose.msra.mxu0 0.0
    %1384 = vmatpush.xpose.msra.mxu0 0.0
    %1385 = vmatpush.xpose.msra.mxu0 0.0
    %1386 = vmatpush.xpose.msra.mxu0 0.0
    %1387 = vmatpush.xpose.msra.mxu0 0.0
    %1388 = vmatpush.xpose.msra.mxu0 %v1371
    %1389 = vmatmul.f32.gmra.mxu0 %v1369
    %v1390 = vpop.f32.mrf.mxu0
    %v1391 = vadd.f32 %v210, %v1390
    %1392 = vdwg.mxu0
    %v1393 = vsel %vm171, %v1363, -inf
    %1394 = vmax.xlane.f32.xlu0 %v1393
    %v1395 = vpop.xlane.xlu0 %1394
    %v1396 = vsel %vm171, %v1391, -inf
    %1397 = vmax.xlane.f32.xlu0 %v1396
    %v1398 = vpop.xlane.xlu0 %1397
    %v1399 = vsub.f32 %v1363, %v1395
    %v1400 = vsub.f32 %v1391, %v1398
    %v1401 = vmul.f32 %v1399, 1.442695
    %v1402 = vpow.pop %v1401
    %v1403 = vmul.f32 %v1400, 1.442695
    %v1404 = vpow.pop %v1403
    %v1405 = vsel %vm171, %v1402, 0.0
    %1406 = vadd.xlane.f32.xlu0 %v1405
    %v1407 = vpop.xlane.xlu0 %1406
    %v1408 = vsel %vm171, %v1404, 0.0
    %1409 = vadd.xlane.f32.xlu0 %v1408
    %v1410 = vpop.xlane.xlu0 %1409
    %v1411 = vrcp.pop %v1407
    %v1412 = vrcp.pop %v1410
    %v1413 = vmul.f32 %v1402, %v1411
    %v1414 = vmul.f32 %v1404, %v1412
    %1415 = vrot.lane.b32.xlu0 %v1074, 48
    %v1416 = vpop.permute.xlu0 %1415
    %v1419 = vsel %vm171, %v1413, 0
    %1421 = vmatpush.msra.mxu0 0.0
    %1422 = vmatpush.msra.mxu0 0.0
    %1423 = vmatpush.msra.mxu0 0.0
    %1424 = vmatpush.msra.mxu0 0.0
    %1425 = vmatpush.msra.mxu0 0.0
    %1426 = vmatpush.msra.mxu0 0.0
    %1427 = vmatpush.msra.mxu0 0.0
    %1428 = vmatpush.msra.mxu0 0.0
    %1429 = vmatpush.msra.mxu0 0.0
    %1430 = vmatpush.msra.mxu0 0.0
    %1431 = vmatpush.msra.mxu0 0.0
    %1432 = vmatpush.msra.mxu0 0.0
    %1433 = vmatpush.msra.mxu0 0.0
    %1434 = vmatpush.msra.mxu0 0.0
    %1435 = vmatpush.msra.mxu0 0.0
    %1436 = vmatpush.msra.mxu0 %v1416
    %1437 = vmatmul.f32.gmra.mxu0 %v1419
    %v1438 = vpop.f32.mrf.mxu0
    %v1439 = vadd.f32 0.0, %v1438
    %1440 = vdwg.mxu0
    %1441 = vrot.lane.b32.xlu0 %v1077, 48
    %v1442 = vpop.permute.xlu0 %1441
    %v1445 = vsel %vm171, %v1414, 0
    %1447 = vmatpush.msra.mxu0 0.0
    %1448 = vmatpush.msra.mxu0 0.0
    %1449 = vmatpush.msra.mxu0 0.0
    %1450 = vmatpush.msra.mxu0 0.0
    %1451 = vmatpush.msra.mxu0 0.0
    %1452 = vmatpush.msra.mxu0 0.0
    %1453 = vmatpush.msra.mxu0 0.0
    %1454 = vmatpush.msra.mxu0 0.0
    %1455 = vmatpush.msra.mxu0 0.0
    %1456 = vmatpush.msra.mxu0 0.0
    %1457 = vmatpush.msra.mxu0 0.0
    %1458 = vmatpush.msra.mxu0 0.0
    %1459 = vmatpush.msra.mxu0 0.0
    %1460 = vmatpush.msra.mxu0 0.0
    %1461 = vmatpush.msra.mxu0 0.0
    %1462 = vmatpush.msra.mxu0 %v1442
    %1463 = vmatmul.f32.gmra.mxu0 %v1445
    %v1464 = vpop.f32.mrf.mxu0
    %v1465 = vadd.f32 0.0, %v1464
    %1466 = vdwg.mxu0
    %1467 = vrot.lane.b32.xlu0 %v1074, 104
    %v1468 = vpop.permute.xlu0 %1467
    %1469 = vrot.lane.b32.xlu0 %v1074, 72
    %v1470 = vpop.permute.xlu0 %1469
    %v1471 = vsel %vm171, %v1468, 0
    %v1473 = vsel %vm171, %v1470, 0
    %1475 = vmatpush.xpose.msra.mxu0 0.0
    %1476 = vmatpush.xpose.msra.mxu0 0.0
    %1477 = vmatpush.xpose.msra.mxu0 0.0
    %1478 = vmatpush.xpose.msra.mxu0 0.0
    %1479 = vmatpush.xpose.msra.mxu0 0.0
    %1480 = vmatpush.xpose.msra.mxu0 0.0
    %1481 = vmatpush.xpose.msra.mxu0 0.0
    %1482 = vmatpush.xpose.msra.mxu0 0.0
    %1483 = vmatpush.xpose.msra.mxu0 0.0
    %1484 = vmatpush.xpose.msra.mxu0 0.0
    %1485 = vmatpush.xpose.msra.mxu0 0.0
    %1486 = vmatpush.xpose.msra.mxu0 0.0
    %1487 = vmatpush.xpose.msra.mxu0 0.0
    %1488 = vmatpush.xpose.msra.mxu0 0.0
    %1489 = vmatpush.xpose.msra.mxu0 0.0
    %1490 = vmatpush.xpose.msra.mxu0 %v1473
    %1491 = vmatmul.f32.gmra.mxu0 %v1471
    %v1492 = vpop.f32.mrf.mxu0
    %v1493 = vadd.f32 %v209, %v1492
    %1494 = vdwg.mxu0
    %1495 = vrot.lane.b32.xlu0 %v1077, 104
    %v1496 = vpop.permute.xlu0 %1495
    %1497 = vrot.lane.b32.xlu0 %v1077, 72
    %v1498 = vpop.permute.xlu0 %1497
    %v1499 = vsel %vm171, %v1496, 0
    %v1501 = vsel %vm171, %v1498, 0
    %1503 = vmatpush.xpose.msra.mxu0 0.0
    %1504 = vmatpush.xpose.msra.mxu0 0.0
    %1505 = vmatpush.xpose.msra.mxu0 0.0
    %1506 = vmatpush.xpose.msra.mxu0 0.0
    %1507 = vmatpush.xpose.msra.mxu0 0.0
    %1508 = vmatpush.xpose.msra.mxu0 0.0
    %1509 = vmatpush.xpose.msra.mxu0 0.0
    %1510 = vmatpush.xpose.msra.mxu0 0.0
    %1511 = vmatpush.xpose.msra.mxu0 0.0
    %1512 = vmatpush.xpose.msra.mxu0 0.0
    %1513 = vmatpush.xpose.msra.mxu0 0.0
    %1514 = vmatpush.xpose.msra.mxu0 0.0
    %1515 = vmatpush.xpose.msra.mxu0 0.0
    %1516 = vmatpush.xpose.msra.mxu0 0.0
    %1517 = vmatpush.xpose.msra.mxu0 0.0
    %1518 = vmatpush.xpose.msra.mxu0 %v1501
    %1519 = vmatmul.f32.gmra.mxu0 %v1499
    %v1520 = vpop.f32.mrf.mxu0
    %v1521 = vadd.f32 %v210, %v1520
    %1522 = vdwg.mxu0
    %v1523 = vsel %vm171, %v1493, -inf
    %1524 = vmax.xlane.f32.xlu0 %v1523
    %v1525 = vpop.xlane.xlu0 %1524
    %v1526 = vsel %vm171, %v1521, -inf
    %1527 = vmax.xlane.f32.xlu0 %v1526
    %v1528 = vpop.xlane.xlu0 %1527
    %v1529 = vsub.f32 %v1493, %v1525
    %v1530 = vsub.f32 %v1521, %v1528
    %v1531 = vmul.f32 %v1529, 1.442695
    %v1532 = vpow.pop %v1531
    %v1533 = vmul.f32 %v1530, 1.442695
    %v1534 = vpow.pop %v1533
    %v1535 = vsel %vm171, %v1532, 0.0
    %1536 = vadd.xlane.f32.xlu0 %v1535
    %v1537 = vpop.xlane.xlu0 %1536
    %v1538 = vsel %vm171, %v1534, 0.0
    %1539 = vadd.xlane.f32.xlu0 %v1538
    %v1540 = vpop.xlane.xlu0 %1539
    %v1541 = vrcp.pop %v1537
    %v1542 = vrcp.pop %v1540
    %v1543 = vmul.f32 %v1532, %v1541
    %v1544 = vmul.f32 %v1534, %v1542
    %1545 = vrot.lane.b32.xlu0 %v1074, 40
    %v1546 = vpop.permute.xlu0 %1545
    %v1549 = vsel %vm171, %v1543, 0
    %1551 = vmatpush.msra.mxu0 0.0
    %1552 = vmatpush.msra.mxu0 0.0
    %1553 = vmatpush.msra.mxu0 0.0
    %1554 = vmatpush.msra.mxu0 0.0
    %1555 = vmatpush.msra.mxu0 0.0
    %1556 = vmatpush.msra.mxu0 0.0
    %1557 = vmatpush.msra.mxu0 0.0
    %1558 = vmatpush.msra.mxu0 0.0
    %1559 = vmatpush.msra.mxu0 0.0
    %1560 = vmatpush.msra.mxu0 0.0
    %1561 = vmatpush.msra.mxu0 0.0
    %1562 = vmatpush.msra.mxu0 0.0
    %1563 = vmatpush.msra.mxu0 0.0
    %1564 = vmatpush.msra.mxu0 0.0
    %1565 = vmatpush.msra.mxu0 0.0
    %1566 = vmatpush.msra.mxu0 %v1546
    %1567 = vmatmul.f32.gmra.mxu0 %v1549
    %v1568 = vpop.f32.mrf.mxu0
    %v1569 = vadd.f32 0.0, %v1568
    %1570 = vdwg.mxu0
    %1571 = vrot.lane.b32.xlu0 %v1077, 40
    %v1572 = vpop.permute.xlu0 %1571
    %v1575 = vsel %vm171, %v1544, 0
    %1577 = vmatpush.msra.mxu0 0.0
    %1578 = vmatpush.msra.mxu0 0.0
    %1579 = vmatpush.msra.mxu0 0.0
    %1580 = vmatpush.msra.mxu0 0.0
    %1581 = vmatpush.msra.mxu0 0.0
    %1582 = vmatpush.msra.mxu0 0.0
    %1583 = vmatpush.msra.mxu0 0.0
    %1584 = vmatpush.msra.mxu0 0.0
    %1585 = vmatpush.msra.mxu0 0.0
    %1586 = vmatpush.msra.mxu0 0.0
    %1587 = vmatpush.msra.mxu0 0.0
    %1588 = vmatpush.msra.mxu0 0.0
    %1589 = vmatpush.msra.mxu0 0.0
    %1590 = vmatpush.msra.mxu0 0.0
    %1591 = vmatpush.msra.mxu0 0.0
    %1592 = vmatpush.msra.mxu0 %v1572
    %1593 = vmatmul.f32.gmra.mxu0 %v1575
    %v1594 = vpop.f32.mrf.mxu0
    %v1595 = vadd.f32 0.0, %v1594
    %1596 = vdwg.mxu0
    %1599 = vrot.lane.b32.xlu0 %v1309, 8
    %v1600 = vpop.permute.xlu0 %1599
    %1601 = vrot.lane.b32.xlu0 %v1335, 8
    %v1602 = vpop.permute.xlu0 %1601
    %1607 = vrot.lane.b32.xlu0 %v1439, 16
    %v1608 = vpop.permute.xlu0 %1607
    %1609 = vrot.lane.b32.xlu0 %v1465, 16
    %v1610 = vpop.permute.xlu0 %1609
    %1615 = vrot.lane.b32.xlu0 %v1569, 24
    %v1616 = vpop.permute.xlu0 %1615
    %1617 = vrot.lane.b32.xlu0 %v1595, 24
    %v1618 = vpop.permute.xlu0 %1617
    %v1621 = vsel %vm171, %v1179, %v1600
    %v1622 = vsel %vm171, %v1205, %v1602
    %v1623 = vsel %vm793, %v1621, %v1608
    %v1624 = vsel %vm793, %v1622, %v1610
    %v1625 = vsel %vm796, %v1623, %v1616
    %v1626 = vsel %vm796, %v1624, %v1618
    %s1627 = scalar_lea.vmem %s7, 32
    %v1628 = vld [vmem:[%s1627] sm:$0xff]
    %v1629 = vld [vmem:[%s1627 + $0x8] sm:$0xff]
    %v1630 = vld [vmem:[%s1627 + $0x10] sm:$0xff]
    %v1631 = vld [vmem:[%s1627 + $0x18] sm:$0xff]
    %s1632 = scalar_lea.vmem %s8, 1
    %v1633 = vld [vmem:[%s1632] sm:$0x1]
    %v1635 = vperm.slane %v1633, 0
    %v1638 = vsel %vm219, %v1625, 0
    %v1641 = vsel %vm219, %v1626, 0
    %1643 = vmatpush.msra.mxu0 0.0
    %1644 = vmatpush.msra.mxu0 0.0
    %1645 = vmatpush.msra.mxu0 0.0
    %1646 = vmatpush.msra.mxu0 0.0
    %1647 = vmatpush.msra.mxu0 0.0
    %1648 = vmatpush.msra.mxu0 0.0
    %1649 = vmatpush.msra.mxu0 0.0
    %1650 = vmatpush.msra.mxu0 0.0
    %1651 = vmatpush.msra.mxu0 0.0
    %1652 = vmatpush.msra.mxu0 0.0
    %1653 = vmatpush.msra.mxu0 0.0
    %1654 = vmatpush.msra.mxu0 0.0
    %1655 = vmatpush.msra.mxu0 %v1631
    %1656 = vmatpush.msra.mxu0 %v1630
    %1657 = vmatpush.msra.mxu0 %v1629
    %1658 = vmatpush.msra.mxu0 %v1628
    %1659 = vmatmul.f32.gmra.mxu0 %v1638
    %v1660 = vpop.f32.mrf.mxu0
    %v1661 = vadd.f32 %v1635, %v1660
    %1662 = vmatmul.f32.gmra.mxu0 %v1641
    %v1663 = vpop.f32.mrf.mxu0
    %v1664 = vadd.f32 %v1635, %v1663
    %1665 = vdwg.mxu0
    %v1666 = vadd.f32 %v1038, %v1661
    %v1667 = vadd.f32 %v1039, %v1664
    %s1668 = scalar_lea.vmem %s9, 1
    %v1669 = vld [vmem:[%s1668] sm:$0x1]
    %s1670 = scalar_lea.vmem %s10, 1
    %v1671 = vld [vmem:[%s1670] sm:$0x1]
    %v1672 = vsel %vm219, %v1666, 0.0
    %1673 = vadd.xlane.f32.xlu0 %v1672
    %v1674 = vpop.xlane.xlu0 %1673
    %v1675 = vsel %vm219, %v1667, 0.0
    %1676 = vadd.xlane.f32.xlu0 %v1675
    %v1677 = vpop.xlane.xlu0 %1676
    %v1678 = vmul.f32 %v1674, %v852
    %v1679 = vmul.f32 %v1677, %v852
    %v1680 = vsub.f32 %v1666, %v1678
    %v1681 = vsub.f32 %v1667, %v1679
    %v1682 = vmul.f32 %v1680, %v1680
    %v1683 = vmul.f32 %v1681, %v1681
    %v1684 = vsel %vm219, %v1682, 0.0
    %1685 = vadd.xlane.f32.xlu0 %v1684
    %v1686 = vpop.xlane.xlu0 %1685
    %v1687 = vsel %vm219, %v1683, 0.0
    %1688 = vadd.xlane.f32.xlu0 %v1687
    %v1689 = vpop.xlane.xlu0 %1688
    %v1690 = vmul.f32 %v1686, %v852
    %v1691 = vmul.f32 %v1689, %v852
    %v1692 = vadd.f32 %v1690, 1e-05
    %v1693 = vadd.f32 %v1691, 1e-05
    %v1694 = vrsqrt.pop %v1692
    %v1695 = vmul.f32 %v1694, %v1692
    %v1696 = vmul.f32 %v1695, %v1694
    %v1697 = vmul.f32 0.5, %v1696
    %v1698 = vsub.f32 1.5, %v1697
    %v1699 = vmul.f32 %v1694, %v1698
    %vm1700 = vweird.f32 %v1692
    %vm1701 = vweird.f32 %v1694
    %vm1702 = vmor %vm1700, %vm1701
    %v1703 = vsel %vm1702, %v1694, %v1699
    %v1704 = vrsqrt.pop %v1693
    %v1705 = vmul.f32 %v1704, %v1693
    %v1706 = vmul.f32 %v1705, %v1704
    %v1707 = vmul.f32 0.5, %v1706
    %v1708 = vsub.f32 1.5, %v1707
    %v1709 = vmul.f32 %v1704, %v1708
    %vm1710 = vweird.f32 %v1693
    %vm1711 = vweird.f32 %v1704
    %vm1712 = vmor %vm1710, %vm1711
    %v1713 = vsel %vm1712, %v1704, %v1709
    %v1714 = vmul.f32 %v1680, %v1703
    %v1715 = vmul.f32 %v1681, %v1713
    %v1717 = vperm.slane %v1669, 0
    %v1719 = vmul.f32 %v1714, %v1717
    %v1720 = vmul.f32 %v1715, %v1717
    %v1722 = vperm.slane %v1671, 0
    %v1724 = vadd.f32 %v1719, %v1722
    %v1725 = vadd.f32 %v1720, %v1722
    %s1726 = scalar_lea.vmem %s11, 32
    %v1727 = vld [vmem:[%s1726] sm:$0xff]
    %v1728 = vld [vmem:[%s1726 + $0x8] sm:$0xff]
    %v1729 = vld [vmem:[%s1726 + $0x10] sm:$0xff]
    %v1730 = vld [vmem:[%s1726 + $0x18] sm:$0xff]
    %s1731 = scalar_lea.vmem %s12, 1
    %v1732 = vld [vmem:[%s1731] sm:$0x1]
    %v1734 = vperm.slane %v1732, 0
    %v1737 = vsel %vm219, %v1724, 0
    %v1740 = vsel %vm219, %v1725, 0
    %1742 = vmatpush.msra.mxu0 0.0
    %1743 = vmatpush.msra.mxu0 0.0
    %1744 = vmatpush.msra.mxu0 0.0
    %1745 = vmatpush.msra.mxu0 0.0
    %1746 = vmatpush.msra.mxu0 0.0
    %1747 = vmatpush.msra.mxu0 0.0
    %1748 = vmatpush.msra.mxu0 0.0
    %1749 = vmatpush.msra.mxu0 0.0
    %1750 = vmatpush.msra.mxu0 0.0
    %1751 = vmatpush.msra.mxu0 0.0
    %1752 = vmatpush.msra.mxu0 0.0
    %1753 = vmatpush.msra.mxu0 0.0
    %1754 = vmatpush.msra.mxu0 %v1730
    %1755 = vmatpush.msra.mxu0 %v1729
    %1756 = vmatpush.msra.mxu0 %v1728
    %1757 = vmatpush.msra.mxu0 %v1727
    %1758 = vmatmul.f32.gmra.mxu0 %v1737
    %v1759 = vpop.f32.mrf.mxu0
    %v1760 = vadd.f32 %v1734, %v1759
    %1761 = vmatmul.f32.gmra.mxu0 %v1740
    %v1762 = vpop.f32.mrf.mxu0
    %v1763 = vadd.f32 %v1734, %v1762
    %1764 = vdwg.mxu0
    %v1765 = vmax.f32 %v1760, 0.0
    %v1766 = vmax.f32 %v1763, 0.0
    %s1767 = scalar_lea.vmem %s13, 64
    %v1768 = vld [vmem:[%s1767] sm:$0xff]
    %v1769 = vld [vmem:[%s1767 + $0x8] sm:$0xff]
    %v1770 = vld [vmem:[%s1767 + $0x10] sm:$0xff]
    %v1771 = vld [vmem:[%s1767 + $0x18] sm:$0xff]
    %v1772 = vld [vmem:[%s1767 + $0x20] sm:$0xff]
    %v1773 = vld [vmem:[%s1767 + $0x28] sm:$0xff]
    %v1774 = vld [vmem:[%s1767 + $0x30] sm:$0xff]
    %v1775 = vld [vmem:[%s1767 + $0x38] sm:$0xff]
    %s1776 = scalar_lea.vmem [#allocation11], 1
    %v1777 = vld [vmem:[%s1776] sm:$0x1]
    %v1779 = vperm.slane %v1777, 0
    %v1782 = vsel %vm952, %v1765, 0
    %v1785 = vsel %vm952, %v1766, 0
    %1787 = vmatpush.msra.mxu0 0.0
    %1788 = vmatpush.msra.mxu0 0.0
    %1789 = vmatpush.msra.mxu0 0.0
    %1790 = vmatpush.msra.mxu0 0.0
    %1791 = vmatpush.msra.mxu0 0.0
    %1792 = vmatpush.msra.mxu0 0.0
    %1793 = vmatpush.msra.mxu0 0.0
    %1794 = vmatpush.msra.mxu0 0.0
    %1795 = vmatpush.msra.mxu0 %v1775
    %1796 = vmatpush.msra.mxu0 %v1774
    %1797 = vmatpush.msra.mxu0 %v1773
    %1798 = vmatpush.msra.mxu0 %v1772
    %1799 = vmatpush.msra.mxu0 %v1771
    %1800 = vmatpush.msra.mxu0 %v1770
    %1801 = vmatpush.msra.mxu0 %v1769
    %1802 = vmatpush.msra.mxu0 %v1768
    %1803 = vmatmul.f32.gmra.mxu0 %v1782
    %v1804 = vpop.f32.mrf.mxu0
    %v1805 = vadd.f32 %v1779, %v1804
    %1806 = vmatmul.f32.gmra.mxu0 %v1785
    %v1807 = vpop.f32.mrf.mxu0
    %v1808 = vadd.f32 %v1779, %v1807
    %1809 = vdwg.mxu0
    %v1810 = vadd.f32 %v1724, %v1805
    %v1811 = vadd.f32 %v1725, %v1808
    %s1812 = scalar_lea.vmem %s15, 1
    %v1813 = vld [vmem:[%s1812] sm:$0x1]
    %s1814 = scalar_lea.vmem %s16, 1
    %v1815 = vld [vmem:[%s1814] sm:$0x1]
    %v1816 = vsel %vm219, %v1810, 0.0
    %1817 = vadd.xlane.f32.xlu0 %v1816
    %v1818 = vpop.xlane.xlu0 %1817
    %v1819 = vsel %vm219, %v1811, 0.0
    %1820 = vadd.xlane.f32.xlu0 %v1819
    %v1821 = vpop.xlane.xlu0 %1820
    %v1822 = vmul.f32 %v1818, %v852
    %v1823 = vmul.f32 %v1821, %v852
    %v1824 = vsub.f32 %v1810, %v1822
    %v1825 = vsub.f32 %v1811, %v1823
    %v1826 = vmul.f32 %v1824, %v1824
    %v1827 = vmul.f32 %v1825, %v1825
    %v1828 = vsel %vm219, %v1826, 0.0
    %1829 = vadd.xlane.f32.xlu0 %v1828
    %v1830 = vpop.xlane.xlu0 %1829
    %v1831 = vsel %vm219, %v1827, 0.0
    %1832 = vadd.xlane.f32.xlu0 %v1831
    %v1833 = vpop.xlane.xlu0 %1832
    %v1834 = vmul.f32 %v1830, %v852
    %v1835 = vmul.f32 %v1833, %v852
    %v1836 = vadd.f32 %v1834, 1e-05
    %v1837 = vadd.f32 %v1835, 1e-05
    %v1838 = vrsqrt.pop %v1836
    %v1839 = vmul.f32 %v1838, %v1836
    %v1840 = vmul.f32 %v1839, %v1838
    %v1841 = vmul.f32 0.5, %v1840
    %v1842 = vsub.f32 1.5, %v1841
    %v1843 = vmul.f32 %v1838, %v1842
    %vm1844 = vweird.f32 %v1836
    %vm1845 = vweird.f32 %v1838
    %vm1846 = vmor %vm1844, %vm1845
    %v1847 = vsel %vm1846, %v1838, %v1843
    %v1848 = vrsqrt.pop %v1837
    %v1849 = vmul.f32 %v1848, %v1837
    %v1850 = vmul.f32 %v1849, %v1848
    %v1851 = vmul.f32 0.5, %v1850
    %v1852 = vsub.f32 1.5, %v1851
    %v1853 = vmul.f32 %v1848, %v1852
    %vm1854 = vweird.f32 %v1837
    %vm1855 = vweird.f32 %v1848
    %vm1856 = vmor %vm1854, %vm1855
    %v1857 = vsel %vm1856, %v1848, %v1853
    %v1858 = vmul.f32 %v1824, %v1847
    %v1859 = vmul.f32 %v1825, %v1857
    %v1861 = vperm.slane %v1813, 0
    %v1863 = vmul.f32 %v1858, %v1861
    %v1864 = vmul.f32 %v1859, %v1861
    %v1866 = vperm.slane %v1815, 0
    %v1868 = vadd.f32 %v1863, %v1866
    %v1869 = vadd.f32 %v1864, %v1866
    %v1870 = vsel %vm219, %v1868, 0.0
    %v1871 = vrot.slane %v1870, 4
    %v1872 = vadd.f32 %v1870, %v1871
    %v1873 = vrot.slane %v1872, 2
    %v1874 = vadd.f32 %v1872, %v1873
    %v1875 = vrot.slane %v1874, 1
    %v1876 = vadd.f32 %v1874, %v1875
    %v1877 = vsel %vm219, %v1869, 0.0
    %v1878 = vrot.slane %v1877, 4
    %v1879 = vadd.f32 %v1877, %v1878
    %v1880 = vrot.slane %v1879, 2
    %v1881 = vadd.f32 %v1879, %v1880
    %v1882 = vrot.slane %v1881, 1
    %v1883 = vadd.f32 %v1881, %v1882
    %v1884 = vrcp.pop 8.0
    %v1885 = vmul.f32 8.0, %v1884
    %v1886 = vsub.f32 1.0, %v1885
    %v1887 = vmul.f32 %v1884, %v1886
    %v1888 = vadd.f32 %v1884, %v1887
    %vm1889 = vweird.f32 %v1884
    %v1890 = vsel %vm1889, %v1884, %v1888
    %v1891 = vmul.f32 %v1876, %v1890
    %v1892 = vmul.f32 %v1883, %v1890
    %v1893 = vld [vmem:[#allocation13] sm:$0xff]
    %v1894 = vld [vmem:[#allocation13 + $0x8] sm:$0xff]
    %v1895 = vld [vmem:[#allocation13 + $0x10] sm:$0xff]
    %v1896 = vld [vmem:[#allocation13 + $0x18] sm:$0xff]
    %v1897 = vld [vmem:[%s18] sm:$0x1]
    %v1899 = vperm.slane %v1897, 0
    %vm1903 = vcmask 1041409
    %v1904 = vsel %vm1903, %v1892, %v1891
    %v1905 = vsel %vm219, %v1904, 0
    %1907 = vmatpush.msra.mxu0 0.0
    %1908 = vmatpush.msra.mxu0 0.0
    %1909 = vmatpush.msra.mxu0 0.0
    %1910 = vmatpush.msra.mxu0 0.0
    %1911 = vmatpush.msra.mxu0 0.0
    %1912 = vmatpush.msra.mxu0 0.0
    %1913 = vmatpush.msra.mxu0 0.0
    %1914 = vmatpush.msra.mxu0 0.0
    %1915 = vmatpush.msra.mxu0 0.0
    %1916 = vmatpush.msra.mxu0 0.0
    %1917 = vmatpush.msra.mxu0 0.0
    %1918 = vmatpush.msra.mxu0 0.0
    %1919 = vmatpush.msra.mxu0 %v1896
    %1920 = vmatpush.msra.mxu0 %v1895
    %1921 = vmatpush.msra.mxu0 %v1894
    %1922 = vmatpush.msra.mxu0 %v1893
    %1923 = vmatmul.f32.gmra.mxu0 %v1905
    %v1924 = vpop.f32.mrf.mxu0
    %v1925 = vadd.f32 %v1899, %v1924
    %1926 = vdwg.mxu0
    %1927 = vst [vmem:[#allocation14] sm:$0x3] %v1925
    // Predicated region
    $region106: #{tpu_custom_call.1} parent=1 // pred_check
      _
    $region107: #{tpu_custom_call.1} parent=1 // pred_check_branch
      %1929 = sbr.rel (0) target = $region109
    $region108: #{tpu_custom_call.1} parent=1 // pred_region
      %1931 = vsyncadd [#allocation4], 0
      %s1933 = sshll.u32 [#allocation14], 4
      %s1934 = int_to_ptr.vmem [resolvable:$true] %s1933
      %s1935 = sshll.u32 %s19, 4
      %s1936 = int_to_ptr.hbm [resolvable:$true] %s1935
      %1938 = dma.vmem_to_hbm [thread:$0]  %s1934, 32, %s1936, [#allocation4]
    $region109: #{tpu_custom_call.1} parent=1 // pred_fallthru
      _
    // Predicated region
    $region110: #{tpu_custom_call.1} parent=1 // pred_check
      _
    $region111: #{tpu_custom_call.1} parent=1 // pred_check_branch
      %1940 = sbr.rel (0) target = $region113
    $region112: #{tpu_custom_call.1} parent=1 // pred_region
      %1942 = dma.done [#allocation4], 32
    $region113: #{tpu_custom_call.1} parent=1 // pred_fallthru
      _
    %1943 = vsyncpa [#allocation3], 1
    %1944 = vsyncpa [#allocation6], 1
    %1945 = vsyncpa [#allocation9], 1
    %1946 = vsyncpa [#allocation12], 1
    %1947 = vsyncpa [#allocation4], 1

// kernel: tpu_custom_call.1
$region0: #{tpu_custom_call.1}
  #allocation0 [shape = 'u32[]', space=smem, size = 0x4, offset = 0x4, fixed_abs, tag = 'smem constant byte address 0x4 - core index']
  #allocation1 [shape = 'u32[72,128]{1,0:T(1,128)}', space=vmem, size = 0x9000, scoped, tag = 'internal scratch']
  %s0 = inlined_call_operand.hbm [shape: f32[2,8,8], index: 0, kind: input, shape index: {}]
  %s1 = inlined_call_operand.hbm [shape: f32[8,8], index: 1, kind: input, shape index: {}]
  %s2 = inlined_call_operand.hbm [shape: f32[2,8], index: 2, kind: input, shape index: {}]
  %s3 = inlined_call_operand.hbm [shape: f32[8,32], index: 3, kind: input, shape index: {}]
  %s4 = inlined_call_operand.hbm [shape: f32[1,32], index: 4, kind: input, shape index: {}]
  %s5 = inlined_call_operand.vmem [shape: f32[2,32,96], index: 5, kind: input, shape index: {}]
  %s6 = inlined_call_operand.vmem [shape: f32[2,1,96], index: 6, kind: input, shape index: {}]
  %s7 = inlined_call_operand.vmem [shape: f32[2,32,32], index: 7, kind: input, shape index: {}]
  %s8 = inlined_call_operand.vmem [shape: f32[2,1,32], index: 8, kind: input, shape index: {}]
  %s9 = inlined_call_operand.vmem [shape: f32[2,1,32], index: 9, kind: input, shape index: {}]
  %s10 = inlined_call_operand.vmem [shape: f32[2,1,32], index: 10, kind: input, shape index: {}]
  %s11 = inlined_call_operand.vmem [shape: f32[2,32,64], index: 11, kind: input, shape index: {}]
  %s12 = inlined_call_operand.vmem [shape: f32[2,1,64], index: 12, kind: input, shape index: {}]
  %s13 = inlined_call_operand.vmem [shape: f32[2,64,32], index: 13, kind: input, shape index: {}]
  %s14 = inlined_call_operand.hbm [shape: f32[2,1,32], index: 14, kind: input, shape index: {}]
  %s15 = inlined_call_operand.vmem [shape: f32[2,1,32], index: 15, kind: input, shape index: {}]
  %s16 = inlined_call_operand.vmem [shape: f32[2,1,32], index: 16, kind: input, shape index: {}]
  %s17 = inlined_call_operand.hbm [shape: f32[32,128], index: 17, kind: input, shape index: {}]
  %s18 = inlined_call_operand.vmem [shape: f32[1,128], index: 18, kind: input, shape index: {}]
  %s19 = inlined_call_operand.hbm [shape: f32[2,128], index: 19, kind: output, shape index: {}]
  %s20 = sld [smem:[#allocation0]]
  $region114: #{tpu_custom_call.1} parent=0
    _
  %s22 = ssub.s32 1, %s20
  %s23 = scalar_select 0, %s22, %s20
  $region1: #{tpu_custom_call.1} parent=0
    #allocation2 [shape = 'u8[8192]{0}', space=vmem, size = 0x2000, scoped, tag = 'input window, operand 0, single buffered']
    #allocation3 [shape = 's32[1]{0}', space=sflag, size = 0x4, scoped, tag = 'scoped memory for tpu_custom_call.1']
    #allocation4 [shape = 's32[1]{0}', space=sflag, size = 0x4, scoped, tag = 'scoped memory for tpu_custom_call.1']
    #allocation5 [shape = 'u8[4096]{0}', space=vmem, size = 0x1000, scoped, tag = 'input window, operand 1, single buffered']
    #allocation6 [shape = 's32[1]{0}', space=sflag, size = 0x4, scoped, tag = 'scoped memory for tpu_custom_call.1']
    #allocation7 [shape = 'u8[1024]{0}', space=vmem, size = 0x400, scoped, tag = 'input window, operand 2, single buffered']
    #allocation8 [shape = 'u8[4096]{0}', space=vmem, size = 0x1000, scoped, tag = 'input window, operand 3, single buffered']
    #allocation9 [shape = 's32[1]{0}', space=sflag, size = 0x4, scoped, tag = 'scoped memory for tpu_custom_call.1']
    #allocation10 [shape = 'u8[512]{0}', space=vmem, size = 0x400, scoped, tag = 'input window, operand 4, single buffered']
    #allocation11 [shape = 'u8[1024]{0}', space=vmem, size = 0x400, scoped, tag = 'input window, operand 14, single buffered']
    #allocation12 [shape = 's32[1]{0}', space=sflag, size = 0x4, scoped, tag = 'scoped memory for tpu_custom_call.1']
    #allocation13 [shape = 'u8[16384]{0}', space=vmem, size = 0x4000, scoped, tag = 'input window, operand 17, single buffered']
    #allocation14 [shape = 'u8[1024]{0}', space=vmem, size = 0x400, scoped, tag = 'output window, operand 0, single buffered']
    %24 = vsyncpa [#allocation3], 0
    %25 = vsyncpa [#allocation6], 0
    %26 = vsyncpa [#allocation9], 0
    %27 = vsyncpa [#allocation12], 0
    %28 = vsyncpa [#allocation4], 0
    // Predicated region
    $region2: #{tpu_custom_call.1} parent=1 // pred_check
      _
    $region3: #{tpu_custom_call.1} parent=1 // pred_check_branch
      %30 = sbr.rel (0) target = $region5
    $region4: #{tpu_custom_call.1} parent=1 // pred_region
      %32 = vsyncadd [#allocation3], 0
      %s33 = sshll.u32 %s0, 4
      %s34 = int_to_ptr.hbm [resolvable:$true] %s33
      %s35 = sshll.u32 [#allocation2], 4
      %s36 = int_to_ptr.vmem [resolvable:$true] %s35
      %41 = dma.hbm_to_vmem [thread:$0]  %s34, 256, %s36, [#allocation3], 128, 128, 8
    $region5: #{tpu_custom_call.1} parent=1 // pred_fallthru
      _
    // Predicated region
    $region6: #{tpu_custom_call.1} parent=1 // pred_check
      _
    $region7: #{tpu_custom_call.1} parent=1 // pred_check_branch
      %43 = sbr.rel (0) target = $region9
    $region8: #{tpu_custom_call.1} parent=1 // pred_region
      %45 = vsyncadd [#allocation6], 0
      %s47 = sshll.u32 %s1, 4
      %s48 = int_to_ptr.hbm [resolvable:$true] %s47
      %s49 = sshll.u32 [#allocation5], 4
      %s50 = int_to_ptr.vmem [resolvable:$true] %s49
      %52 = dma.hbm_to_vmem [thread:$0]  %s48, 128, %s50, [#allocation6]
    $region9: #{tpu_custom_call.1} parent=1 // pred_fallthru
      _
    // Predicated region
    $region10: #{tpu_custom_call.1} parent=1 // pred_check
      _
    $region11: #{tpu_custom_call.1} parent=1 // pred_check_branch
      %54 = sbr.rel (0) target = $region13
    $region12: #{tpu_custom_call.1} parent=1 // pred_region
      %56 = vsyncadd [#allocation6], 0
      %s58 = sshll.u32 %s2, 4
      %s59 = int_to_ptr.hbm [resolvable:$true] %s58
      %s60 = sshll.u32 [#allocation7], 4
      %s61 = int_to_ptr.vmem [resolvable:$true] %s60
      %63 = dma.hbm_to_vmem [thread:$0]  %s59, 32, %s61, [#allocation6]
    $region13: #{tpu_custom_call.1} parent=1 // pred_fallthru
      _
    // Predicated region
    $region14: #{tpu_custom_call.1} parent=1 // pred_check
      _
    $region15: #{tpu_custom_call.1} parent=1 // pred_check_branch
      %65 = sbr.rel (0) target = $region17
    $region16: #{tpu_custom_call.1} parent=1 // pred_region
      %67 = vsyncadd [#allocation9], 0
      %s69 = sshll.u32 %s3, 4
      %s70 = int_to_ptr.hbm [resolvable:$true] %s69
      %s71 = sshll.u32 [#allocation8], 4
      %s72 = int_to_ptr.vmem [resolvable:$true] %s71
      %74 = dma.hbm_to_vmem [thread:$0]  %s70, 128, %s72, [#allocation9]
    $region17: #{tpu_custom_call.1} parent=1 // pred_fallthru
      _
    // Predicated region
    $region18: #{tpu_custom_call.1} parent=1 // pred_check
      _
    $region19: #{tpu_custom_call.1} parent=1 // pred_check_branch
      %76 = sbr.rel (0) target = $region21
    $region20: #{tpu_custom_call.1} parent=1 // pred_region
      %78 = vsyncadd [#allocation9], 0
      %s80 = sshll.u32 %s4, 4
      %s81 = int_to_ptr.hbm [resolvable:$true] %s80
      %s82 = sshll.u32 [#allocation10], 4
      %s83 = int_to_ptr.vmem [resolvable:$true] %s82
      %85 = dma.hbm_to_vmem [thread:$0]  %s81, 16, %s83, [#allocation9]
    $region21: #{tpu_custom_call.1} parent=1 // pred_fallthru
      _
    // Predicated region
    $region22: #{tpu_custom_call.1} parent=1 // pred_check
      _
    $region23: #{tpu_custom_call.1} parent=1 // pred_check_branch
      %87 = sbr.rel (0) target = $region25
    $region24: #{tpu_custom_call.1} parent=1 // pred_region
      _
    $region25: #{tpu_custom_call.1} parent=1 // pred_fallthru
      _
    // Predicated region
    $region26: #{tpu_custom_call.1} parent=1 // pred_check
      _
    $region27: #{tpu_custom_call.1} parent=1 // pred_check_branch
      %89 = sbr.rel (0) target = $region29
    $region28: #{tpu_custom_call.1} parent=1 // pred_region
      _
    $region29: #{tpu_custom_call.1} parent=1 // pred_fallthru
      _
    // Predicated region
    $region30: #{tpu_custom_call.1} parent=1 // pred_check
      _
    $region31: #{tpu_custom_call.1} parent=1 // pred_check_branch
      %91 = sbr.rel (0) target = $region33
    $region32: #{tpu_custom_call.1} parent=1 // pred_region
      _
    $region33: #{tpu_custom_call.1} parent=1 // pred_fallthru
      _
    // Predicated region
    $region34: #{tpu_custom_call.1} parent=1 // pred_check
      _
    $region35: #{tpu_custom_call.1} parent=1 // pred_check_branch
      %93 = sbr.rel (0) target = $region37
    $region36: #{tpu_custom_call.1} parent=1 // pred_region
      _
    $region37: #{tpu_custom_call.1} parent=1 // pred_fallthru
      _
    // Predicated region
    $region38: #{tpu_custom_call.1} parent=1 // pred_check
      _
    $region39: #{tpu_custom_call.1} parent=1 // pred_check_branch
      %95 = sbr.rel (0) target = $region41
    $region40: #{tpu_custom_call.1} parent=1 // pred_region
      _
    $region41: #{tpu_custom_call.1} parent=1 // pred_fallthru
      _
    // Predicated region
    $region42: #{tpu_custom_call.1} parent=1 // pred_check
      _
    $region43: #{tpu_custom_call.1} parent=1 // pred_check_branch
      %97 = sbr.rel (0) target = $region45
    $region44: #{tpu_custom_call.1} parent=1 // pred_region
      _
    $region45: #{tpu_custom_call.1} parent=1 // pred_fallthru
      _
    // Predicated region
    $region46: #{tpu_custom_call.1} parent=1 // pred_check
      _
    $region47: #{tpu_custom_call.1} parent=1 // pred_check_branch
      %99 = sbr.rel (0) target = $region49
    $region48: #{tpu_custom_call.1} parent=1 // pred_region
      _
    $region49: #{tpu_custom_call.1} parent=1 // pred_fallthru
      _
    // Predicated region
    $region50: #{tpu_custom_call.1} parent=1 // pred_check
      _
    $region51: #{tpu_custom_call.1} parent=1 // pred_check_branch
      %101 = sbr.rel (0) target = $region53
    $region52: #{tpu_custom_call.1} parent=1 // pred_region
      _
    $region53: #{tpu_custom_call.1} parent=1 // pred_fallthru
      _
    // Predicated region
    $region54: #{tpu_custom_call.1} parent=1 // pred_check
      _
    $region55: #{tpu_custom_call.1} parent=1 // pred_check_branch
      %103 = sbr.rel (0) target = $region57
    $region56: #{tpu_custom_call.1} parent=1 // pred_region
      _
    $region57: #{tpu_custom_call.1} parent=1 // pred_fallthru
      _
    // Predicated region
    $region58: #{tpu_custom_call.1} parent=1 // pred_check
      _
    $region59: #{tpu_custom_call.1} parent=1 // pred_check_branch
      %105 = sbr.rel (0) target = $region61
    $region60: #{tpu_custom_call.1} parent=1 // pred_region
      %107 = vsyncadd [#allocation12], 0
      %s108 = sshll.u32 %s14, 4
      %s109 = int_to_ptr.hbm [resolvable:$true] %s108
      %s110 = sshll.u32 [#allocation11], 4
      %s111 = int_to_ptr.vmem [resolvable:$true] %s110
      %116 = dma.hbm_to_vmem [thread:$0]  %s109, 32, %s111, [#allocation12], 16, 16, 1
    $region61: #{tpu_custom_call.1} parent=1 // pred_fallthru
      _
    // Predicated region
    $region62: #{tpu_custom_call.1} parent=1 // pred_check
      _
    $region63: #{tpu_custom_call.1} parent=1 // pred_check_branch
      %118 = sbr.rel (0) target = $region65
    $region64: #{tpu_custom_call.1} parent=1 // pred_region
      _
    $region65: #{tpu_custom_call.1} parent=1 // pred_fallthru
      _
    // Predicated region
    $region66: #{tpu_custom_call.1} parent=1 // pred_check
      _
    $region67: #{tpu_custom_call.1} parent=1 // pred_check_branch
      %120 = sbr.rel (0) target = $region69
    $region68: #{tpu_custom_call.1} parent=1 // pred_region
      _
    $region69: #{tpu_custom_call.1} parent=1 // pred_fallthru
      _
    // Predicated region
    $region70: #{tpu_custom_call.1} parent=1 // pred_check
      _
    $region71: #{tpu_custom_call.1} parent=1 // pred_check_branch
      %122 = sbr.rel (0) target = $region73
    $region72: #{tpu_custom_call.1} parent=1 // pred_region
      %124 = vsyncadd [#allocation12], 0
      %s125 = sshll.u32 %s17, 4
      %s126 = int_to_ptr.hbm [resolvable:$true] %s125
      %s127 = sshll.u32 [#allocation13], 4
      %s128 = int_to_ptr.vmem [resolvable:$true] %s127
      %133 = dma.hbm_to_vmem [thread:$0]  %s126, 512, %s128, [#allocation12], 128, 128, 8
    $region73: #{tpu_custom_call.1} parent=1 // pred_fallthru
      _
    // Predicated region
    $region74: #{tpu_custom_call.1} parent=1 // pred_check
      _
    $region75: #{tpu_custom_call.1} parent=1 // pred_check_branch
      %135 = sbr.rel (0) target = $region77
    $region76: #{tpu_custom_call.1} parent=1 // pred_region
      _
    $region77: #{tpu_custom_call.1} parent=1 // pred_fallthru
      _
    // Predicated region
    $region78: #{tpu_custom_call.1} parent=1 // pred_check
      _
    $region79: #{tpu_custom_call.1} parent=1 // pred_check_branch
      %137 = sbr.rel (0) target = $region81
    $region80: #{tpu_custom_call.1} parent=1 // pred_region
      %139 = dma.done [#allocation3], 256
    $region81: #{tpu_custom_call.1} parent=1 // pred_fallthru
      _
    // Predicated region
    $region82: #{tpu_custom_call.1} parent=1 // pred_check
      _
    $region83: #{tpu_custom_call.1} parent=1 // pred_check_branch
      %141 = sbr.rel (0) target = $region85
    $region84: #{tpu_custom_call.1} parent=1 // pred_region
      %143 = dma.done [#allocation6], 128
    $region85: #{tpu_custom_call.1} parent=1 // pred_fallthru
      _
    // Predicated region
    $region86: #{tpu_custom_call.1} parent=1 // pred_check
      _
    $region87: #{tpu_custom_call.1} parent=1 // pred_check_branch
      %145 = sbr.rel (0) target = $region89
    $region88: #{tpu_custom_call.1} parent=1 // pred_region
      %147 = dma.done [#allocation6], 32
    $region89: #{tpu_custom_call.1} parent=1 // pred_fallthru
      _
    // Predicated region
    $region90: #{tpu_custom_call.1} parent=1 // pred_check
      _
    $region91: #{tpu_custom_call.1} parent=1 // pred_check_branch
      %149 = sbr.rel (0) target = $region93
    $region92: #{tpu_custom_call.1} parent=1 // pred_region
      %151 = dma.done [#allocation9], 128
    $region93: #{tpu_custom_call.1} parent=1 // pred_fallthru
      _
    // Predicated region
    $region94: #{tpu_custom_call.1} parent=1 // pred_check
      _
    $region95: #{tpu_custom_call.1} parent=1 // pred_check_branch
      %153 = sbr.rel (0) target = $region97
    $region96: #{tpu_custom_call.1} parent=1 // pred_region
      %155 = dma.done [#allocation9], 16
    $region97: #{tpu_custom_call.1} parent=1 // pred_fallthru
      _
    // Predicated region
    $region98: #{tpu_custom_call.1} parent=1 // pred_check
      _
    $region99: #{tpu_custom_call.1} parent=1 // pred_check_branch
      %157 = sbr.rel (0) target = $region101
    $region100: #{tpu_custom_call.1} parent=1 // pred_region
      %159 = dma.done [#allocation12], 32
    $region101: #{tpu_custom_call.1} parent=1 // pred_fallthru
      _
    // Predicated region
    $region102: #{tpu_custom_call.1} parent=1 // pred_check
      _
    $region103: #{tpu_custom_call.1} parent=1 // pred_check_branch
      %161 = sbr.rel (0) target = $region105
    $region104: #{tpu_custom_call.1} parent=1 // pred_region
      %163 = dma.done [#allocation12], 512
    $region105: #{tpu_custom_call.1} parent=1 // pred_fallthru
      _
    %v164 = vld [vmem:[#allocation2] sm:$0xff]
    %v165 = vld [vmem:[#allocation2 + $0x8] sm:$0xff]
    %v166 = vld [vmem:[#allocation8] sm:$0xff]
    %v167 = vld [vmem:[#allocation10] sm:$0x1]
    %v169 = vperm.slane %v167, 0
    %vm171 = vcmask 64512
    %v173 = vsel %vm171, %v164, 0
    %v176 = vsel %vm171, %v165, 0
    %178 = vmatpush.msra.mxu0 0.0
    %179 = vmatpush.msra.mxu0 0.0
    %180 = vmatpush.msra.mxu0 0.0
    %181 = vmatpush.msra.mxu0 0.0
    %182 = vmatpush.msra.mxu0 0.0
    %183 = vmatpush.msra.mxu0 0.0
    %184 = vmatpush.msra.mxu0 0.0
    %185 = vmatpush.msra.mxu0 0.0
    %186 = vmatpush.msra.mxu0 0.0
    %187 = vmatpush.msra.mxu0 0.0
    %188 = vmatpush.msra.mxu0 0.0
    %189 = vmatpush.msra.mxu0 0.0
    %190 = vmatpush.msra.mxu0 0.0
    %191 = vmatpush.msra.mxu0 0.0
    %192 = vmatpush.msra.mxu0 0.0
    %193 = vmatpush.msra.mxu0 %v166
    %194 = vmatmul.f32.gmra.mxu0 %v173
    %v195 = vpop.f32.mrf.mxu0
    %v196 = vadd.f32 %v169, %v195
    %197 = vmatmul.f32.gmra.mxu0 %v176
    %v198 = vpop.f32.mrf.mxu0
    %v199 = vadd.f32 %v169, %v198
    %200 = vdwg.mxu0
    %v201 = vld [vmem:[#allocation5] sm:$0xff]
    %v202 = vld [vmem:[#allocation7] sm:$0x3]
    %v204 = vrot.slane %v202, 1
    %v205 = vperm.slane %v202, 0
    %v206 = vperm.slane %v204, 0
    %v209 = vadd.f32 %v201, %v205
    %v210 = vadd.f32 %v201, %v206
    %v211 = vld [vmem:[%s5] sm:$0xff]
    %v212 = vld [vmem:[%s5 + $0x8] sm:$0xff]
    %v213 = vld [vmem:[%s5 + $0x10] sm:$0xff]
    %v214 = vld [vmem:[%s5 + $0x18] sm:$0xff]
    %v215 = vld [vmem:[%s6] sm:$0x1]
    %v217 = vperm.slane %v215, 0
    %vm219 = vcmask 261120
    %v221 = vsel %vm219, %v196, 0
    %v224 = vsel %vm219, %v199, 0
    %226 = vmatpush.msra.mxu0 0.0
    %227 = vmatpush.msra.mxu0 0.0
    %228 = vmatpush.msra.mxu0 0.0
    %229 = vmatpush.msra.mxu0 0.0
    %230 = vmatpush.msra.mxu0 0.0
    %231 = vmatpush.msra.mxu0 0.0
    %232 = vmatpush.msra.mxu0 0.0
    %233 = vmatpush.msra.mxu0 0.0
    %234 = vmatpush.msra.mxu0 0.0
    %235 = vmatpush.msra.mxu0 0.0
    %236 = vmatpush.msra.mxu0 0.0
    %237 = vmatpush.msra.mxu0 0.0
    %238 = vmatpush.msra.mxu0 %v214
    %239 = vmatpush.msra.mxu0 %v213
    %240 = vmatpush.msra.mxu0 %v212
    %241 = vmatpush.msra.mxu0 %v211
    %242 = vmatmul.f32.gmra.mxu0 %v221
    %v243 = vpop.f32.mrf.mxu0
    %v244 = vadd.f32 %v217, %v243
    %245 = vmatmul.f32.gmra.mxu0 %v224
    %v246 = vpop.f32.mrf.mxu0
    %v247 = vadd.f32 %v217, %v246
    %248 = vdwg.mxu0
    %250 = vrot.lane.b32.xlu0 %v244, 96
    %v251 = vpop.permute.xlu0 %250
    %v252 = vsel %vm171, %v244, 0
    %v254 = vsel %vm171, %v251, 0
    %256 = vmatpush.xpose.msra.mxu0 0.0
    %257 = vmatpush.xpose.msra.mxu0 0.0
    %258 = vmatpush.xpose.msra.mxu0 0.0
    %259 = vmatpush.xpose.msra.mxu0 0.0
    %260 = vmatpush.xpose.msra.mxu0 0.0
    %261 = vmatpush.xpose.msra.mxu0 0.0
    %262 = vmatpush.xpose.msra.mxu0 0.0
    %263 = vmatpush.xpose.msra.mxu0 0.0
    %264 = vmatpush.xpose.msra.mxu0 0.0
    %265 = vmatpush.xpose.msra.mxu0 0.0
    %266 = vmatpush.xpose.msra.mxu0 0.0
    %267 = vmatpush.xpose.msra.mxu0 0.0
    %268 = vmatpush.xpose.msra.mxu0 0.0
    %269 = vmatpush.xpose.msra.mxu0 0.0
    %270 = vmatpush.xpose.msra.mxu0 0.0
    %271 = vmatpush.xpose.msra.mxu0 %v254
    %272 = vmatmul.f32.gmra.mxu0 %v252
    %v273 = vpop.f32.mrf.mxu0
    %v274 = vadd.f32 %v209, %v273
    %275 = vdwg.mxu0
    %277 = vrot.lane.b32.xlu0 %v247, 96
    %v278 = vpop.permute.xlu0 %277
    %v279 = vsel %vm171, %v247, 0
    %v281 = vsel %vm171, %v278, 0
    %283 = vmatpush.xpose.msra.mxu0 0.0
    %284 = vmatpush.xpose.msra.mxu0 0.0
    %285 = vmatpush.xpose.msra.mxu0 0.0
    %286 = vmatpush.xpose.msra.mxu0 0.0
    %287 = vmatpush.xpose.msra.mxu0 0.0
    %288 = vmatpush.xpose.msra.mxu0 0.0
    %289 = vmatpush.xpose.msra.mxu0 0.0
    %290 = vmatpush.xpose.msra.mxu0 0.0
    %291 = vmatpush.xpose.msra.mxu0 0.0
    %292 = vmatpush.xpose.msra.mxu0 0.0
    %293 = vmatpush.xpose.msra.mxu0 0.0
    %294 = vmatpush.xpose.msra.mxu0 0.0
    %295 = vmatpush.xpose.msra.mxu0 0.0
    %296 = vmatpush.xpose.msra.mxu0 0.0
    %297 = vmatpush.xpose.msra.mxu0 0.0
    %298 = vmatpush.xpose.msra.mxu0 %v281
    %299 = vmatmul.f32.gmra.mxu0 %v279
    %v300 = vpop.f32.mrf.mxu0
    %v301 = vadd.f32 %v210, %v300
    %302 = vdwg.mxu0
    %v303 = vsel %vm171, %v274, -inf
    %304 = vmax.xlane.f32.xlu0 %v303
    %v305 = vpop.xlane.xlu0 %304
    %v306 = vsel %vm171, %v301, -inf
    %307 = vmax.xlane.f32.xlu0 %v306
    %v308 = vpop.xlane.xlu0 %307
    %v309 = vsub.f32 %v274, %v305
    %v310 = vsub.f32 %v301, %v308
    %v311 = vmul.f32 %v309, 1.442695
    %v312 = vpow.pop %v311
    %v313 = vmul.f32 %v310, 1.442695
    %v314 = vpow.pop %v313
    %v315 = vsel %vm171, %v312, 0.0
    %316 = vadd.xlane.f32.xlu0 %v315
    %v317 = vpop.xlane.xlu0 %316
    %v318 = vsel %vm171, %v314, 0.0
    %319 = vadd.xlane.f32.xlu0 %v318
    %v320 = vpop.xlane.xlu0 %319
    %v321 = vrcp.pop %v317
    %v322 = vrcp.pop %v320
    %v323 = vmul.f32 %v312, %v321
    %v324 = vmul.f32 %v314, %v322
    %325 = vrot.lane.b32.xlu0 %v244, 64
    %v326 = vpop.permute.xlu0 %325
    %v329 = vsel %vm171, %v323, 0
    %331 = vmatpush.msra.mxu0 0.0
    %332 = vmatpush.msra.mxu0 0.0
    %333 = vmatpush.msra.mxu0 0.0
    %334 = vmatpush.msra.mxu0 0.0
    %335 = vmatpush.msra.mxu0 0.0
    %336 = vmatpush.msra.mxu0 0.0
    %337 = vmatpush.msra.mxu0 0.0
    %338 = vmatpush.msra.mxu0 0.0
    %339 = vmatpush.msra.mxu0 0.0
    %340 = vmatpush.msra.mxu0 0.0
    %341 = vmatpush.msra.mxu0 0.0
    %342 = vmatpush.msra.mxu0 0.0
    %343 = vmatpush.msra.mxu0 0.0
    %344 = vmatpush.msra.mxu0 0.0
    %345 = vmatpush.msra.mxu0 0.0
    %346 = vmatpush.msra.mxu0 %v326
    %347 = vmatmul.f32.gmra.mxu0 %v329
    %v348 = vpop.f32.mrf.mxu0
    %v349 = vadd.f32 0.0, %v348
    %350 = vdwg.mxu0
    %351 = vrot.lane.b32.xlu0 %v247, 64
    %v352 = vpop.permute.xlu0 %351
    %v355 = vsel %vm171, %v324, 0
    %357 = vmatpush.msra.mxu0 0.0
    %358 = vmatpush.msra.mxu0 0.0
    %359 = vmatpush.msra.mxu0 0.0
    %360 = vmatpush.msra.mxu0 0.0
    %361 = vmatpush.msra.mxu0 0.0
    %362 = vmatpush.msra.mxu0 0.0
    %363 = vmatpush.msra.mxu0 0.0
    %364 = vmatpush.msra.mxu0 0.0
    %365 = vmatpush.msra.mxu0 0.0
    %366 = vmatpush.msra.mxu0 0.0
    %367 = vmatpush.msra.mxu0 0.0
    %368 = vmatpush.msra.mxu0 0.0
    %369 = vmatpush.msra.mxu0 0.0
    %370 = vmatpush.msra.mxu0 0.0
    %371 = vmatpush.msra.mxu0 0.0
    %372 = vmatpush.msra.mxu0 %v352
    %373 = vmatmul.f32.gmra.mxu0 %v355
    %v374 = vpop.f32.mrf.mxu0
    %v375 = vadd.f32 0.0, %v374
    %376 = vdwg.mxu0
    %377 = vrot.lane.b32.xlu0 %v244, 120
    %v378 = vpop.permute.xlu0 %377
    %379 = vrot.lane.b32.xlu0 %v244, 88
    %v380 = vpop.permute.xlu0 %379
    %v381 = vsel %vm171, %v378, 0
    %v383 = vsel %vm171, %v380, 0
    %385 = vmatpush.xpose.msra.mxu0 0.0
    %386 = vmatpush.xpose.msra.mxu0 0.0
    %387 = vmatpush.xpose.msra.mxu0 0.0
    %388 = vmatpush.xpose.msra.mxu0 0.0
    %389 = vmatpush.xpose.msra.mxu0 0.0
    %390 = vmatpush.xpose.msra.mxu0 0.0
    %391 = vmatpush.xpose.msra.mxu0 0.0
    %392 = vmatpush.xpose.msra.mxu0 0.0
    %393 = vmatpush.xpose.msra.mxu0 0.0
    %394 = vmatpush.xpose.msra.mxu0 0.0
    %395 = vmatpush.xpose.msra.mxu0 0.0
    %396 = vmatpush.xpose.msra.mxu0 0.0
    %397 = vmatpush.xpose.msra.mxu0 0.0
    %398 = vmatpush.xpose.msra.mxu0 0.0
    %399 = vmatpush.xpose.msra.mxu0 0.0
    %400 = vmatpush.xpose.msra.mxu0 %v383
    %401 = vmatmul.f32.gmra.mxu0 %v381
    %v402 = vpop.f32.mrf.mxu0
    %v403 = vadd.f32 %v209, %v402
    %404 = vdwg.mxu0
    %405 = vrot.lane.b32.xlu0 %v247, 120
    %v406 = vpop.permute.xlu0 %405
    %407 = vrot.lane.b32.xlu0 %v247, 88
    %v408 = vpop.permute.xlu0 %407
    %v409 = vsel %vm171, %v406, 0
    %v411 = vsel %vm171, %v408, 0
    %413 = vmatpush.xpose.msra.mxu0 0.0
    %414 = vmatpush.xpose.msra.mxu0 0.0
    %415 = vmatpush.xpose.msra.mxu0 0.0
    %416 = vmatpush.xpose.msra.mxu0 0.0
    %417 = vmatpush.xpose.msra.mxu0 0.0
    %418 = vmatpush.xpose.msra.mxu0 0.0
    %419 = vmatpush.xpose.msra.mxu0 0.0
    %420 = vmatpush.xpose.msra.mxu0 0.0
    %421 = vmatpush.xpose.msra.mxu0 0.0
    %422 = vmatpush.xpose.msra.mxu0 0.0
    %423 = vmatpush.xpose.msra.mxu0 0.0
    %424 = vmatpush.xpose.msra.mxu0 0.0
    %425 = vmatpush.xpose.msra.mxu0 0.0
    %426 = vmatpush.xpose.msra.mxu0 0.0
    %427 = vmatpush.xpose.msra.mxu0 0.0
    %428 = vmatpush.xpose.msra.mxu0 %v411
    %429 = vmatmul.f32.gmra.mxu0 %v409
    %v430 = vpop.f32.mrf.mxu0
    %v431 = vadd.f32 %v210, %v430
    %432 = vdwg.mxu0
    %v433 = vsel %vm171, %v403, -inf
    %434 = vmax.xlane.f32.xlu0 %v433
    %v435 = vpop.xlane.xlu0 %434
    %v436 = vsel %vm171, %v431, -inf
    %437 = vmax.xlane.f32.xlu0 %v436
    %v438 = vpop.xlane.xlu0 %437
    %v439 = vsub.f32 %v403, %v435
    %v440 = vsub.f32 %v431, %v438
    %v441 = vmul.f32 %v439, 1.442695
    %v442 = vpow.pop %v441
    %v443 = vmul.f32 %v440, 1.442695
    %v444 = vpow.pop %v443
    %v445 = vsel %vm171, %v442, 0.0
    %446 = vadd.xlane.f32.xlu0 %v445
    %v447 = vpop.xlane.xlu0 %446
    %v448 = vsel %vm171, %v444, 0.0
    %449 = vadd.xlane.f32.xlu0 %v448
    %v450 = vpop.xlane.xlu0 %449
    %v451 = vrcp.pop %v447
    %v452 = vrcp.pop %v450
    %v453 = vmul.f32 %v442, %v451
    %v454 = vmul.f32 %v444, %v452
    %455 = vrot.lane.b32.xlu0 %v244, 56
    %v456 = vpop.permute.xlu0 %455
    %v459 = vsel %vm171, %v453, 0
    %461 = vmatpush.msra.mxu0 0.0
    %462 = vmatpush.msra.mxu0 0.0
    %463 = vmatpush.msra.mxu0 0.0
    %464 = vmatpush.msra.mxu0 0.0
    %465 = vmatpush.msra.mxu0 0.0
    %466 = vmatpush.msra.mxu0 0.0
    %467 = vmatpush.msra.mxu0 0.0
    %468 = vmatpush.msra.mxu0 0.0
    %469 = vmatpush.msra.mxu0 0.0
    %470 = vmatpush.msra.mxu0 0.0
    %471 = vmatpush.msra.mxu0 0.0
    %472 = vmatpush.msra.mxu0 0.0
    %473 = vmatpush.msra.mxu0 0.0
    %474 = vmatpush.msra.mxu0 0.0
    %475 = vmatpush.msra.mxu0 0.0
    %476 = vmatpush.msra.mxu0 %v456
    %477 = vmatmul.f32.gmra.mxu0 %v459
    %v478 = vpop.f32.mrf.mxu0
    %v479 = vadd.f32 0.0, %v478
    %480 = vdwg.mxu0
    %481 = vrot.lane.b32.xlu0 %v247, 56
    %v482 = vpop.permute.xlu0 %481
    %v485 = vsel %vm171, %v454, 0
    %487 = vmatpush.msra.mxu0 0.0
    %488 = vmatpush.msra.mxu0 0.0
    %489 = vmatpush.msra.mxu0 0.0
    %490 = vmatpush.msra.mxu0 0.0
    %491 = vmatpush.msra.mxu0 0.0
    %492 = vmatpush.msra.mxu0 0.0
    %493 = vmatpush.msra.mxu0 0.0
    %494 = vmatpush.msra.mxu0 0.0
    %495 = vmatpush.msra.mxu0 0.0
    %496 = vmatpush.msra.mxu0 0.0
    %497 = vmatpush.msra.mxu0 0.0
    %498 = vmatpush.msra.mxu0 0.0
    %499 = vmatpush.msra.mxu0 0.0
    %500 = vmatpush.msra.mxu0 0.0
    %501 = vmatpush.msra.mxu0 0.0
    %502 = vmatpush.msra.mxu0 %v482
    %503 = vmatmul.f32.gmra.mxu0 %v485
    %v504 = vpop.f32.mrf.mxu0
    %v505 = vadd.f32 0.0, %v504
    %506 = vdwg.mxu0
    %507 = vrot.lane.b32.xlu0 %v244, 112
    %v508 = vpop.permute.xlu0 %507
    %509 = vrot.lane.b32.xlu0 %v244, 80
    %v510 = vpop.permute.xlu0 %509
    %v511 = vsel %vm171, %v508, 0
    %v513 = vsel %vm171, %v510, 0
    %515 = vmatpush.xpose.msra.mxu0 0.0
    %516 = vmatpush.xpose.msra.mxu0 0.0
    %517 = vmatpush.xpose.msra.mxu0 0.0
    %518 = vmatpush.xpose.msra.mxu0 0.0
    %519 = vmatpush.xpose.msra.mxu0 0.0
    %520 = vmatpush.xpose.msra.mxu0 0.0
    %521 = vmatpush.xpose.msra.mxu0 0.0
    %522 = vmatpush.xpose.msra.mxu0 0.0
    %523 = vmatpush.xpose.msra.mxu0 0.0
    %524 = vmatpush.xpose.msra.mxu0 0.0
    %525 = vmatpush.xpose.msra.mxu0 0.0
    %526 = vmatpush.xpose.msra.mxu0 0.0
    %527 = vmatpush.xpose.msra.mxu0 0.0
    %528 = vmatpush.xpose.msra.mxu0 0.0
    %529 = vmatpush.xpose.msra.mxu0 0.0
    %530 = vmatpush.xpose.msra.mxu0 %v513
    %531 = vmatmul.f32.gmra.mxu0 %v511
    %v532 = vpop.f32.mrf.mxu0
    %v533 = vadd.f32 %v209, %v532
    %534 = vdwg.mxu0
    %535 = vrot.lane.b32.xlu0 %v247, 112
    %v536 = vpop.permute.xlu0 %535
    %537 = vrot.lane.b32.xlu0 %v247, 80
    %v538 = vpop.permute.xlu0 %537
    %v539 = vsel %vm171, %v536, 0
    %v541 = vsel %vm171, %v538, 0
    %543 = vmatpush.xpose.msra.mxu0 0.0
    %544 = vmatpush.xpose.msra.mxu0 0.0
    %545 = vmatpush.xpose.msra.mxu0 0.0
    %546 = vmatpush.xpose.msra.mxu0 0.0
    %547 = vmatpush.xpose.msra.mxu0 0.0
    %548 = vmatpush.xpose.msra.mxu0 0.0
    %549 = vmatpush.xpose.msra.mxu0 0.0
    %550 = vmatpush.xpose.msra.mxu0 0.0
    %551 = vmatpush.xpose.msra.mxu0 0.0
    %552 = vmatpush.xpose.msra.mxu0 0.0
    %553 = vmatpush.xpose.msra.mxu0 0.0
    %554 = vmatpush.xpose.msra.mxu0 0.0
    %555 = vmatpush.xpose.msra.mxu0 0.0
    %556 = vmatpush.xpose.msra.mxu0 0.0
    %557 = vmatpush.xpose.msra.mxu0 0.0
    %558 = vmatpush.xpose.msra.mxu0 %v541
    %559 = vmatmul.f32.gmra.mxu0 %v539
    %v560 = vpop.f32.mrf.mxu0
    %v561 = vadd.f32 %v210, %v560
    %562 = vdwg.mxu0
    %v563 = vsel %vm171, %v533, -inf
    %564 = vmax.xlane.f32.xlu0 %v563
    %v565 = vpop.xlane.xlu0 %564
    %v566 = vsel %vm171, %v561, -inf
    %567 = vmax.xlane.f32.xlu0 %v566
    %v568 = vpop.xlane.xlu0 %567
    %v569 = vsub.f32 %v533, %v565
    %v570 = vsub.f32 %v561, %v568
    %v571 = vmul.f32 %v569, 1.442695
    %v572 = vpow.pop %v571
    %v573 = vmul.f32 %v570, 1.442695
    %v574 = vpow.pop %v573
    %v575 = vsel %vm171, %v572, 0.0
    %576 = vadd.xlane.f32.xlu0 %v575
    %v577 = vpop.xlane.xlu0 %576
    %v578 = vsel %vm171, %v574, 0.0
    %579 = vadd.xlane.f32.xlu0 %v578
    %v580 = vpop.xlane.xlu0 %579
    %v581 = vrcp.pop %v577
    %v582 = vrcp.pop %v580
    %v583 = vmul.f32 %v572, %v581
    %v584 = vmul.f32 %v574, %v582
    %585 = vrot.lane.b32.xlu0 %v244, 48
    %v586 = vpop.permute.xlu0 %585
    %v589 = vsel %vm171, %v583, 0
    %591 = vmatpush.msra.mxu0 0.0
    %592 = vmatpush.msra.mxu0 0.0
    %593 = vmatpush.msra.mxu0 0.0
    %594 = vmatpush.msra.mxu0 0.0
    %595 = vmatpush.msra.mxu0 0.0
    %596 = vmatpush.msra.mxu0 0.0
    %597 = vmatpush.msra.mxu0 0.0
    %598 = vmatpush.msra.mxu0 0.0
    %599 = vmatpush.msra.mxu0 0.0
    %600 = vmatpush.msra.mxu0 0.0
    %601 = vmatpush.msra.mxu0 0.0
    %602 = vmatpush.msra.mxu0 0.0
    %603 = vmatpush.msra.mxu0 0.0
    %604 = vmatpush.msra.mxu0 0.0
    %605 = vmatpush.msra.mxu0 0.0
    %606 = vmatpush.msra.mxu0 %v586
    %607 = vmatmul.f32.gmra.mxu0 %v589
    %v608 = vpop.f32.mrf.mxu0
    %v609 = vadd.f32 0.0, %v608
    %610 = vdwg.mxu0
    %611 = vrot.lane.b32.xlu0 %v247, 48
    %v612 = vpop.permute.xlu0 %611
    %v615 = vsel %vm171, %v584, 0
    %617 = vmatpush.msra.mxu0 0.0
    %618 = vmatpush.msra.mxu0 0.0
    %619 = vmatpush.msra.mxu0 0.0
    %620 = vmatpush.msra.mxu0 0.0
    %621 = vmatpush.msra.mxu0 0.0
    %622 = vmatpush.msra.mxu0 0.0
    %623 = vmatpush.msra.mxu0 0.0
    %624 = vmatpush.msra.mxu0 0.0
    %625 = vmatpush.msra.mxu0 0.0
    %626 = vmatpush.msra.mxu0 0.0
    %627 = vmatpush.msra.mxu0 0.0
    %628 = vmatpush.msra.mxu0 0.0
    %629 = vmatpush.msra.mxu0 0.0
    %630 = vmatpush.msra.mxu0 0.0
    %631 = vmatpush.msra.mxu0 0.0
    %632 = vmatpush.msra.mxu0 %v612
    %633 = vmatmul.f32.gmra.mxu0 %v615
    %v634 = vpop.f32.mrf.mxu0
    %v635 = vadd.f32 0.0, %v634
    %636 = vdwg.mxu0
    %637 = vrot.lane.b32.xlu0 %v244, 104
    %v638 = vpop.permute.xlu0 %637
    %639 = vrot.lane.b32.xlu0 %v244, 72
    %v640 = vpop.permute.xlu0 %639
    %v641 = vsel %vm171, %v638, 0
    %v643 = vsel %vm171, %v640, 0
    %645 = vmatpush.xpose.msra.mxu0 0.0
    %646 = vmatpush.xpose.msra.mxu0 0.0
    %647 = vmatpush.xpose.msra.mxu0 0.0
    %648 = vmatpush.xpose.msra.mxu0 0.0
    %649 = vmatpush.xpose.msra.mxu0 0.0
    %650 = vmatpush.xpose.msra.mxu0 0.0
    %651 = vmatpush.xpose.msra.mxu0 0.0
    %652 = vmatpush.xpose.msra.mxu0 0.0
    %653 = vmatpush.xpose.msra.mxu0 0.0
    %654 = vmatpush.xpose.msra.mxu0 0.0
    %655 = vmatpush.xpose.msra.mxu0 0.0
    %656 = vmatpush.xpose.msra.mxu0 0.0
    %657 = vmatpush.xpose.msra.mxu0 0.0
    %658 = vmatpush.xpose.msra.mxu0 0.0
    %659 = vmatpush.xpose.msra.mxu0 0.0
    %660 = vmatpush.xpose.msra.mxu0 %v643
    %661 = vmatmul.f32.gmra.mxu0 %v641
    %v662 = vpop.f32.mrf.mxu0
    %v663 = vadd.f32 %v209, %v662
    %664 = vdwg.mxu0
    %665 = vrot.lane.b32.xlu0 %v247, 104
    %v666 = vpop.permute.xlu0 %665
    %667 = vrot.lane.b32.xlu0 %v247, 72
    %v668 = vpop.permute.xlu0 %667
    %v669 = vsel %vm171, %v666, 0
    %v671 = vsel %vm171, %v668, 0
    %673 = vmatpush.xpose.msra.mxu0 0.0
    %674 = vmatpush.xpose.msra.mxu0 0.0
    %675 = vmatpush.xpose.msra.mxu0 0.0
    %676 = vmatpush.xpose.msra.mxu0 0.0
    %677 = vmatpush.xpose.msra.mxu0 0.0
    %678 = vmatpush.xpose.msra.mxu0 0.0
    %679 = vmatpush.xpose.msra.mxu0 0.0
    %680 = vmatpush.xpose.msra.mxu0 0.0
    %681 = vmatpush.xpose.msra.mxu0 0.0
    %682 = vmatpush.xpose.msra.mxu0 0.0
    %683 = vmatpush.xpose.msra.mxu0 0.0
    %684 = vmatpush.xpose.msra.mxu0 0.0
    %685 = vmatpush.xpose.msra.mxu0 0.0
    %686 = vmatpush.xpose.msra.mxu0 0.0
    %687 = vmatpush.xpose.msra.mxu0 0.0
    %688 = vmatpush.xpose.msra.mxu0 %v671
    %689 = vmatmul.f32.gmra.mxu0 %v669
    %v690 = vpop.f32.mrf.mxu0
    %v691 = vadd.f32 %v210, %v690
    %692 = vdwg.mxu0
    %v693 = vsel %vm171, %v663, -inf
    %694 = vmax.xlane.f32.xlu0 %v693
    %v695 = vpop.xlane.xlu0 %694
    %v696 = vsel %vm171, %v691, -inf
    %697 = vmax.xlane.f32.xlu0 %v696
    %v698 = vpop.xlane.xlu0 %697
    %v699 = vsub.f32 %v663, %v695
    %v700 = vsub.f32 %v691, %v698
    %v701 = vmul.f32 %v699, 1.442695
    %v702 = vpow.pop %v701
    %v703 = vmul.f32 %v700, 1.442695
    %v704 = vpow.pop %v703
    %v705 = vsel %vm171, %v702, 0.0
    %706 = vadd.xlane.f32.xlu0 %v705
    %v707 = vpop.xlane.xlu0 %706
    %v708 = vsel %vm171, %v704, 0.0
    %709 = vadd.xlane.f32.xlu0 %v708
    %v710 = vpop.xlane.xlu0 %709
    %v711 = vrcp.pop %v707
    %v712 = vrcp.pop %v710
    %v713 = vmul.f32 %v702, %v711
    %v714 = vmul.f32 %v704, %v712
    %715 = vrot.lane.b32.xlu0 %v244, 40
    %v716 = vpop.permute.xlu0 %715
    %v719 = vsel %vm171, %v713, 0
    %721 = vmatpush.msra.mxu0 0.0
    %722 = vmatpush.msra.mxu0 0.0
    %723 = vmatpush.msra.mxu0 0.0
    %724 = vmatpush.msra.mxu0 0.0
    %725 = vmatpush.msra.mxu0 0.0
    %726 = vmatpush.msra.mxu0 0.0
    %727 = vmatpush.msra.mxu0 0.0
    %728 = vmatpush.msra.mxu0 0.0
    %729 = vmatpush.msra.mxu0 0.0
    %730 = vmatpush.msra.mxu0 0.0
    %731 = vmatpush.msra.mxu0 0.0
    %732 = vmatpush.msra.mxu0 0.0
    %733 = vmatpush.msra.mxu0 0.0
    %734 = vmatpush.msra.mxu0 0.0
    %735 = vmatpush.msra.mxu0 0.0
    %736 = vmatpush.msra.mxu0 %v716
    %737 = vmatmul.f32.gmra.mxu0 %v719
    %v738 = vpop.f32.mrf.mxu0
    %v739 = vadd.f32 0.0, %v738
    %740 = vdwg.mxu0
    %741 = vrot.lane.b32.xlu0 %v247, 40
    %v742 = vpop.permute.xlu0 %741
    %v745 = vsel %vm171, %v714, 0
    %747 = vmatpush.msra.mxu0 0.0
    %748 = vmatpush.msra.mxu0 0.0
    %749 = vmatpush.msra.mxu0 0.0
    %750 = vmatpush.msra.mxu0 0.0
    %751 = vmatpush.msra.mxu0 0.0
    %752 = vmatpush.msra.mxu0 0.0
    %753 = vmatpush.msra.mxu0 0.0
    %754 = vmatpush.msra.mxu0 0.0
    %755 = vmatpush.msra.mxu0 0.0
    %756 = vmatpush.msra.mxu0 0.0
    %757 = vmatpush.msra.mxu0 0.0
    %758 = vmatpush.msra.mxu0 0.0
    %759 = vmatpush.msra.mxu0 0.0
    %760 = vmatpush.msra.mxu0 0.0
    %761 = vmatpush.msra.mxu0 0.0
    %762 = vmatpush.msra.mxu0 %v742
    %763 = vmatmul.f32.gmra.mxu0 %v745
    %v764 = vpop.f32.mrf.mxu0
    %v765 = vadd.f32 0.0, %v764
    %766 = vdwg.mxu0
    %769 = vrot.lane.b32.xlu0 %v479, 8
    %v770 = vpop.permute.xlu0 %769
    %771 = vrot.lane.b32.xlu0 %v505, 8
    %v772 = vpop.permute.xlu0 %771
    %777 = vrot.lane.b32.xlu0 %v609, 16
    %v778 = vpop.permute.xlu0 %777
    %779 = vrot.lane.b32.xlu0 %v635, 16
    %v780 = vpop.permute.xlu0 %779
    %785 = vrot.lane.b32.xlu0 %v739, 24
    %v786 = vpop.permute.xlu0 %785
    %787 = vrot.lane.b32.xlu0 %v765, 24
    %v788 = vpop.permute.xlu0 %787
    %v791 = vsel %vm171, %v349, %v770
    %v792 = vsel %vm171, %v375, %v772
    %vm793 = vcmask 130048
    %v794 = vsel %vm793, %v791, %v778
    %v795 = vsel %vm793, %v792, %v780
    %vm796 = vcmask 195584
    %v797 = vsel %vm796, %v794, %v786
    %v798 = vsel %vm796, %v795, %v788
    %v799 = vld [vmem:[%s7] sm:$0xff]
    %v800 = vld [vmem:[%s7 + $0x8] sm:$0xff]
    %v801 = vld [vmem:[%s7 + $0x10] sm:$0xff]
    %v802 = vld [vmem:[%s7 + $0x18] sm:$0xff]
    %v803 = vld [vmem:[%s8] sm:$0x1]
    %v805 = vperm.slane %v803, 0
    %v808 = vsel %vm219, %v797, 0
    %v811 = vsel %vm219, %v798, 0
    %813 = vmatpush.msra.mxu0 0.0
    %814 = vmatpush.msra.mxu0 0.0
    %815 = vmatpush.msra.mxu0 0.0
    %816 = vmatpush.msra.mxu0 0.0
    %817 = vmatpush.msra.mxu0 0.0
    %818 = vmatpush.msra.mxu0 0.0
    %819 = vmatpush.msra.mxu0 0.0
    %820 = vmatpush.msra.mxu0 0.0
    %821 = vmatpush.msra.mxu0 0.0
    %822 = vmatpush.msra.mxu0 0.0
    %823 = vmatpush.msra.mxu0 0.0
    %824 = vmatpush.msra.mxu0 0.0
    %825 = vmatpush.msra.mxu0 %v802
    %826 = vmatpush.msra.mxu0 %v801
    %827 = vmatpush.msra.mxu0 %v800
    %828 = vmatpush.msra.mxu0 %v799
    %829 = vmatmul.f32.gmra.mxu0 %v808
    %v830 = vpop.f32.mrf.mxu0
    %v831 = vadd.f32 %v805, %v830
    %832 = vmatmul.f32.gmra.mxu0 %v811
    %v833 = vpop.f32.mrf.mxu0
    %v834 = vadd.f32 %v805, %v833
    %835 = vdwg.mxu0
    %v836 = vadd.f32 %v196, %v831
    %v837 = vadd.f32 %v199, %v834
    %v838 = vld [vmem:[%s9] sm:$0x1]
    %v839 = vld [vmem:[%s10] sm:$0x1]
    %v840 = vsel %vm219, %v836, 0.0
    %841 = vadd.xlane.f32.xlu0 %v840
    %v842 = vpop.xlane.xlu0 %841
    %v843 = vsel %vm219, %v837, 0.0
    %844 = vadd.xlane.f32.xlu0 %v843
    %v845 = vpop.xlane.xlu0 %844
    %v846 = vrcp.pop 32.0
    %v847 = vmul.f32 32.0, %v846
    %v848 = vsub.f32 1.0, %v847
    %v849 = vmul.f32 %v846, %v848
    %v850 = vadd.f32 %v846, %v849
    %vm851 = vweird.f32 %v846
    %v852 = vsel %vm851, %v846, %v850
    %v853 = vmul.f32 %v842, %v852
    %v854 = vmul.f32 %v845, %v852
    %v855 = vsub.f32 %v836, %v853
    %v856 = vsub.f32 %v837, %v854
    %v857 = vmul.f32 %v855, %v855
    %v858 = vmul.f32 %v856, %v856
    %v859 = vsel %vm219, %v857, 0.0
    %860 = vadd.xlane.f32.xlu0 %v859
    %v861 = vpop.xlane.xlu0 %860
    %v862 = vsel %vm219, %v858, 0.0
    %863 = vadd.xlane.f32.xlu0 %v862
    %v864 = vpop.xlane.xlu0 %863
    %v865 = vmul.f32 %v861, %v852
    %v866 = vmul.f32 %v864, %v852
    %v867 = vadd.f32 %v865, 1e-05
    %v868 = vadd.f32 %v866, 1e-05
    %v869 = vrsqrt.pop %v867
    %v870 = vmul.f32 %v869, %v867
    %v871 = vmul.f32 %v870, %v869
    %v872 = vmul.f32 0.5, %v871
    %v873 = vsub.f32 1.5, %v872
    %v874 = vmul.f32 %v869, %v873
    %vm875 = vweird.f32 %v867
    %vm876 = vweird.f32 %v869
    %vm877 = vmor %vm875, %vm876
    %v878 = vsel %vm877, %v869, %v874
    %v879 = vrsqrt.pop %v868
    %v880 = vmul.f32 %v879, %v868
    %v881 = vmul.f32 %v880, %v879
    %v882 = vmul.f32 0.5, %v881
    %v883 = vsub.f32 1.5, %v882
    %v884 = vmul.f32 %v879, %v883
    %vm885 = vweird.f32 %v868
    %vm886 = vweird.f32 %v879
    %vm887 = vmor %vm885, %vm886
    %v888 = vsel %vm887, %v879, %v884
    %v889 = vmul.f32 %v855, %v878
    %v890 = vmul.f32 %v856, %v888
    %v892 = vperm.slane %v838, 0
    %v894 = vmul.f32 %v889, %v892
    %v895 = vmul.f32 %v890, %v892
    %v897 = vperm.slane %v839, 0
    %v899 = vadd.f32 %v894, %v897
    %v900 = vadd.f32 %v895, %v897
    %v901 = vld [vmem:[%s11] sm:$0xff]
    %v902 = vld [vmem:[%s11 + $0x8] sm:$0xff]
    %v903 = vld [vmem:[%s11 + $0x10] sm:$0xff]
    %v904 = vld [vmem:[%s11 + $0x18] sm:$0xff]
    %v905 = vld [vmem:[%s12] sm:$0x1]
    %v907 = vperm.slane %v905, 0
    %v910 = vsel %vm219, %v899, 0
    %v913 = vsel %vm219, %v900, 0
    %915 = vmatpush.msra.mxu0 0.0
    %916 = vmatpush.msra.mxu0 0.0
    %917 = vmatpush.msra.mxu0 0.0
    %918 = vmatpush.msra.mxu0 0.0
    %919 = vmatpush.msra.mxu0 0.0
    %920 = vmatpush.msra.mxu0 0.0
    %921 = vmatpush.msra.mxu0 0.0
    %922 = vmatpush.msra.mxu0 0.0
    %923 = vmatpush.msra.mxu0 0.0
    %924 = vmatpush.msra.mxu0 0.0
    %925 = vmatpush.msra.mxu0 0.0
    %926 = vmatpush.msra.mxu0 0.0
    %927 = vmatpush.msra.mxu0 %v904
    %928 = vmatpush.msra.mxu0 %v903
    %929 = vmatpush.msra.mxu0 %v902
    %930 = vmatpush.msra.mxu0 %v901
    %931 = vmatmul.f32.gmra.mxu0 %v910
    %v932 = vpop.f32.mrf.mxu0
    %v933 = vadd.f32 %v907, %v932
    %934 = vmatmul.f32.gmra.mxu0 %v913
    %v935 = vpop.f32.mrf.mxu0
    %v936 = vadd.f32 %v907, %v935
    %937 = vdwg.mxu0
    %v938 = vmax.f32 %v933, 0.0
    %v939 = vmax.f32 %v936, 0.0
    %v940 = vld [vmem:[%s13] sm:$0xff]
    %v941 = vld [vmem:[%s13 + $0x8] sm:$0xff]
    %v942 = vld [vmem:[%s13 + $0x10] sm:$0xff]
    %v943 = vld [vmem:[%s13 + $0x18] sm:$0xff]
    %v944 = vld [vmem:[%s13 + $0x20] sm:$0xff]
    %v945 = vld [vmem:[%s13 + $0x28] sm:$0xff]
    %v946 = vld [vmem:[%s13 + $0x30] sm:$0xff]
    %v947 = vld [vmem:[%s13 + $0x38] sm:$0xff]
    %v948 = vld [vmem:[#allocation11] sm:$0x1]
    %v950 = vperm.slane %v948, 0
    %vm952 = vcmask 523264
    %v954 = vsel %vm952, %v938, 0
    %v957 = vsel %vm952, %v939, 0
    %959 = vmatpush.msra.mxu0 0.0
    %960 = vmatpush.msra.mxu0 0.0
    %961 = vmatpush.msra.mxu0 0.0
    %962 = vmatpush.msra.mxu0 0.0
    %963 = vmatpush.msra.mxu0 0.0
    %964 = vmatpush.msra.mxu0 0.0
    %965 = vmatpush.msra.mxu0 0.0
    %966 = vmatpush.msra.mxu0 0.0
    %967 = vmatpush.msra.mxu0 %v947
    %968 = vmatpush.msra.mxu0 %v946
    %969 = vmatpush.msra.mxu0 %v945
    %970 = vmatpush.msra.mxu0 %v944
    %971 = vmatpush.msra.mxu0 %v943
    %972 = vmatpush.msra.mxu0 %v942
    %973 = vmatpush.msra.mxu0 %v941
    %974 = vmatpush.msra.mxu0 %v940
    %975 = vmatmul.f32.gmra.mxu0 %v954
    %v976 = vpop.f32.mrf.mxu0
    %v977 = vadd.f32 %v950, %v976
    %978 = vmatmul.f32.gmra.mxu0 %v957
    %v979 = vpop.f32.mrf.mxu0
    %v980 = vadd.f32 %v950, %v979
    %981 = vdwg.mxu0
    %v982 = vadd.f32 %v899, %v977
    %v983 = vadd.f32 %v900, %v980
    %v984 = vld [vmem:[%s15] sm:$0x1]
    %v985 = vld [vmem:[%s16] sm:$0x1]
    %v986 = vsel %vm219, %v982, 0.0
    %987 = vadd.xlane.f32.xlu0 %v986
    %v988 = vpop.xlane.xlu0 %987
    %v989 = vsel %vm219, %v983, 0.0
    %990 = vadd.xlane.f32.xlu0 %v989
    %v991 = vpop.xlane.xlu0 %990
    %v992 = vmul.f32 %v988, %v852
    %v993 = vmul.f32 %v991, %v852
    %v994 = vsub.f32 %v982, %v992
    %v995 = vsub.f32 %v983, %v993
    %v996 = vmul.f32 %v994, %v994
    %v997 = vmul.f32 %v995, %v995
    %v998 = vsel %vm219, %v996, 0.0
    %999 = vadd.xlane.f32.xlu0 %v998
    %v1000 = vpop.xlane.xlu0 %999
    %v1001 = vsel %vm219, %v997, 0.0
    %1002 = vadd.xlane.f32.xlu0 %v1001
    %v1003 = vpop.xlane.xlu0 %1002
    %v1004 = vmul.f32 %v1000, %v852
    %v1005 = vmul.f32 %v1003, %v852
    %v1006 = vadd.f32 %v1004, 1e-05
    %v1007 = vadd.f32 %v1005, 1e-05
    %v1008 = vrsqrt.pop %v1006
    %v1009 = vmul.f32 %v1008, %v1006
    %v1010 = vmul.f32 %v1009, %v1008
    %v1011 = vmul.f32 0.5, %v1010
    %v1012 = vsub.f32 1.5, %v1011
    %v1013 = vmul.f32 %v1008, %v1012
    %vm1014 = vweird.f32 %v1006
    %vm1015 = vweird.f32 %v1008
    %vm1016 = vmor %vm1014, %vm1015
    %v1017 = vsel %vm1016, %v1008, %v1013
    %v1018 = vrsqrt.pop %v1007
    %v1019 = vmul.f32 %v1018, %v1007
    %v1020 = vmul.f32 %v1019, %v1018
    %v1021 = vmul.f32 0.5, %v1020
    %v1022 = vsub.f32 1.5, %v1021
    %v1023 = vmul.f32 %v1018, %v1022
    %vm1024 = vweird.f32 %v1007
    %vm1025 = vweird.f32 %v1018
    %vm1026 = vmor %vm1024, %vm1025
    %v1027 = vsel %vm1026, %v1018, %v1023
    %v1028 = vmul.f32 %v994, %v1017
    %v1029 = vmul.f32 %v995, %v1027
    %v1031 = vperm.slane %v984, 0
    %v1033 = vmul.f32 %v1028, %v1031
    %v1034 = vmul.f32 %v1029, %v1031
    %v1036 = vperm.slane %v985, 0
    %v1038 = vadd.f32 %v1033, %v1036
    %v1039 = vadd.f32 %v1034, %v1036
    %s1040 = scalar_lea.vmem %s5, 32
    %v1041 = vld [vmem:[%s1040] sm:$0xff]
    %v1042 = vld [vmem:[%s1040 + $0x8] sm:$0xff]
    %v1043 = vld [vmem:[%s1040 + $0x10] sm:$0xff]
    %v1044 = vld [vmem:[%s1040 + $0x18] sm:$0xff]
    %s1045 = scalar_lea.vmem %s6, 1
    %v1046 = vld [vmem:[%s1045] sm:$0x1]
    %v1048 = vperm.slane %v1046, 0
    %v1051 = vsel %vm219, %v1038, 0
    %v1054 = vsel %vm219, %v1039, 0
    %1056 = vmatpush.msra.mxu0 0.0
    %1057 = vmatpush.msra.mxu0 0.0
    %1058 = vmatpush.msra.mxu0 0.0
    %1059 = vmatpush.msra.mxu0 0.0
    %1060 = vmatpush.msra.mxu0 0.0
    %1061 = vmatpush.msra.mxu0 0.0
    %1062 = vmatpush.msra.mxu0 0.0
    %1063 = vmatpush.msra.mxu0 0.0
    %1064 = vmatpush.msra.mxu0 0.0
    %1065 = vmatpush.msra.mxu0 0.0
    %1066 = vmatpush.msra.mxu0 0.0
    %1067 = vmatpush.msra.mxu0 0.0
    %1068 = vmatpush.msra.mxu0 %v1044
    %1069 = vmatpush.msra.mxu0 %v1043
    %1070 = vmatpush.msra.mxu0 %v1042
    %1071 = vmatpush.msra.mxu0 %v1041
    %1072 = vmatmul.f32.gmra.mxu0 %v1051
    %v1073 = vpop.f32.mrf.mxu0
    %v1074 = vadd.f32 %v1048, %v1073
    %1075 = vmatmul.f32.gmra.mxu0 %v1054
    %v1076 = vpop.f32.mrf.mxu0
    %v1077 = vadd.f32 %v1048, %v1076
    %1078 = vdwg.mxu0
    %1080 = vrot.lane.b32.xlu0 %v1074, 96
    %v1081 = vpop.permute.xlu0 %1080
    %v1082 = vsel %vm171, %v1074, 0
    %v1084 = vsel %vm171, %v1081, 0
    %1086 = vmatpush.xpose.msra.mxu0 0.0
    %1087 = vmatpush.xpose.msra.mxu0 0.0
    %1088 = vmatpush.xpose.msra.mxu0 0.0
    %1089 = vmatpush.xpose.msra.mxu0 0.0
    %1090 = vmatpush.xpose.msra.mxu0 0.0
    %1091 = vmatpush.xpose.msra.mxu0 0.0
    %1092 = vmatpush.xpose.msra.mxu0 0.0
    %1093 = vmatpush.xpose.msra.mxu0 0.0
    %1094 = vmatpush.xpose.msra.mxu0 0.0
    %1095 = vmatpush.xpose.msra.mxu0 0.0
    %1096 = vmatpush.xpose.msra.mxu0 0.0
    %1097 = vmatpush.xpose.msra.mxu0 0.0
    %1098 = vmatpush.xpose.msra.mxu0 0.0
    %1099 = vmatpush.xpose.msra.mxu0 0.0
    %1100 = vmatpush.xpose.msra.mxu0 0.0
    %1101 = vmatpush.xpose.msra.mxu0 %v1084
    %1102 = vmatmul.f32.gmra.mxu0 %v1082
    %v1103 = vpop.f32.mrf.mxu0
    %v1104 = vadd.f32 %v209, %v1103
    %1105 = vdwg.mxu0
    %1107 = vrot.lane.b32.xlu0 %v1077, 96
    %v1108 = vpop.permute.xlu0 %1107
    %v1109 = vsel %vm171, %v1077, 0
    %v1111 = vsel %vm171, %v1108, 0
    %1113 = vmatpush.xpose.msra.mxu0 0.0
    %1114 = vmatpush.xpose.msra.mxu0 0.0
    %1115 = vmatpush.xpose.msra.mxu0 0.0
    %1116 = vmatpush.xpose.msra.mxu0 0.0
    %1117 = vmatpush.xpose.msra.mxu0 0.0
    %1118 = vmatpush.xpose.msra.mxu0 0.0
    %1119 = vmatpush.xpose.msra.mxu0 0.0
    %1120 = vmatpush.xpose.msra.mxu0 0.0
    %1121 = vmatpush.xpose.msra.mxu0 0.0
    %1122 = vmatpush.xpose.msra.mxu0 0.0
    %1123 = vmatpush.xpose.msra.mxu0 0.0
    %1124 = vmatpush.xpose.msra.mxu0 0.0
    %1125 = vmatpush.xpose.msra.mxu0 0.0
    %1126 = vmatpush.xpose.msra.mxu0 0.0
    %1127 = vmatpush.xpose.msra.mxu0 0.0
    %1128 = vmatpush.xpose.msra.mxu0 %v1111
    %1129 = vmatmul.f32.gmra.mxu0 %v1109
    %v1130 = vpop.f32.mrf.mxu0
    %v1131 = vadd.f32 %v210, %v1130
    %1132 = vdwg.mxu0
    %v1133 = vsel %vm171, %v1104, -inf
    %1134 = vmax.xlane.f32.xlu0 %v1133
    %v1135 = vpop.xlane.xlu0 %1134
    %v1136 = vsel %vm171, %v1131, -inf
    %1137 = vmax.xlane.f32.xlu0 %v1136
    %v1138 = vpop.xlane.xlu0 %1137
    %v1139 = vsub.f32 %v1104, %v1135
    %v1140 = vsub.f32 %v1131, %v1138
    %v1141 = vmul.f32 %v1139, 1.442695
    %v1142 = vpow.pop %v1141
    %v1143 = vmul.f32 %v1140, 1.442695
    %v1144 = vpow.pop %v1143
    %v1145 = vsel %vm171, %v1142, 0.0
    %1146 = vadd.xlane.f32.xlu0 %v1145
    %v1147 = vpop.xlane.xlu0 %1146
    %v1148 = vsel %vm171, %v1144, 0.0
    %1149 = vadd.xlane.f32.xlu0 %v1148
    %v1150 = vpop.xlane.xlu0 %1149
    %v1151 = vrcp.pop %v1147
    %v1152 = vrcp.pop %v1150
    %v1153 = vmul.f32 %v1142, %v1151
    %v1154 = vmul.f32 %v1144, %v1152
    %1155 = vrot.lane.b32.xlu0 %v1074, 64
    %v1156 = vpop.permute.xlu0 %1155
    %v1159 = vsel %vm171, %v1153, 0
    %1161 = vmatpush.msra.mxu0 0.0
    %1162 = vmatpush.msra.mxu0 0.0
    %1163 = vmatpush.msra.mxu0 0.0
    %1164 = vmatpush.msra.mxu0 0.0
    %1165 = vmatpush.msra.mxu0 0.0
    %1166 = vmatpush.msra.mxu0 0.0
    %1167 = vmatpush.msra.mxu0 0.0
    %1168 = vmatpush.msra.mxu0 0.0
    %1169 = vmatpush.msra.mxu0 0.0
    %1170 = vmatpush.msra.mxu0 0.0
    %1171 = vmatpush.msra.mxu0 0.0
    %1172 = vmatpush.msra.mxu0 0.0
    %1173 = vmatpush.msra.mxu0 0.0
    %1174 = vmatpush.msra.mxu0 0.0
    %1175 = vmatpush.msra.mxu0 0.0
    %1176 = vmatpush.msra.mxu0 %v1156
    %1177 = vmatmul.f32.gmra.mxu0 %v1159
    %v1178 = vpop.f32.mrf.mxu0
    %v1179 = vadd.f32 0.0, %v1178
    %1180 = vdwg.mxu0
    %1181 = vrot.lane.b32.xlu0 %v1077, 64
    %v1182 = vpop.permute.xlu0 %1181
    %v1185 = vsel %vm171, %v1154, 0
    %1187 = vmatpush.msra.mxu0 0.0
    %1188 = vmatpush.msra.mxu0 0.0
    %1189 = vmatpush.msra.mxu0 0.0
    %1190 = vmatpush.msra.mxu0 0.0
    %1191 = vmatpush.msra.mxu0 0.0
    %1192 = vmatpush.msra.mxu0 0.0
    %1193 = vmatpush.msra.mxu0 0.0
    %1194 = vmatpush.msra.mxu0 0.0
    %1195 = vmatpush.msra.mxu0 0.0
    %1196 = vmatpush.msra.mxu0 0.0
    %1197 = vmatpush.msra.mxu0 0.0
    %1198 = vmatpush.msra.mxu0 0.0
    %1199 = vmatpush.msra.mxu0 0.0
    %1200 = vmatpush.msra.mxu0 0.0
    %1201 = vmatpush.msra.mxu0 0.0
    %1202 = vmatpush.msra.mxu0 %v1182
    %1203 = vmatmul.f32.gmra.mxu0 %v1185
    %v1204 = vpop.f32.mrf.mxu0
    %v1205 = vadd.f32 0.0, %v1204
    %1206 = vdwg.mxu0
    %1207 = vrot.lane.b32.xlu0 %v1074, 120
    %v1208 = vpop.permute.xlu0 %1207
    %1209 = vrot.lane.b32.xlu0 %v1074, 88
    %v1210 = vpop.permute.xlu0 %1209
    %v1211 = vsel %vm171, %v1208, 0
    %v1213 = vsel %vm171, %v1210, 0
    %1215 = vmatpush.xpose.msra.mxu0 0.0
    %1216 = vmatpush.xpose.msra.mxu0 0.0
    %1217 = vmatpush.xpose.msra.mxu0 0.0
    %1218 = vmatpush.xpose.msra.mxu0 0.0
    %1219 = vmatpush.xpose.msra.mxu0 0.0
    %1220 = vmatpush.xpose.msra.mxu0 0.0
    %1221 = vmatpush.xpose.msra.mxu0 0.0
    %1222 = vmatpush.xpose.msra.mxu0 0.0
    %1223 = vmatpush.xpose.msra.mxu0 0.0
    %1224 = vmatpush.xpose.msra.mxu0 0.0
    %1225 = vmatpush.xpose.msra.mxu0 0.0
    %1226 = vmatpush.xpose.msra.mxu0 0.0
    %1227 = vmatpush.xpose.msra.mxu0 0.0
    %1228 = vmatpush.xpose.msra.mxu0 0.0
    %1229 = vmatpush.xpose.msra.mxu0 0.0
    %1230 = vmatpush.xpose.msra.mxu0 %v1213
    %1231 = vmatmul.f32.gmra.mxu0 %v1211
    %v1232 = vpop.f32.mrf.mxu0
    %v1233 = vadd.f32 %v209, %v1232
    %1234 = vdwg.mxu0
    %1235 = vrot.lane.b32.xlu0 %v1077, 120
    %v1236 = vpop.permute.xlu0 %1235
    %1237 = vrot.lane.b32.xlu0 %v1077, 88
    %v1238 = vpop.permute.xlu0 %1237
    %v1239 = vsel %vm171, %v1236, 0
    %v1241 = vsel %vm171, %v1238, 0
    %1243 = vmatpush.xpose.msra.mxu0 0.0
    %1244 = vmatpush.xpose.msra.mxu0 0.0
    %1245 = vmatpush.xpose.msra.mxu0 0.0
    %1246 = vmatpush.xpose.msra.mxu0 0.0
    %1247 = vmatpush.xpose.msra.mxu0 0.0
    %1248 = vmatpush.xpose.msra.mxu0 0.0
    %1249 = vmatpush.xpose.msra.mxu0 0.0
    %1250 = vmatpush.xpose.msra.mxu0 0.0
    %1251 = vmatpush.xpose.msra.mxu0 0.0
    %1252 = vmatpush.xpose.msra.mxu0 0.0
    %1253 = vmatpush.xpose.msra.mxu0 0.0
    %1254 = vmatpush.xpose.msra.mxu0 0.0
    %1255 = vmatpush.xpose.msra.mxu0 0.0
    %1256 = vmatpush.xpose.msra.mxu0 0.0
    %1257 = vmatpush.xpose.msra.mxu0 0.0
    %1258 = vmatpush.xpose.msra.mxu0 %v1241
    %1259 = vmatmul.f32.gmra.mxu0 %v1239
    %v1260 = vpop.f32.mrf.mxu0
    %v1261 = vadd.f32 %v210, %v1260
    %1262 = vdwg.mxu0
    %v1263 = vsel %vm171, %v1233, -inf
    %1264 = vmax.xlane.f32.xlu0 %v1263
    %v1265 = vpop.xlane.xlu0 %1264
    %v1266 = vsel %vm171, %v1261, -inf
    %1267 = vmax.xlane.f32.xlu0 %v1266
    %v1268 = vpop.xlane.xlu0 %1267
    %v1269 = vsub.f32 %v1233, %v1265
    %v1270 = vsub.f32 %v1261, %v1268
    %v1271 = vmul.f32 %v1269, 1.442695
    %v1272 = vpow.pop %v1271
    %v1273 = vmul.f32 %v1270, 1.442695
    %v1274 = vpow.pop %v1273
    %v1275 = vsel %vm171, %v1272, 0.0
    %1276 = vadd.xlane.f32.xlu0 %v1275
    %v1277 = vpop.xlane.xlu0 %1276
    %v1278 = vsel %vm171, %v1274, 0.0
    %1279 = vadd.xlane.f32.xlu0 %v1278
    %v1280 = vpop.xlane.xlu0 %1279
    %v1281 = vrcp.pop %v1277
    %v1282 = vrcp.pop %v1280
    %v1283 = vmul.f32 %v1272, %v1281
    %v1284 = vmul.f32 %v1274, %v1282
    %1285 = vrot.lane.b32.xlu0 %v1074, 56
    %v1286 = vpop.permute.xlu0 %1285
    %v1289 = vsel %vm171, %v1283, 0
    %1291 = vmatpush.msra.mxu0 0.0
    %1292 = vmatpush.msra.mxu0 0.0
    %1293 = vmatpush.msra.mxu0 0.0
    %1294 = vmatpush.msra.mxu0 0.0
    %1295 = vmatpush.msra.mxu0 0.0
    %1296 = vmatpush.msra.mxu0 0.0
    %1297 = vmatpush.msra.mxu0 0.0
    %1298 = vmatpush.msra.mxu0 0.0
    %1299 = vmatpush.msra.mxu0 0.0
    %1300 = vmatpush.msra.mxu0 0.0
    %1301 = vmatpush.msra.mxu0 0.0
    %1302 = vmatpush.msra.mxu0 0.0
    %1303 = vmatpush.msra.mxu0 0.0
    %1304 = vmatpush.msra.mxu0 0.0
    %1305 = vmatpush.msra.mxu0 0.0
    %1306 = vmatpush.msra.mxu0 %v1286
    %1307 = vmatmul.f32.gmra.mxu0 %v1289
    %v1308 = vpop.f32.mrf.mxu0
    %v1309 = vadd.f32 0.0, %v1308
    %1310 = vdwg.mxu0
    %1311 = vrot.lane.b32.xlu0 %v1077, 56
    %v1312 = vpop.permute.xlu0 %1311
    %v1315 = vsel %vm171, %v1284, 0
    %1317 = vmatpush.msra.mxu0 0.0
    %1318 = vmatpush.msra.mxu0 0.0
    %1319 = vmatpush.msra.mxu0 0.0
    %1320 = vmatpush.msra.mxu0 0.0
    %1321 = vmatpush.msra.mxu0 0.0
    %1322 = vmatpush.msra.mxu0 0.0
    %1323 = vmatpush.msra.mxu0 0.0
    %1324 = vmatpush.msra.mxu0 0.0
    %1325 = vmatpush.msra.mxu0 0.0
    %1326 = vmatpush.msra.mxu0 0.0
    %1327 = vmatpush.msra.mxu0 0.0
    %1328 = vmatpush.msra.mxu0 0.0
    %1329 = vmatpush.msra.mxu0 0.0
    %1330 = vmatpush.msra.mxu0 0.0
    %1331 = vmatpush.msra.mxu0 0.0
    %1332 = vmatpush.msra.mxu0 %v1312
    %1333 = vmatmul.f32.gmra.mxu0 %v1315
    %v1334 = vpop.f32.mrf.mxu0
    %v1335 = vadd.f32 0.0, %v1334
    %1336 = vdwg.mxu0
    %1337 = vrot.lane.b32.xlu0 %v1074, 112
    %v1338 = vpop.permute.xlu0 %1337
    %1339 = vrot.lane.b32.xlu0 %v1074, 80
    %v1340 = vpop.permute.xlu0 %1339
    %v1341 = vsel %vm171, %v1338, 0
    %v1343 = vsel %vm171, %v1340, 0
    %1345 = vmatpush.xpose.msra.mxu0 0.0
    %1346 = vmatpush.xpose.msra.mxu0 0.0
    %1347 = vmatpush.xpose.msra.mxu0 0.0
    %1348 = vmatpush.xpose.msra.mxu0 0.0
    %1349 = vmatpush.xpose.msra.mxu0 0.0
    %1350 = vmatpush.xpose.msra.mxu0 0.0
    %1351 = vmatpush.xpose.msra.mxu0 0.0
    %1352 = vmatpush.xpose.msra.mxu0 0.0
    %1353 = vmatpush.xpose.msra.mxu0 0.0
    %1354 = vmatpush.xpose.msra.mxu0 0.0
    %1355 = vmatpush.xpose.msra.mxu0 0.0
    %1356 = vmatpush.xpose.msra.mxu0 0.0
    %1357 = vmatpush.xpose.msra.mxu0 0.0
    %1358 = vmatpush.xpose.msra.mxu0 0.0
    %1359 = vmatpush.xpose.msra.mxu0 0.0
    %1360 = vmatpush.xpose.msra.mxu0 %v1343
    %1361 = vmatmul.f32.gmra.mxu0 %v1341
    %v1362 = vpop.f32.mrf.mxu0
    %v1363 = vadd.f32 %v209, %v1362
    %1364 = vdwg.mxu0
    %1365 = vrot.lane.b32.xlu0 %v1077, 112
    %v1366 = vpop.permute.xlu0 %1365
    %1367 = vrot.lane.b32.xlu0 %v1077, 80
    %v1368 = vpop.permute.xlu0 %1367
    %v1369 = vsel %vm171, %v1366, 0
    %v1371 = vsel %vm171, %v1368, 0
    %1373 = vmatpush.xpose.msra.mxu0 0.0
    %1374 = vmatpush.xpose.msra.mxu0 0.0
    %1375 = vmatpush.xpose.msra.mxu0 0.0
    %1376 = vmatpush.xpose.msra.mxu0 0.0
    %1377 = vmatpush.xpose.msra.mxu0 0.0
    %1378 = vmatpush.xpose.msra.mxu0 0.0
    %1379 = vmatpush.xpose.msra.mxu0 0.0
    %1380 = vmatpush.xpose.msra.mxu0 0.0
    %1381 = vmatpush.xpose.msra.mxu0 0.0
    %1382 = vmatpush.xpose.msra.mxu0 0.0
    %1383 = vmatpush.xpose.msra.mxu0 0.0
    %1384 = vmatpush.xpose.msra.mxu0 0.0
    %1385 = vmatpush.xpose.msra.mxu0 0.0
    %1386 = vmatpush.xpose.msra.mxu0 0.0
    %1387 = vmatpush.xpose.msra.mxu0 0.0
    %1388 = vmatpush.xpose.msra.mxu0 %v1371
    %1389 = vmatmul.f32.gmra.mxu0 %v1369
    %v1390 = vpop.f32.mrf.mxu0
    %v1391 = vadd.f32 %v210, %v1390
    %1392 = vdwg.mxu0
    %v1393 = vsel %vm171, %v1363, -inf
    %1394 = vmax.xlane.f32.xlu0 %v1393
    %v1395 = vpop.xlane.xlu0 %1394
    %v1396 = vsel %vm171, %v1391, -inf
    %1397 = vmax.xlane.f32.xlu0 %v1396
    %v1398 = vpop.xlane.xlu0 %1397
    %v1399 = vsub.f32 %v1363, %v1395
    %v1400 = vsub.f32 %v1391, %v1398
    %v1401 = vmul.f32 %v1399, 1.442695
    %v1402 = vpow.pop %v1401
    %v1403 = vmul.f32 %v1400, 1.442695
    %v1404 = vpow.pop %v1403
    %v1405 = vsel %vm171, %v1402, 0.0
    %1406 = vadd.xlane.f32.xlu0 %v1405
    %v1407 = vpop.xlane.xlu0 %1406
    %v1408 = vsel %vm171, %v1404, 0.0
    %1409 = vadd.xlane.f32.xlu0 %v1408
    %v1410 = vpop.xlane.xlu0 %1409
    %v1411 = vrcp.pop %v1407
    %v1412 = vrcp.pop %v1410
    %v1413 = vmul.f32 %v1402, %v1411
    %v1414 = vmul.f32 %v1404, %v1412
    %1415 = vrot.lane.b32.xlu0 %v1074, 48
    %v1416 = vpop.permute.xlu0 %1415
    %v1419 = vsel %vm171, %v1413, 0
    %1421 = vmatpush.msra.mxu0 0.0
    %1422 = vmatpush.msra.mxu0 0.0
    %1423 = vmatpush.msra.mxu0 0.0
    %1424 = vmatpush.msra.mxu0 0.0
    %1425 = vmatpush.msra.mxu0 0.0
    %1426 = vmatpush.msra.mxu0 0.0
    %1427 = vmatpush.msra.mxu0 0.0
    %1428 = vmatpush.msra.mxu0 0.0
    %1429 = vmatpush.msra.mxu0 0.0
    %1430 = vmatpush.msra.mxu0 0.0
    %1431 = vmatpush.msra.mxu0 0.0
    %1432 = vmatpush.msra.mxu0 0.0
    %1433 = vmatpush.msra.mxu0 0.0
    %1434 = vmatpush.msra.mxu0 0.0
    %1435 = vmatpush.msra.mxu0 0.0
    %1436 = vmatpush.msra.mxu0 %v1416
    %1437 = vmatmul.f32.gmra.mxu0 %v1419
    %v1438 = vpop.f32.mrf.mxu0
    %v1439 = vadd.f32 0.0, %v1438
    %1440 = vdwg.mxu0
    %1441 = vrot.lane.b32.xlu0 %v1077, 48
    %v1442 = vpop.permute.xlu0 %1441
    %v1445 = vsel %vm171, %v1414, 0
    %1447 = vmatpush.msra.mxu0 0.0
    %1448 = vmatpush.msra.mxu0 0.0
    %1449 = vmatpush.msra.mxu0 0.0
    %1450 = vmatpush.msra.mxu0 0.0
    %1451 = vmatpush.msra.mxu0 0.0
    %1452 = vmatpush.msra.mxu0 0.0
    %1453 = vmatpush.msra.mxu0 0.0
    %1454 = vmatpush.msra.mxu0 0.0
    %1455 = vmatpush.msra.mxu0 0.0
    %1456 = vmatpush.msra.mxu0 0.0
    %1457 = vmatpush.msra.mxu0 0.0
    %1458 = vmatpush.msra.mxu0 0.0
    %1459 = vmatpush.msra.mxu0 0.0
    %1460 = vmatpush.msra.mxu0 0.0
    %1461 = vmatpush.msra.mxu0 0.0
    %1462 = vmatpush.msra.mxu0 %v1442
    %1463 = vmatmul.f32.gmra.mxu0 %v1445
    %v1464 = vpop.f32.mrf.mxu0
    %v1465 = vadd.f32 0.0, %v1464
    %1466 = vdwg.mxu0
    %1467 = vrot.lane.b32.xlu0 %v1074, 104
    %v1468 = vpop.permute.xlu0 %1467
    %1469 = vrot.lane.b32.xlu0 %v1074, 72
    %v1470 = vpop.permute.xlu0 %1469
    %v1471 = vsel %vm171, %v1468, 0
    %v1473 = vsel %vm171, %v1470, 0
    %1475 = vmatpush.xpose.msra.mxu0 0.0
    %1476 = vmatpush.xpose.msra.mxu0 0.0
    %1477 = vmatpush.xpose.msra.mxu0 0.0
    %1478 = vmatpush.xpose.msra.mxu0 0.0
    %1479 = vmatpush.xpose.msra.mxu0 0.0
    %1480 = vmatpush.xpose.msra.mxu0 0.0
    %1481 = vmatpush.xpose.msra.mxu0 0.0
    %1482 = vmatpush.xpose.msra.mxu0 0.0
    %1483 = vmatpush.xpose.msra.mxu0 0.0
    %1484 = vmatpush.xpose.msra.mxu0 0.0
    %1485 = vmatpush.xpose.msra.mxu0 0.0
    %1486 = vmatpush.xpose.msra.mxu0 0.0
    %1487 = vmatpush.xpose.msra.mxu0 0.0
    %1488 = vmatpush.xpose.msra.mxu0 0.0
    %1489 = vmatpush.xpose.msra.mxu0 0.0
    %1490 = vmatpush.xpose.msra.mxu0 %v1473
    %1491 = vmatmul.f32.gmra.mxu0 %v1471
    %v1492 = vpop.f32.mrf.mxu0
    %v1493 = vadd.f32 %v209, %v1492
    %1494 = vdwg.mxu0
    %1495 = vrot.lane.b32.xlu0 %v1077, 104
    %v1496 = vpop.permute.xlu0 %1495
    %1497 = vrot.lane.b32.xlu0 %v1077, 72
    %v1498 = vpop.permute.xlu0 %1497
    %v1499 = vsel %vm171, %v1496, 0
    %v1501 = vsel %vm171, %v1498, 0
    %1503 = vmatpush.xpose.msra.mxu0 0.0
    %1504 = vmatpush.xpose.msra.mxu0 0.0
    %1505 = vmatpush.xpose.msra.mxu0 0.0
    %1506 = vmatpush.xpose.msra.mxu0 0.0
    %1507 = vmatpush.xpose.msra.mxu0 0.0
    %1508 = vmatpush.xpose.msra.mxu0 0.0
    %1509 = vmatpush.xpose.msra.mxu0 0.0
    %1510 = vmatpush.xpose.msra.mxu0 0.0
    %1511 = vmatpush.xpose.msra.mxu0 0.0
    %1512 = vmatpush.xpose.msra.mxu0 0.0
    %1513 = vmatpush.xpose.msra.mxu0 0.0
    %1514 = vmatpush.xpose.msra.mxu0 0.0
    %1515 = vmatpush.xpose.msra.mxu0 0.0
    %1516 = vmatpush.xpose.msra.mxu0 0.0
    %1517 = vmatpush.xpose.msra.mxu0 0.0
    %1518 = vmatpush.xpose.msra.mxu0 %v1501
    %1519 = vmatmul.f32.gmra.mxu0 %v1499
    %v1520 = vpop.f32.mrf.mxu0
    %v1521 = vadd.f32 %v210, %v1520
    %1522 = vdwg.mxu0
    %v1523 = vsel %vm171, %v1493, -inf
    %1524 = vmax.xlane.f32.xlu0 %v1523
    %v1525 = vpop.xlane.xlu0 %1524
    %v1526 = vsel %vm171, %v1521, -inf
    %1527 = vmax.xlane.f32.xlu0 %v1526
    %v1528 = vpop.xlane.xlu0 %1527
    %v1529 = vsub.f32 %v1493, %v1525
    %v1530 = vsub.f32 %v1521, %v1528
    %v1531 = vmul.f32 %v1529, 1.442695
    %v1532 = vpow.pop %v1531
    %v1533 = vmul.f32 %v1530, 1.442695
    %v1534 = vpow.pop %v1533
    %v1535 = vsel %vm171, %v1532, 0.0
    %1536 = vadd.xlane.f32.xlu0 %v1535
    %v1537 = vpop.xlane.xlu0 %1536
    %v1538 = vsel %vm171, %v1534, 0.0
    %1539 = vadd.xlane.f32.xlu0 %v1538
    %v1540 = vpop.xlane.xlu0 %1539
    %v1541 = vrcp.pop %v1537
    %v1542 = vrcp.pop %v1540
    %v1543 = vmul.f32 %v1532, %v1541
    %v1544 = vmul.f32 %v1534, %v1542
    %1545 = vrot.lane.b32.xlu0 %v1074, 40
    %v1546 = vpop.permute.xlu0 %1545
    %v1549 = vsel %vm171, %v1543, 0
    %1551 = vmatpush.msra.mxu0 0.0
    %1552 = vmatpush.msra.mxu0 0.0
    %1553 = vmatpush.msra.mxu0 0.0
    %1554 = vmatpush.msra.mxu0 0.0
    %1555 = vmatpush.msra.mxu0 0.0
    %1556 = vmatpush.msra.mxu0 0.0
    %1557 = vmatpush.msra.mxu0 0.0
    %1558 = vmatpush.msra.mxu0 0.0
    %1559 = vmatpush.msra.mxu0 0.0
    %1560 = vmatpush.msra.mxu0 0.0
    %1561 = vmatpush.msra.mxu0 0.0
    %1562 = vmatpush.msra.mxu0 0.0
    %1563 = vmatpush.msra.mxu0 0.0
    %1564 = vmatpush.msra.mxu0 0.0
    %1565 = vmatpush.msra.mxu0 0.0
    %1566 = vmatpush.msra.mxu0 %v1546
    %1567 = vmatmul.f32.gmra.mxu0 %v1549
    %v1568 = vpop.f32.mrf.mxu0
    %v1569 = vadd.f32 0.0, %v1568
    %1570 = vdwg.mxu0
    %1571 = vrot.lane.b32.xlu0 %v1077, 40
    %v1572 = vpop.permute.xlu0 %1571
    %v1575 = vsel %vm171, %v1544, 0
    %1577 = vmatpush.msra.mxu0 0.0
    %1578 = vmatpush.msra.mxu0 0.0
    %1579 = vmatpush.msra.mxu0 0.0
    %1580 = vmatpush.msra.mxu0 0.0
    %1581 = vmatpush.msra.mxu0 0.0
    %1582 = vmatpush.msra.mxu0 0.0
    %1583 = vmatpush.msra.mxu0 0.0
    %1584 = vmatpush.msra.mxu0 0.0
    %1585 = vmatpush.msra.mxu0 0.0
    %1586 = vmatpush.msra.mxu0 0.0
    %1587 = vmatpush.msra.mxu0 0.0
    %1588 = vmatpush.msra.mxu0 0.0
    %1589 = vmatpush.msra.mxu0 0.0
    %1590 = vmatpush.msra.mxu0 0.0
    %1591 = vmatpush.msra.mxu0 0.0
    %1592 = vmatpush.msra.mxu0 %v1572
    %1593 = vmatmul.f32.gmra.mxu0 %v1575
    %v1594 = vpop.f32.mrf.mxu0
    %v1595 = vadd.f32 0.0, %v1594
    %1596 = vdwg.mxu0
    %1599 = vrot.lane.b32.xlu0 %v1309, 8
    %v1600 = vpop.permute.xlu0 %1599
    %1601 = vrot.lane.b32.xlu0 %v1335, 8
    %v1602 = vpop.permute.xlu0 %1601
    %1607 = vrot.lane.b32.xlu0 %v1439, 16
    %v1608 = vpop.permute.xlu0 %1607
    %1609 = vrot.lane.b32.xlu0 %v1465, 16
    %v1610 = vpop.permute.xlu0 %1609
    %1615 = vrot.lane.b32.xlu0 %v1569, 24
    %v1616 = vpop.permute.xlu0 %1615
    %1617 = vrot.lane.b32.xlu0 %v1595, 24
    %v1618 = vpop.permute.xlu0 %1617
    %v1621 = vsel %vm171, %v1179, %v1600
    %v1622 = vsel %vm171, %v1205, %v1602
    %v1623 = vsel %vm793, %v1621, %v1608
    %v1624 = vsel %vm793, %v1622, %v1610
    %v1625 = vsel %vm796, %v1623, %v1616
    %v1626 = vsel %vm796, %v1624, %v1618
    %s1627 = scalar_lea.vmem %s7, 32
    %v1628 = vld [vmem:[%s1627] sm:$0xff]
    %v1629 = vld [vmem:[%s1627 + $0x8] sm:$0xff]
    %v1630 = vld [vmem:[%s1627 + $0x10] sm:$0xff]
    %v1631 = vld [vmem:[%s1627 + $0x18] sm:$0xff]
    %s1632 = scalar_lea.vmem %s8, 1
    %v1633 = vld [vmem:[%s1632] sm:$0x1]
    %v1635 = vperm.slane %v1633, 0
    %v1638 = vsel %vm219, %v1625, 0
    %v1641 = vsel %vm219, %v1626, 0
    %1643 = vmatpush.msra.mxu0 0.0
    %1644 = vmatpush.msra.mxu0 0.0
    %1645 = vmatpush.msra.mxu0 0.0
    %1646 = vmatpush.msra.mxu0 0.0
    %1647 = vmatpush.msra.mxu0 0.0
    %1648 = vmatpush.msra.mxu0 0.0
    %1649 = vmatpush.msra.mxu0 0.0
    %1650 = vmatpush.msra.mxu0 0.0
    %1651 = vmatpush.msra.mxu0 0.0
    %1652 = vmatpush.msra.mxu0 0.0
    %1653 = vmatpush.msra.mxu0 0.0
    %1654 = vmatpush.msra.mxu0 0.0
    %1655 = vmatpush.msra.mxu0 %v1631
    %1656 = vmatpush.msra.mxu0 %v1630
    %1657 = vmatpush.msra.mxu0 %v1629
    %1658 = vmatpush.msra.mxu0 %v1628
    %1659 = vmatmul.f32.gmra.mxu0 %v1638
    %v1660 = vpop.f32.mrf.mxu0
    %v1661 = vadd.f32 %v1635, %v1660
    %1662 = vmatmul.f32.gmra.mxu0 %v1641
    %v1663 = vpop.f32.mrf.mxu0
    %v1664 = vadd.f32 %v1635, %v1663
    %1665 = vdwg.mxu0
    %v1666 = vadd.f32 %v1038, %v1661
    %v1667 = vadd.f32 %v1039, %v1664
    %s1668 = scalar_lea.vmem %s9, 1
    %v1669 = vld [vmem:[%s1668] sm:$0x1]
    %s1670 = scalar_lea.vmem %s10, 1
    %v1671 = vld [vmem:[%s1670] sm:$0x1]
    %v1672 = vsel %vm219, %v1666, 0.0
    %1673 = vadd.xlane.f32.xlu0 %v1672
    %v1674 = vpop.xlane.xlu0 %1673
    %v1675 = vsel %vm219, %v1667, 0.0
    %1676 = vadd.xlane.f32.xlu0 %v1675
    %v1677 = vpop.xlane.xlu0 %1676
    %v1678 = vmul.f32 %v1674, %v852
    %v1679 = vmul.f32 %v1677, %v852
    %v1680 = vsub.f32 %v1666, %v1678
    %v1681 = vsub.f32 %v1667, %v1679
    %v1682 = vmul.f32 %v1680, %v1680
    %v1683 = vmul.f32 %v1681, %v1681
    %v1684 = vsel %vm219, %v1682, 0.0
    %1685 = vadd.xlane.f32.xlu0 %v1684
    %v1686 = vpop.xlane.xlu0 %1685
    %v1687 = vsel %vm219, %v1683, 0.0
    %1688 = vadd.xlane.f32.xlu0 %v1687
    %v1689 = vpop.xlane.xlu0 %1688
    %v1690 = vmul.f32 %v1686, %v852
    %v1691 = vmul.f32 %v1689, %v852
    %v1692 = vadd.f32 %v1690, 1e-05
    %v1693 = vadd.f32 %v1691, 1e-05
    %v1694 = vrsqrt.pop %v1692
    %v1695 = vmul.f32 %v1694, %v1692
    %v1696 = vmul.f32 %v1695, %v1694
    %v1697 = vmul.f32 0.5, %v1696
    %v1698 = vsub.f32 1.5, %v1697
    %v1699 = vmul.f32 %v1694, %v1698
    %vm1700 = vweird.f32 %v1692
    %vm1701 = vweird.f32 %v1694
    %vm1702 = vmor %vm1700, %vm1701
    %v1703 = vsel %vm1702, %v1694, %v1699
    %v1704 = vrsqrt.pop %v1693
    %v1705 = vmul.f32 %v1704, %v1693
    %v1706 = vmul.f32 %v1705, %v1704
    %v1707 = vmul.f32 0.5, %v1706
    %v1708 = vsub.f32 1.5, %v1707
    %v1709 = vmul.f32 %v1704, %v1708
    %vm1710 = vweird.f32 %v1693
    %vm1711 = vweird.f32 %v1704
    %vm1712 = vmor %vm1710, %vm1711
    %v1713 = vsel %vm1712, %v1704, %v1709
    %v1714 = vmul.f32 %v1680, %v1703
    %v1715 = vmul.f32 %v1681, %v1713
    %v1717 = vperm.slane %v1669, 0
    %v1719 = vmul.f32 %v1714, %v1717
    %v1720 = vmul.f32 %v1715, %v1717
    %v1722 = vperm.slane %v1671, 0
    %v1724 = vadd.f32 %v1719, %v1722
    %v1725 = vadd.f32 %v1720, %v1722
    %s1726 = scalar_lea.vmem %s11, 32
    %v1727 = vld [vmem:[%s1726] sm:$0xff]
    %v1728 = vld [vmem:[%s1726 + $0x8] sm:$0xff]
    %v1729 = vld [vmem:[%s1726 + $0x10] sm:$0xff]
    %v1730 = vld [vmem:[%s1726 + $0x18] sm:$0xff]
    %s1731 = scalar_lea.vmem %s12, 1
    %v1732 = vld [vmem:[%s1731] sm:$0x1]
    %v1734 = vperm.slane %v1732, 0
    %v1737 = vsel %vm219, %v1724, 0
    %v1740 = vsel %vm219, %v1725, 0
    %1742 = vmatpush.msra.mxu0 0.0
    %1743 = vmatpush.msra.mxu0 0.0
    %1744 = vmatpush.msra.mxu0 0.0
    %1745 = vmatpush.msra.mxu0 0.0
    %1746 = vmatpush.msra.mxu0 0.0
    %1747 = vmatpush.msra.mxu0 0.0
    %1748 = vmatpush.msra.mxu0 0.0
    %1749 = vmatpush.msra.mxu0 0.0
    %1750 = vmatpush.msra.mxu0 0.0
    %1751 = vmatpush.msra.mxu0 0.0
    %1752 = vmatpush.msra.mxu0 0.0
    %1753 = vmatpush.msra.mxu0 0.0
    %1754 = vmatpush.msra.mxu0 %v1730
    %1755 = vmatpush.msra.mxu0 %v1729
    %1756 = vmatpush.msra.mxu0 %v1728
    %1757 = vmatpush.msra.mxu0 %v1727
    %1758 = vmatmul.f32.gmra.mxu0 %v1737
    %v1759 = vpop.f32.mrf.mxu0
    %v1760 = vadd.f32 %v1734, %v1759
    %1761 = vmatmul.f32.gmra.mxu0 %v1740
    %v1762 = vpop.f32.mrf.mxu0
    %v1763 = vadd.f32 %v1734, %v1762
    %1764 = vdwg.mxu0
    %v1765 = vmax.f32 %v1760, 0.0
    %v1766 = vmax.f32 %v1763, 0.0
    %s1767 = scalar_lea.vmem %s13, 64
    %v1768 = vld [vmem:[%s1767] sm:$0xff]
    %v1769 = vld [vmem:[%s1767 + $0x8] sm:$0xff]
    %v1770 = vld [vmem:[%s1767 + $0x10] sm:$0xff]
    %v1771 = vld [vmem:[%s1767 + $0x18] sm:$0xff]
    %v1772 = vld [vmem:[%s1767 + $0x20] sm:$0xff]
    %v1773 = vld [vmem:[%s1767 + $0x28] sm:$0xff]
    %v1774 = vld [vmem:[%s1767 + $0x30] sm:$0xff]
    %v1775 = vld [vmem:[%s1767 + $0x38] sm:$0xff]
    %s1776 = scalar_lea.vmem [#allocation11], 1
    %v1777 = vld [vmem:[%s1776] sm:$0x1]
    %v1779 = vperm.slane %v1777, 0
    %v1782 = vsel %vm952, %v1765, 0
    %v1785 = vsel %vm952, %v1766, 0
    %1787 = vmatpush.msra.mxu0 0.0
    %1788 = vmatpush.msra.mxu0 0.0
    %1789 = vmatpush.msra.mxu0 0.0
    %1790 = vmatpush.msra.mxu0 0.0
    %1791 = vmatpush.msra.mxu0 0.0
    %1792 = vmatpush.msra.mxu0 0.0
    %1793 = vmatpush.msra.mxu0 0.0
    %1794 = vmatpush.msra.mxu0 0.0
    %1795 = vmatpush.msra.mxu0 %v1775
    %1796 = vmatpush.msra.mxu0 %v1774
    %1797 = vmatpush.msra.mxu0 %v1773
    %1798 = vmatpush.msra.mxu0 %v1772
    %1799 = vmatpush.msra.mxu0 %v1771
    %1800 = vmatpush.msra.mxu0 %v1770
    %1801 = vmatpush.msra.mxu0 %v1769
    %1802 = vmatpush.msra.mxu0 %v1768
    %1803 = vmatmul.f32.gmra.mxu0 %v1782
    %v1804 = vpop.f32.mrf.mxu0
    %v1805 = vadd.f32 %v1779, %v1804
    %1806 = vmatmul.f32.gmra.mxu0 %v1785
    %v1807 = vpop.f32.mrf.mxu0
    %v1808 = vadd.f32 %v1779, %v1807
    %1809 = vdwg.mxu0
    %v1810 = vadd.f32 %v1724, %v1805
    %v1811 = vadd.f32 %v1725, %v1808
    %s1812 = scalar_lea.vmem %s15, 1
    %v1813 = vld [vmem:[%s1812] sm:$0x1]
    %s1814 = scalar_lea.vmem %s16, 1
    %v1815 = vld [vmem:[%s1814] sm:$0x1]
    %v1816 = vsel %vm219, %v1810, 0.0
    %1817 = vadd.xlane.f32.xlu0 %v1816
    %v1818 = vpop.xlane.xlu0 %1817
    %v1819 = vsel %vm219, %v1811, 0.0
    %1820 = vadd.xlane.f32.xlu0 %v1819
    %v1821 = vpop.xlane.xlu0 %1820
    %v1822 = vmul.f32 %v1818, %v852
    %v1823 = vmul.f32 %v1821, %v852
    %v1824 = vsub.f32 %v1810, %v1822
    %v1825 = vsub.f32 %v1811, %v1823
    %v1826 = vmul.f32 %v1824, %v1824
    %v1827 = vmul.f32 %v1825, %v1825
    %v1828 = vsel %vm219, %v1826, 0.0
    %1829 = vadd.xlane.f32.xlu0 %v1828
    %v1830 = vpop.xlane.xlu0 %1829
    %v1831 = vsel %vm219, %v1827, 0.0
    %1832 = vadd.xlane.f32.xlu0 %v1831
    %v1833 = vpop.xlane.xlu0 %1832
    %v1834 = vmul.f32 %v1830, %v852
    %v1835 = vmul.f32 %v1833, %v852
    %v1836 = vadd.f32 %v1834, 1e-05
    %v1837 = vadd.f32 %v1835, 1e-05
    %v1838 = vrsqrt.pop %v1836
    %v1839 = vmul.f32 %v1838, %v1836
    %v1840 = vmul.f32 %v1839, %v1838
    %v1841 = vmul.f32 0.5, %v1840
    %v1842 = vsub.f32 1.5, %v1841
    %v1843 = vmul.f32 %v1838, %v1842
    %vm1844 = vweird.f32 %v1836
    %vm1845 = vweird.f32 %v1838
    %vm1846 = vmor %vm1844, %vm1845
    %v1847 = vsel %vm1846, %v1838, %v1843
    %v1848 = vrsqrt.pop %v1837
    %v1849 = vmul.f32 %v1848, %v1837
    %v1850 = vmul.f32 %v1849, %v1848
    %v1851 = vmul.f32 0.5, %v1850
    %v1852 = vsub.f32 1.5, %v1851
    %v1853 = vmul.f32 %v1848, %v1852
    %vm1854 = vweird.f32 %v1837
    %vm1855 = vweird.f32 %v1848
    %vm1856 = vmor %vm1854, %vm1855
    %v1857 = vsel %vm1856, %v1848, %v1853
    %v1858 = vmul.f32 %v1824, %v1847
    %v1859 = vmul.f32 %v1825, %v1857
    %v1861 = vperm.slane %v1813, 0
    %v1863 = vmul.f32 %v1858, %v1861
    %v1864 = vmul.f32 %v1859, %v1861
    %v1866 = vperm.slane %v1815, 0
    %v1868 = vadd.f32 %v1863, %v1866
    %v1869 = vadd.f32 %v1864, %v1866
    %v1870 = vsel %vm219, %v1868, 0.0
    %v1871 = vrot.slane %v1870, 4
    %v1872 = vadd.f32 %v1870, %v1871
    %v1873 = vrot.slane %v1872, 2
    %v1874 = vadd.f32 %v1872, %v1873
    %v1875 = vrot.slane %v1874, 1
    %v1876 = vadd.f32 %v1874, %v1875
    %v1877 = vsel %vm219, %v1869, 0.0
    %v1878 = vrot.slane %v1877, 4
    %v1879 = vadd.f32 %v1877, %v1878
    %v1880 = vrot.slane %v1879, 2
    %v1881 = vadd.f32 %v1879, %v1880
    %v1882 = vrot.slane %v1881, 1
    %v1883 = vadd.f32 %v1881, %v1882
    %v1884 = vrcp.pop 8.0
    %v1885 = vmul.f32 8.0, %v1884
    %v1886 = vsub.f32 1.0, %v1885
    %v1887 = vmul.f32 %v1884, %v1886
    %v1888 = vadd.f32 %v1884, %v1887
    %vm1889 = vweird.f32 %v1884
    %v1890 = vsel %vm1889, %v1884, %v1888
    %v1891 = vmul.f32 %v1876, %v1890
    %v1892 = vmul.f32 %v1883, %v1890
    %v1893 = vld [vmem:[#allocation13] sm:$0xff]
    %v1894 = vld [vmem:[#allocation13 + $0x8] sm:$0xff]
    %v1895 = vld [vmem:[#allocation13 + $0x10] sm:$0xff]
    %v1896 = vld [vmem:[#allocation13 + $0x18] sm:$0xff]
    %v1897 = vld [vmem:[%s18] sm:$0x1]
    %v1899 = vperm.slane %v1897, 0
    %vm1903 = vcmask 1041409
    %v1904 = vsel %vm1903, %v1892, %v1891
    %v1905 = vsel %vm219, %v1904, 0
    %1907 = vmatpush.msra.mxu0 0.0
    %1908 = vmatpush.msra.mxu0 0.0
    %1909 = vmatpush.msra.mxu0 0.0
    %1910 = vmatpush.msra.mxu0 0.0
    %1911 = vmatpush.msra.mxu0 0.0
    %1912 = vmatpush.msra.mxu0 0.0
    %1913 = vmatpush.msra.mxu0 0.0
    %1914 = vmatpush.msra.mxu0 0.0
    %1915 = vmatpush.msra.mxu0 0.0
    %1916 = vmatpush.msra.mxu0 0.0
    %1917 = vmatpush.msra.mxu0 0.0
    %1918 = vmatpush.msra.mxu0 0.0
    %1919 = vmatpush.msra.mxu0 %v1896
    %1920 = vmatpush.msra.mxu0 %v1895
    %1921 = vmatpush.msra.mxu0 %v1894
    %1922 = vmatpush.msra.mxu0 %v1893
    %1923 = vmatmul.f32.gmra.mxu0 %v1905
    %v1924 = vpop.f32.mrf.mxu0
    %v1925 = vadd.f32 %v1899, %v1924
    %1926 = vdwg.mxu0
    %1927 = vst [vmem:[#allocation14] sm:$0x3] %v1925
    // Predicated region
    $region106: #{tpu_custom_call.1} parent=1 // pred_check
      _
    $region107: #{tpu_custom_call.1} parent=1 // pred_check_branch
      %1929 = sbr.rel (0) target = $region109
    $region108: #{tpu_custom_call.1} parent=1 // pred_region
      %1931 = vsyncadd [#allocation4], 0
      %s1933 = sshll.u32 [#allocation14], 4
      %s1934 = int_to_ptr.vmem [resolvable:$true] %s1933
      %s1935 = sshll.u32 %s19, 4
      %s1936 = int_to_ptr.hbm [resolvable:$true] %s1935
      %1938 = dma.vmem_to_hbm [thread:$0]  %s1934, 32, %s1936, [#allocation4]
    $region109: #{tpu_custom_call.1} parent=1 // pred_fallthru
      _
    // Predicated region
    $region110: #{tpu_custom_call.1} parent=1 // pred_check
      _
    $region111: #{tpu_custom_call.1} parent=1 // pred_check_branch
      %1940 = sbr.rel (0) target = $region113
    $region112: #{tpu_custom_call.1} parent=1 // pred_region
      %1942 = dma.done [#allocation4], 32
    $region113: #{tpu_custom_call.1} parent=1 // pred_fallthru
      _
    %1943 = vsyncpa [#allocation3], 1
    %1944 = vsyncpa [#allocation6], 1
    %1945 = vsyncpa [#allocation9], 1
    %1946 = vsyncpa [#allocation12], 1
    %1947 = vsyncpa [#allocation4], 1

</llo_original>
